<compile_context>
chip_gen: v7x
topology: tpu7x:2x2x1
jax: 0.10.0
libtpu: 0.0.40
codegen_flags: <defaults>
</compile_context>

<pallas_src>
import functools

import jax
import jax.numpy as jnp
from jax.experimental import pallas as pl
from jax.experimental.pallas import tpu as pltpu


# --------------------------------------------------------------------------
# Kernel 1: temporal means + conv chain + BN partial statistics (per batch n)
# --------------------------------------------------------------------------
def _conv_stats_kernel(x_ref, w_ref, m_ref, ys_ref, st_ref, *, width):
    T = x_ref.shape[1]
    HW = x_ref.shape[4]

    x1 = x_ref[0, :, 0]                        # (T, c, HW)  passthrough group
    x2 = x_ref[0, :, 1]                        # (T, c, HW)
    x3 = x_ref[0, :, 2]                        # (T, c, HW)

    inv_t = jnp.float32(1.0 / T)
    x2m = jnp.sum(x2, axis=0) * inv_t          # (c, HW) == X2.mean(dim=1)
    x3m = jnp.sum(x3, axis=0) * inv_t          # (c, HW) == X3.mean(dim=1)
    x1_sum = jnp.sum(x1, axis=0)               # (c, HW) partial BN sums for X1
    x1_sq = jnp.sum(x1 * x1, axis=0)           # (c, HW)

    def conv3x3(inp, ci):
        # inp: (c, HW). 9 shifted taps (XLU vrot + precomputed zero-pad masks)
        # each multiplied into a small (c, c) x (c, HW) MXU dot and accumulated
        # -> no sublane concat feeding the matmul.
        acc = None
        k = 0
        for dy in (-1, 0, 1):
            for dx in (-1, 0, 1):
                d = dy * width + dx
                if d == 0:
                    tap = inp                          # center tap, mask == 1
                else:
                    tap = pltpu.roll(inp, (-d) % HW, axis=1) * m_ref[k]
                p = jnp.dot(w_ref[ci, k], tap,
                            preferred_element_type=jnp.float32)
                acc = p if acc is None else acc + p
                k += 1
        return acc

    y1 = conv3x3(x2m, 0)                       # conv1(X2.mean)
    y2 = conv3x3(x2m + y1, 1)                  # conv2(X2.mean + conv1_out)
    y3 = conv3x3(x3m + y2, 2)                  # conv3(X3.mean + conv2_out)

    y_all = jnp.concatenate([y1, y2, y3], axis=0)          # (3c, HW)
    ys_ref[0] = y_all                                      # single store

    # Per-channel partial sums for BN, emitted in output-channel order:
    # rows [0:C) = sum, rows [C:2C) = sum of squares.  Conv groups are
    # T-replicated in the assembled tensor, hence the factor T.
    tf = jnp.float32(T)
    stacked = jnp.concatenate(
        [x1_sum, tf * y_all, x1_sq, tf * (y_all * y_all)], axis=0)  # (2C, HW)
    st_ref[0] = jnp.sum(stacked, axis=1, keepdims=True)             # (2C, 1)


# --------------------------------------------------------------------------
# Kernel 2: BN stats -> scale/shift (in-kernel) + normalize + ReLU + assembly
# --------------------------------------------------------------------------
def _bn_relu_kernel(x1_ref, ys_ref, st_ref, gb_ref, o_ref, *, count, eps):
    tb = x1_ref.shape[1]                       # T tile handled this step
    c = x1_ref.shape[3]
    C2 = st_ref.shape[1]
    C = C2 // 2

    # Tiny in-kernel BN math (replaces the XLA ops between the two calls).
    totals = jnp.sum(st_ref[...], axis=0)      # (2C, 1): reduce over batch N
    inv_n = jnp.float32(1.0 / count)
    mean = totals[0:C] * inv_n                                 # (C, 1)
    var = jnp.maximum(totals[C:] * inv_n - mean * mean, 0.0)   # biased (train)
    gb = gb_ref[...]                                           # (2C, 1)
    scale = gb[0:C] * jax.lax.rsqrt(var + eps)                 # (C, 1)
    shift = gb[C:] - mean * scale                              # (C, 1)

    # Conv-output groups are T-invariant: normalize them once.
    zy = jnp.maximum(ys_ref[0] * scale[c:] + shift[c:], 0.0)   # (3c, HW)
    s1 = scale[0:c]
    b1 = shift[0:c]

    # One full (C, HW) = sublane/lane-dense plane store per t (unmasked vst).
    for t in range(tb):
        z1 = jnp.maximum(x1_ref[0, t, 0] * s1 + b1, 0.0)       # (c, HW)
        o_ref[0, t] = jnp.concatenate([z1, zy], axis=0)        # (C, HW)


# --------------------------------------------------------------------------
# Wrapper: free HBM reshapes only, tiny constant param packing
# --------------------------------------------------------------------------
def lgcsm_forward(x, params, eps=1e-5, t_block=None):
    """x: (N, T, C, H, W) float32  ->  (N, T, C, H, W) float32."""
    N, T, C, H, W = x.shape
    c = C // 4
    HW = H * W
    x_r = x.reshape(N, T, 4, c, HW)            # free reshape, no data movement

    # conv weights (HWIO (3,3,ci,co)) -> per-tap (co, ci) matrices: (3, 9, c, c)
    def to_taps(w):
        return jnp.transpose(w.reshape(9, c, c), (0, 2, 1))
    w_taps = jnp.stack([to_taps(params["w1"]), to_taps(params["w2"]),
                        to_taps(params["w3"])], axis=0)

    # zero-padding validity masks per 3x3 tap, flattened over H*W
    yy, xx = jnp.meshgrid(jnp.arange(H), jnp.arange(W), indexing="ij")
    masks = []
    for dy in (-1, 0, 1):
        for dx in (-1, 0, 1):
            ok = ((yy + dy >= 0) & (yy + dy < H) &
                  (xx + dx >= 0) & (xx + dx < W))
            masks.append(ok.reshape(1, HW))
    mask_arr = jnp.stack(masks, axis=0).astype(jnp.float32)  # (9, 1, HW)

    # ----- Kernel 1: conv + partial BN stats, grid over N ("parallel") -----
    ys, stats = pl.pallas_call(
        functools.partial(_conv_stats_kernel, width=W),
        out_shape=(jax.ShapeDtypeStruct((N, 3 * c, HW), jnp.float32),
                   jax.ShapeDtypeStruct((N, 2 * C, 1), jnp.float32)),
        grid_spec=pltpu.PrefetchScalarGridSpec(
            num_scalar_prefetch=0,
            grid=(N,),
            in_specs=[
                # one DMA per step covering groups X1..X3 (X4 never read)
                pl.BlockSpec((1, T, 3, c, HW), lambda n: (n, 0, 0, 0, 0)),
                pl.BlockSpec((3, 9, c, c), lambda n: (0, 0, 0, 0)),
                pl.BlockSpec((9, 1, HW), lambda n: (0, 0, 0)),
            ],
            out_specs=(pl.BlockSpec((1, 3 * c, HW), lambda n: (n, 0, 0)),
                       pl.BlockSpec((1, 2 * C, 1), lambda n: (n, 0, 0)))),
        compiler_params=pltpu.CompilerParams(
            dimension_semantics=("parallel",)),   # megacore split (v7x only)
    )(x_r, w_taps, mask_arr)

    # gamma/beta packed in output-channel order, channel on sublanes
    gb = jnp.concatenate([params["gamma"], params["beta"]],
                         axis=0).reshape(2 * C, 1)

    # ----- Kernel 2: BN apply + ReLU + assembly, grid over (N, T tiles) -----
    # T tiling exists so both v7x TensorCores have work when N == 1 / odd;
    # with an even N we keep a single T block to minimize per-step overhead
    # on the 1-TC chips (v5e/v6e).
    if t_block is None:
        t_block = T if N % 2 == 0 else max(1, T // 2)
    if T % t_block != 0:
        t_block = T
    nt = T // t_block

    out = pl.pallas_call(
        functools.partial(_bn_relu_kernel,
                          count=float(N * T * H * W), eps=eps),
        out_shape=jax.ShapeDtypeStruct((N, T, C, HW), jnp.float32),
        grid_spec=pltpu.PrefetchScalarGridSpec(
            num_scalar_prefetch=0,
            grid=(N, nt),
            in_specs=[
                pl.BlockSpec((1, t_block, 1, c, HW),
                             lambda n, t: (n, t, 0, 0, 0)),     # X1 group only
                pl.BlockSpec((1, 3 * c, HW), lambda n, t: (n, 0, 0)),
                pl.BlockSpec((N, 2 * C, 1), lambda n, t: (0, 0, 0)),
                pl.BlockSpec((2 * C, 1), lambda n, t: (0, 0)),
            ],
            out_specs=pl.BlockSpec((1, t_block, C, HW),
                                   lambda n, t: (n, t, 0, 0))),
        compiler_params=pltpu.CompilerParams(
            dimension_semantics=("parallel", "parallel")),
    )(x_r, ys, stats, gb)

    return out.reshape(N, T, C, H, W)          # free reshape back


# --------------------------------------------------------------------------
# Pure-JAX reference (mirrors the PyTorch forward exactly)
# --------------------------------------------------------------------------
def reference_forward(x, w1, w2, w3, gamma, beta, eps=1e-5):
    N, T, C, H, W = x.shape
    c = C // 4
    X1 = x[:, :, 0:c]
    X2 = x[:, :, c:2 * c]
    X3 = x[:, :, 2 * c:3 * c]

    def conv(v, w):
        return jax.lax.conv_general_dilated(
            v, w, window_strides=(1, 1), padding=((1, 1), (1, 1)),
            dimension_numbers=("NCHW", "HWIO", "NCHW"))

    x2m = X2.mean(axis=1)
    x3m = X3.mean(axis=1)
    y1 = conv(x2m, w1)
    y2 = conv(x2m + y1, w2)
    y3 = conv(x3m + y2, w3)

    def expand(v):
        return jnp.broadcast_to(v[:, None], (N, T, c, H, W))

    out = jnp.concatenate([X1, expand(y1), expand(y2), expand(y3)], axis=2)
    perm = out.transpose(0, 2, 1, 3, 4)                    # (N, C, T, H, W)
    mean = perm.mean(axis=(0, 2, 3, 4), keepdims=True)
    var = perm.var(axis=(0, 2, 3, 4), keepdims=True)       # biased
    normed = (perm - mean) / jnp.sqrt(var + eps)
    normed = normed * gamma[None, :, None, None, None] \
        + beta[None, :, None, None, None]
    out = normed.transpose(0, 2, 1, 3, 4)
    return jnp.maximum(out, 0.0)


if __name__ == "__main__":
    key = jax.random.PRNGKey(0)
    N, T, C, H, W = 2, 4, 16, 16, 16        # in_channels = out_channels = 16
    c = C // 4
    k = jax.random.split(key, 6)
    x = jax.random.normal(k[0], (N, T, C, H, W), jnp.float32)
    fan = float(c * 9)
    w1 = jax.random.normal(k[1], (3, 3, c, c), jnp.float32) / jnp.sqrt(fan)
    w2 = jax.random.normal(k[2], (3, 3, c, c), jnp.float32) / jnp.sqrt(fan)
    w3 = jax.random.normal(k[3], (3, 3, c, c), jnp.float32) / jnp.sqrt(fan)
    gamma = 1.0 + 0.1 * jax.random.normal(k[4], (C,), jnp.float32)
    beta = 0.1 * jax.random.normal(k[5], (C,), jnp.float32)
    params = dict(w1=w1, w2=w2, w3=w3, gamma=gamma, beta=beta)

    fwd = jax.jit(lgcsm_forward)
    out = jax.block_until_ready(fwd(x, params))
    ref = jax.block_until_ready(
        reference_forward(x, w1, w2, w3, gamma, beta))

    assert out.shape == (N, T, C, H, W), out.shape
    max_err = float(jnp.max(jnp.abs(out - ref)))
    assert jnp.allclose(out, ref, atol=1e-4, rtol=1e-4), max_err
    print("KERNEL_OK")
</pallas_src>

<mosaic_0001>
module attributes {stable_mosaic.version = 11 : i64} {
  func.func @_bn_relu_kernel(%arg0: i32, %arg1: i32, %arg2: memref<1x4x1x4x256xf32, #tpu.memory_space<vmem>>, %arg3: memref<1x12x256xf32, #tpu.memory_space<vmem>>, %arg4: memref<2x32x1xf32, #tpu.memory_space<vmem>>, %arg5: memref<32x1xf32, #tpu.memory_space<vmem>>, %arg6: memref<1x4x16x256xf32, #tpu.memory_space<vmem>>) attributes {dimension_semantics = [#tpu.dimension_semantics<parallel>, #tpu.dimension_semantics<parallel>], iteration_bounds = array<i64: 2, 1>, scalar_prefetch = 0 : i64, scratch_operands = 0 : i64, tpu.core_type = #tpu.core_type<tc>, window_params = [{transform_indices = @transform_0, window_bounds = array<i64: 1, 4, 1, 4, 256>}, {transform_indices = @transform_1, window_bounds = array<i64: 1, 12, 256>}, {pipeline_mode = #tpu.pipeline_mode<synchronous>, transform_indices = @transform_2, window_bounds = array<i64: 2, 32, 1>}, {pipeline_mode = #tpu.pipeline_mode<synchronous>, transform_indices = @transform_3, window_bounds = array<i64: 32, 1>}, {transform_indices = @transform_4, window_bounds = array<i64: 1, 4, 16, 256>}]} {
    %c0 = arith.constant 0 : index
    %c0_0 = arith.constant 0 : index
    %c0_1 = arith.constant 0 : index
    %0 = vector.load %arg4[%c0, %c0_0, %c0_1] : memref<2x32x1xf32, #tpu.memory_space<vmem>>, vector<2x32x1xf32>
    %cst = arith.constant dense<0.000000e+00> : vector<32x1xf32>
    %1 = vector.multi_reduction <add>, %0, %cst [0] : vector<2x32x1xf32> to vector<32x1xf32>
    %2 = vector.extract_strided_slice %1 {offsets = [0, 0], sizes = [16, 1], strides = [1, 1]} : vector<32x1xf32> to vector<16x1xf32>
    %cst_2 = arith.constant 4.8828125E-4 : f32
    %3 = vector.broadcast %cst_2 : f32 to vector<16x1xf32>
    %4 = arith.mulf %2, %3 : vector<16x1xf32>
    %5 = vector.extract_strided_slice %1 {offsets = [16, 0], sizes = [16, 1], strides = [1, 1]} : vector<32x1xf32> to vector<16x1xf32>
    %cst_3 = arith.constant 4.8828125E-4 : f32
    %6 = vector.broadcast %cst_3 : f32 to vector<16x1xf32>
    %7 = arith.mulf %5, %6 : vector<16x1xf32>
    %8 = arith.mulf %4, %4 : vector<16x1xf32>
    %9 = arith.subf %7, %8 : vector<16x1xf32>
    %cst_4 = arith.constant 0.000000e+00 : f32
    %10 = vector.broadcast %cst_4 : f32 to vector<16x1xf32>
    %11 = arith.maximumf %9, %10 : vector<16x1xf32>
    %c0_5 = arith.constant 0 : index
    %c0_6 = arith.constant 0 : index
    %12 = vector.load %arg5[%c0_5, %c0_6] : memref<32x1xf32, #tpu.memory_space<vmem>>, vector<32x1xf32>
    %13 = vector.extract_strided_slice %12 {offsets = [0, 0], sizes = [16, 1], strides = [1, 1]} : vector<32x1xf32> to vector<16x1xf32>
    %cst_7 = arith.constant 9.99999974E-6 : f32
    %14 = vector.broadcast %cst_7 : f32 to vector<16x1xf32>
    %15 = arith.addf %11, %14 : vector<16x1xf32>
    %16 = math.rsqrt %15 : vector<16x1xf32>
    %17 = arith.mulf %13, %16 : vector<16x1xf32>
    %18 = vector.extract_strided_slice %12 {offsets = [16, 0], sizes = [16, 1], strides = [1, 1]} : vector<32x1xf32> to vector<16x1xf32>
    %19 = arith.mulf %4, %17 : vector<16x1xf32>
    %20 = arith.subf %18, %19 : vector<16x1xf32>
    %c0_8 = arith.constant 0 : index
    %c0_9 = arith.constant 0 : index
    %c0_10 = arith.constant 0 : index
    %21 = vector.load %arg3[%c0_8, %c0_9, %c0_10] : memref<1x12x256xf32, #tpu.memory_space<vmem>>, vector<1x12x256xf32>
    %22 = vector.shape_cast %21 : vector<1x12x256xf32> to vector<12x256xf32>
    %23 = vector.extract_strided_slice %17 {offsets = [4, 0], sizes = [12, 1], strides = [1, 1]} : vector<16x1xf32> to vector<12x1xf32>
    %24 = vector.broadcast %23 : vector<12x1xf32> to vector<12x256xf32>
    %25 = arith.mulf %22, %24 : vector<12x256xf32>
    %26 = vector.extract_strided_slice %20 {offsets = [4, 0], sizes = [12, 1], strides = [1, 1]} : vector<16x1xf32> to vector<12x1xf32>
    %27 = vector.broadcast %26 : vector<12x1xf32> to vector<12x256xf32>
    %28 = arith.addf %25, %27 : vector<12x256xf32>
    %cst_11 = arith.constant 0.000000e+00 : f32
    %29 = vector.broadcast %cst_11 : f32 to vector<12x256xf32>
    %30 = arith.maximumf %28, %29 : vector<12x256xf32>
    %31 = vector.extract_strided_slice %17 {offsets = [0, 0], sizes = [4, 1], strides = [1, 1]} : vector<16x1xf32> to vector<4x1xf32>
    %32 = vector.extract_strided_slice %20 {offsets = [0, 0], sizes = [4, 1], strides = [1, 1]} : vector<16x1xf32> to vector<4x1xf32>
    %c0_12 = arith.constant 0 : index
    %c0_13 = arith.constant 0 : index
    %c0_14 = arith.constant 0 : index
    %c0_15 = arith.constant 0 : index
    %c0_16 = arith.constant 0 : index
    %33 = vector.load %arg2[%c0_12, %c0_13, %c0_14, %c0_15, %c0_16] : memref<1x4x1x4x256xf32, #tpu.memory_space<vmem>>, vector<1x1x1x4x256xf32>
    %34 = vector.shape_cast %33 : vector<1x1x1x4x256xf32> to vector<4x256xf32>
    %35 = vector.broadcast %31 : vector<4x1xf32> to vector<4x256xf32>
    %36 = arith.mulf %34, %35 : vector<4x256xf32>
    %37 = vector.broadcast %32 : vector<4x1xf32> to vector<4x256xf32>
    %38 = arith.addf %36, %37 : vector<4x256xf32>
    %cst_17 = arith.constant 0.000000e+00 : f32
    %39 = vector.broadcast %cst_17 : f32 to vector<4x256xf32>
    %40 = arith.maximumf %38, %39 : vector<4x256xf32>
    %41 = tpu.concatenate %40, %30 in 0 : vector<4x256xf32>, vector<12x256xf32> -> vector<16x256xf32>
    %c0_18 = arith.constant 0 : index
    %c0_19 = arith.constant 0 : index
    %c0_20 = arith.constant 0 : index
    %c0_21 = arith.constant 0 : index
    %42 = vector.load %arg6[%c0_18, %c0_19, %c0_20, %c0_21] : memref<1x4x16x256xf32, #tpu.memory_space<vmem>>, vector<1x1x16x256xf32>
    %43 = vector.shape_cast %42 : vector<1x1x16x256xf32> to vector<16x256xf32>
    %44 = vector.shape_cast %41 : vector<16x256xf32> to vector<1x1x16x256xf32>
    tpu.vector_store %arg6[%c0_18, %c0_19, %c0_20, %c0_21], %44 {strides = array<i32>} : memref<1x4x16x256xf32, #tpu.memory_space<vmem>>, vector<1x1x16x256xf32>,
    %c0_22 = arith.constant 0 : index
    %c1 = arith.constant 1 : index
    %c0_23 = arith.constant 0 : index
    %c0_24 = arith.constant 0 : index
    %c0_25 = arith.constant 0 : index
    %45 = vector.load %arg2[%c0_22, %c1, %c0_23, %c0_24, %c0_25] : memref<1x4x1x4x256xf32, #tpu.memory_space<vmem>>, vector<1x1x1x4x256xf32>
    %46 = vector.shape_cast %45 : vector<1x1x1x4x256xf32> to vector<4x256xf32>
    %47 = vector.broadcast %31 : vector<4x1xf32> to vector<4x256xf32>
    %48 = arith.mulf %46, %47 : vector<4x256xf32>
    %49 = vector.broadcast %32 : vector<4x1xf32> to vector<4x256xf32>
    %50 = arith.addf %48, %49 : vector<4x256xf32>
    %cst_26 = arith.constant 0.000000e+00 : f32
    %51 = vector.broadcast %cst_26 : f32 to vector<4x256xf32>
    %52 = arith.maximumf %50, %51 : vector<4x256xf32>
    %53 = tpu.concatenate %52, %30 in 0 : vector<4x256xf32>, vector<12x256xf32> -> vector<16x256xf32>
    %c0_27 = arith.constant 0 : index
    %c1_28 = arith.constant 1 : index
    %c0_29 = arith.constant 0 : index
    %c0_30 = arith.constant 0 : index
    %54 = vector.load %arg6[%c0_27, %c1_28, %c0_29, %c0_30] : memref<1x4x16x256xf32, #tpu.memory_space<vmem>>, vector<1x1x16x256xf32>
    %55 = vector.shape_cast %54 : vector<1x1x16x256xf32> to vector<16x256xf32>
    %56 = vector.shape_cast %53 : vector<16x256xf32> to vector<1x1x16x256xf32>
    tpu.vector_store %arg6[%c0_27, %c1_28, %c0_29, %c0_30], %56 {strides = array<i32>} : memref<1x4x16x256xf32, #tpu.memory_space<vmem>>, vector<1x1x16x256xf32>,
    %c0_31 = arith.constant 0 : index
    %c2 = arith.constant 2 : index
    %c0_32 = arith.constant 0 : index
    %c0_33 = arith.constant 0 : index
    %c0_34 = arith.constant 0 : index
    %57 = vector.load %arg2[%c0_31, %c2, %c0_32, %c0_33, %c0_34] : memref<1x4x1x4x256xf32, #tpu.memory_space<vmem>>, vector<1x1x1x4x256xf32>
    %58 = vector.shape_cast %57 : vector<1x1x1x4x256xf32> to vector<4x256xf32>
    %59 = vector.broadcast %31 : vector<4x1xf32> to vector<4x256xf32>
    %60 = arith.mulf %58, %59 : vector<4x256xf32>
    %61 = vector.broadcast %32 : vector<4x1xf32> to vector<4x256xf32>
    %62 = arith.addf %60, %61 : vector<4x256xf32>
    %cst_35 = arith.constant 0.000000e+00 : f32
    %63 = vector.broadcast %cst_35 : f32 to vector<4x256xf32>
    %64 = arith.maximumf %62, %63 : vector<4x256xf32>
    %65 = tpu.concatenate %64, %30 in 0 : vector<4x256xf32>, vector<12x256xf32> -> vector<16x256xf32>
    %c0_36 = arith.constant 0 : index
    %c2_37 = arith.constant 2 : index
    %c0_38 = arith.constant 0 : index
    %c0_39 = arith.constant 0 : index
    %66 = vector.load %arg6[%c0_36, %c2_37, %c0_38, %c0_39] : memref<1x4x16x256xf32, #tpu.memory_space<vmem>>, vector<1x1x16x256xf32>
    %67 = vector.shape_cast %66 : vector<1x1x16x256xf32> to vector<16x256xf32>
    %68 = vector.shape_cast %65 : vector<16x256xf32> to vector<1x1x16x256xf32>
    tpu.vector_store %arg6[%c0_36, %c2_37, %c0_38, %c0_39], %68 {strides = array<i32>} : memref<1x4x16x256xf32, #tpu.memory_space<vmem>>, vector<1x1x16x256xf32>,
    %c0_40 = arith.constant 0 : index
    %c3 = arith.constant 3 : index
    %c0_41 = arith.constant 0 : index
    %c0_42 = arith.constant 0 : index
    %c0_43 = arith.constant 0 : index
    %69 = vector.load %arg2[%c0_40, %c3, %c0_41, %c0_42, %c0_43] : memref<1x4x1x4x256xf32, #tpu.memory_space<vmem>>, vector<1x1x1x4x256xf32>
    %70 = vector.shape_cast %69 : vector<1x1x1x4x256xf32> to vector<4x256xf32>
    %71 = vector.broadcast %31 : vector<4x1xf32> to vector<4x256xf32>
    %72 = arith.mulf %70, %71 : vector<4x256xf32>
    %73 = vector.broadcast %32 : vector<4x1xf32> to vector<4x256xf32>
    %74 = arith.addf %72, %73 : vector<4x256xf32>
    %cst_44 = arith.constant 0.000000e+00 : f32
    %75 = vector.broadcast %cst_44 : f32 to vector<4x256xf32>
    %76 = arith.maximumf %74, %75 : vector<4x256xf32>
    %77 = tpu.concatenate %76, %30 in 0 : vector<4x256xf32>, vector<12x256xf32> -> vector<16x256xf32>
    %c0_45 = arith.constant 0 : index
    %c3_46 = arith.constant 3 : index
    %c0_47 = arith.constant 0 : index
    %c0_48 = arith.constant 0 : index
    %78 = vector.load %arg6[%c0_45, %c3_46, %c0_47, %c0_48] : memref<1x4x16x256xf32, #tpu.memory_space<vmem>>, vector<1x1x16x256xf32>
    %79 = vector.shape_cast %78 : vector<1x1x16x256xf32> to vector<16x256xf32>
    %80 = vector.shape_cast %77 : vector<16x256xf32> to vector<1x1x16x256xf32>
    tpu.vector_store %arg6[%c0_45, %c3_46, %c0_47, %c0_48], %80 {strides = array<i32>} : memref<1x4x16x256xf32, #tpu.memory_space<vmem>>, vector<1x1x16x256xf32>,
    return
  }
  func.func @transform_0(%arg0: i32, %arg1: i32) -> (i32, i32, i32, i32, i32) {
    %c0_i32 = arith.constant 0 : i32
    %c0_i32_0 = arith.constant 0 : i32
    %c0_i32_1 = arith.constant 0 : i32
    %c0_i32_2 = arith.constant 0 : i32
    return %arg0, %arg1, %c0_i32, %c0_i32_0, %c0_i32_1 : i32, i32, i32, i32, i32
  }
  func.func @transform_1(%arg0: i32, %arg1: i32) -> (i32, i32, i32) {
    %c0_i32 = arith.constant 0 : i32
    %c0_i32_0 = arith.constant 0 : i32
    %c0_i32_1 = arith.constant 0 : i32
    return %arg0, %c0_i32, %c0_i32_0 : i32, i32, i32
  }
  func.func @transform_2(%arg0: i32, %arg1: i32) -> (i32, i32, i32) {
    %c0_i32 = arith.constant 0 : i32
    %c0_i32_0 = arith.constant 0 : i32
    %c0_i32_1 = arith.constant 0 : i32
    %c0_i32_2 = arith.constant 0 : i32
    return %c0_i32, %c0_i32_0, %c0_i32_1 : i32, i32, i32
  }
  func.func @transform_3(%arg0: i32, %arg1: i32) -> (i32, i32) {
    %c0_i32 = arith.constant 0 : i32
    %c0_i32_0 = arith.constant 0 : i32
    %c0_i32_1 = arith.constant 0 : i32
    return %c0_i32, %c0_i32_0 : i32, i32
  }
  func.func @transform_4(%arg0: i32, %arg1: i32) -> (i32, i32, i32, i32) {
    %c0_i32 = arith.constant 0 : i32
    %c0_i32_0 = arith.constant 0 : i32
    %c0_i32_1 = arith.constant 0 : i32
    return %arg0, %arg1, %c0_i32, %c0_i32_0 : i32, i32, i32, i32
  }
}

module attributes {stable_mosaic.version = 11 : i64} {
  func.func @_conv_stats_kernel(%arg0: i32, %arg1: memref<1x4x3x4x256xf32, #tpu.memory_space<vmem>>, %arg2: memref<3x9x4x4xf32, #tpu.memory_space<vmem>>, %arg3: memref<9x1x256xf32, #tpu.memory_space<vmem>>, %arg4: memref<1x12x256xf32, #tpu.memory_space<vmem>>, %arg5: memref<1x32x1xf32, #tpu.memory_space<vmem>>) attributes {dimension_semantics = [#tpu.dimension_semantics<parallel>], iteration_bounds = array<i64: 2>, scalar_prefetch = 0 : i64, scratch_operands = 0 : i64, tpu.core_type = #tpu.core_type<tc>, window_params = [{transform_indices = @transform_0, window_bounds = array<i64: 1, 4, 3, 4, 256>}, {pipeline_mode = #tpu.pipeline_mode<synchronous>, transform_indices = @transform_1, window_bounds = array<i64: 3, 9, 4, 4>}, {pipeline_mode = #tpu.pipeline_mode<synchronous>, transform_indices = @transform_2, window_bounds = array<i64: 9, 1, 256>}, {transform_indices = @transform_3, window_bounds = array<i64: 1, 12, 256>}, {transform_indices = @transform_4, window_bounds = array<i64: 1, 32, 1>}]} {
    %c0 = arith.constant 0 : index
    %c0_0 = arith.constant 0 : index
    %c0_1 = arith.constant 0 : index
    %c0_2 = arith.constant 0 : index
    %c0_3 = arith.constant 0 : index
    %0 = vector.load %arg1[%c0, %c0_0, %c0_1, %c0_2, %c0_3] : memref<1x4x3x4x256xf32, #tpu.memory_space<vmem>>, vector<1x4x1x4x256xf32>
    %1 = vector.shape_cast %0 : vector<1x4x1x4x256xf32> to vector<4x4x256xf32>
    %c0_4 = arith.constant 0 : index
    %c0_5 = arith.constant 0 : index
    %c1 = arith.constant 1 : index
    %c0_6 = arith.constant 0 : index
    %c0_7 = arith.constant 0 : index
    %2 = vector.load %arg1[%c0_4, %c0_5, %c1, %c0_6, %c0_7] : memref<1x4x3x4x256xf32, #tpu.memory_space<vmem>>, vector<1x4x1x4x256xf32>
    %3 = vector.shape_cast %2 : vector<1x4x1x4x256xf32> to vector<4x4x256xf32>
    %c0_8 = arith.constant 0 : index
    %c0_9 = arith.constant 0 : index
    %c2 = arith.constant 2 : index
    %c0_10 = arith.constant 0 : index
    %c0_11 = arith.constant 0 : index
    %4 = vector.load %arg1[%c0_8, %c0_9, %c2, %c0_10, %c0_11] : memref<1x4x3x4x256xf32, #tpu.memory_space<vmem>>, vector<1x4x1x4x256xf32>
    %5 = vector.shape_cast %4 : vector<1x4x1x4x256xf32> to vector<4x4x256xf32>
    %cst = arith.constant dense<0.000000e+00> : vector<4x256xf32>
    %6 = vector.multi_reduction <add>, %3, %cst [0] : vector<4x4x256xf32> to vector<4x256xf32>
    %cst_12 = arith.constant 2.500000e-01 : f32
    %7 = vector.broadcast %cst_12 : f32 to vector<4x256xf32>
    %8 = arith.mulf %6, %7 : vector<4x256xf32>
    %cst_13 = arith.constant dense<0.000000e+00> : vector<4x256xf32>
    %9 = vector.multi_reduction <add>, %5, %cst_13 [0] : vector<4x4x256xf32> to vector<4x256xf32>
    %cst_14 = arith.constant 2.500000e-01 : f32
    %10 = vector.broadcast %cst_14 : f32 to vector<4x256xf32>
    %11 = arith.mulf %9, %10 : vector<4x256xf32>
    %cst_15 = arith.constant dense<0.000000e+00> : vector<4x256xf32>
    %12 = vector.multi_reduction <add>, %1, %cst_15 [0] : vector<4x4x256xf32> to vector<4x256xf32>
    %13 = arith.mulf %1, %1 : vector<4x4x256xf32>
    %cst_16 = arith.constant dense<0.000000e+00> : vector<4x256xf32>
    %14 = vector.multi_reduction <add>, %13, %cst_16 [0] : vector<4x4x256xf32> to vector<4x256xf32>
    %c17_i32 = arith.constant 17 : i32
    %15 = tpu.dynamic_rotate %8 by %c17_i32 dim 1 : vector<4x256xf32>, i32 -> vector<4x256xf32>
    %c0_17 = arith.constant 0 : index
    %c0_18 = arith.constant 0 : index
    %c0_19 = arith.constant 0 : index
    %16 = vector.load %arg3[%c0_17, %c0_18, %c0_19] : memref<9x1x256xf32, #tpu.memory_space<vmem>>, vector<1x1x256xf32>
    %17 = vector.shape_cast %16 : vector<1x1x256xf32> to vector<1x256xf32>
    %18 = vector.broadcast %17 : vector<1x256xf32> to vector<4x256xf32>
    %19 = arith.mulf %15, %18 : vector<4x256xf32>
    %c0_20 = arith.constant 0 : index
    %c0_21 = arith.constant 0 : index
    %c0_22 = arith.constant 0 : index
    %c0_23 = arith.constant 0 : index
    %20 = vector.load %arg2[%c0_20, %c0_21, %c0_22, %c0_23] : memref<3x9x4x4xf32, #tpu.memory_space<vmem>>, vector<1x1x4x4xf32>
    %21 = vector.shape_cast %20 : vector<1x1x4x4xf32> to vector<4x4xf32>
    %cst_24 = arith.constant dense<0.000000e+00> : vector<4x256xf32>
    %22 = tpu.matmul %21, %19, %cst_24 {dimension_numbers = #tpu.dot_dimension_numbers<[1], [0], [0], [1], [0, 0, 1, 1], [], []>} : vector<4x4xf32>, vector<4x256xf32>, vector<4x256xf32> -> vector<4x256xf32>
    %c16_i32 = arith.constant 16 : i32
    %23 = tpu.dynamic_rotate %8 by %c16_i32 dim 1 : vector<4x256xf32>, i32 -> vector<4x256xf32>
    %c1_25 = arith.constant 1 : index
    %c0_26 = arith.constant 0 : index
    %c0_27 = arith.constant 0 : index
    %24 = vector.load %arg3[%c1_25, %c0_26, %c0_27] : memref<9x1x256xf32, #tpu.memory_space<vmem>>, vector<1x1x256xf32>
    %25 = vector.shape_cast %24 : vector<1x1x256xf32> to vector<1x256xf32>
    %26 = vector.broadcast %25 : vector<1x256xf32> to vector<4x256xf32>
    %27 = arith.mulf %23, %26 : vector<4x256xf32>
    %c0_28 = arith.constant 0 : index
    %c1_29 = arith.constant 1 : index
    %c0_30 = arith.constant 0 : index
    %c0_31 = arith.constant 0 : index
    %28 = vector.load %arg2[%c0_28, %c1_29, %c0_30, %c0_31] : memref<3x9x4x4xf32, #tpu.memory_space<vmem>>, vector<1x1x4x4xf32>
    %29 = vector.shape_cast %28 : vector<1x1x4x4xf32> to vector<4x4xf32>
    %cst_32 = arith.constant dense<0.000000e+00> : vector<4x256xf32>
    %30 = tpu.matmul %29, %27, %cst_32 {dimension_numbers = #tpu.dot_dimension_numbers<[1], [0], [0], [1], [0, 0, 1, 1], [], []>} : vector<4x4xf32>, vector<4x256xf32>, vector<4x256xf32> -> vector<4x256xf32>
    %31 = arith.addf %22, %30 : vector<4x256xf32>
    %c15_i32 = arith.constant 15 : i32
    %32 = tpu.dynamic_rotate %8 by %c15_i32 dim 1 : vector<4x256xf32>, i32 -> vector<4x256xf32>
    %c2_33 = arith.constant 2 : index
    %c0_34 = arith.constant 0 : index
    %c0_35 = arith.constant 0 : index
    %33 = vector.load %arg3[%c2_33, %c0_34, %c0_35] : memref<9x1x256xf32, #tpu.memory_space<vmem>>, vector<1x1x256xf32>
    %34 = vector.shape_cast %33 : vector<1x1x256xf32> to vector<1x256xf32>
    %35 = vector.broadcast %34 : vector<1x256xf32> to vector<4x256xf32>
    %36 = arith.mulf %32, %35 : vector<4x256xf32>
    %c0_36 = arith.constant 0 : index
    %c2_37 = arith.constant 2 : index
    %c0_38 = arith.constant 0 : index
    %c0_39 = arith.constant 0 : index
    %37 = vector.load %arg2[%c0_36, %c2_37, %c0_38, %c0_39] : memref<3x9x4x4xf32, #tpu.memory_space<vmem>>, vector<1x1x4x4xf32>
    %38 = vector.shape_cast %37 : vector<1x1x4x4xf32> to vector<4x4xf32>
    %cst_40 = arith.constant dense<0.000000e+00> : vector<4x256xf32>
    %39 = tpu.matmul %38, %36, %cst_40 {dimension_numbers = #tpu.dot_dimension_numbers<[1], [0], [0], [1], [0, 0, 1, 1], [], []>} : vector<4x4xf32>, vector<4x256xf32>, vector<4x256xf32> -> vector<4x256xf32>
    %40 = arith.addf %31, %39 : vector<4x256xf32>
    %c1_i32 = arith.constant 1 : i32
    %41 = tpu.dynamic_rotate %8 by %c1_i32 dim 1 : vector<4x256xf32>, i32 -> vector<4x256xf32>
    %c3 = arith.constant 3 : index
    %c0_41 = arith.constant 0 : index
    %c0_42 = arith.constant 0 : index
    %42 = vector.load %arg3[%c3, %c0_41, %c0_42] : memref<9x1x256xf32, #tpu.memory_space<vmem>>, vector<1x1x256xf32>
    %43 = vector.shape_cast %42 : vector<1x1x256xf32> to vector<1x256xf32>
    %44 = vector.broadcast %43 : vector<1x256xf32> to vector<4x256xf32>
    %45 = arith.mulf %41, %44 : vector<4x256xf32>
    %c0_43 = arith.constant 0 : index
    %c3_44 = arith.constant 3 : index
    %c0_45 = arith.constant 0 : index
    %c0_46 = arith.constant 0 : index
    %46 = vector.load %arg2[%c0_43, %c3_44, %c0_45, %c0_46] : memref<3x9x4x4xf32, #tpu.memory_space<vmem>>, vector<1x1x4x4xf32>
    %47 = vector.shape_cast %46 : vector<1x1x4x4xf32> to vector<4x4xf32>
    %cst_47 = arith.constant dense<0.000000e+00> : vector<4x256xf32>
    %48 = tpu.matmul %47, %45, %cst_47 {dimension_numbers = #tpu.dot_dimension_numbers<[1], [0], [0], [1], [0, 0, 1, 1], [], []>} : vector<4x4xf32>, vector<4x256xf32>, vector<4x256xf32> -> vector<4x256xf32>
    %49 = arith.addf %40, %48 : vector<4x256xf32>
    %c0_48 = arith.constant 0 : index
    %c4 = arith.constant 4 : index
    %c0_49 = arith.constant 0 : index
    %c0_50 = arith.constant 0 : index
    %50 = vector.load %arg2[%c0_48, %c4, %c0_49, %c0_50] : memref<3x9x4x4xf32, #tpu.memory_space<vmem>>, vector<1x1x4x4xf32>
    %51 = vector.shape_cast %50 : vector<1x1x4x4xf32> to vector<4x4xf32>
    %cst_51 = arith.constant dense<0.000000e+00> : vector<4x256xf32>
    %52 = tpu.matmul %51, %8, %cst_51 {dimension_numbers = #tpu.dot_dimension_numbers<[1], [0], [0], [1], [0, 0, 1, 1], [], []>} : vector<4x4xf32>, vector<4x256xf32>, vector<4x256xf32> -> vector<4x256xf32>
    %53 = arith.addf %49, %52 : vector<4x256xf32>
    %c255_i32 = arith.constant 255 : i32
    %54 = tpu.dynamic_rotate %8 by %c255_i32 dim 1 : vector<4x256xf32>, i32 -> vector<4x256xf32>
    %c5 = arith.constant 5 : index
    %c0_52 = arith.constant 0 : index
    %c0_53 = arith.constant 0 : index
    %55 = vector.load %arg3[%c5, %c0_52, %c0_53] : memref<9x1x256xf32, #tpu.memory_space<vmem>>, vector<1x1x256xf32>
    %56 = vector.shape_cast %55 : vector<1x1x256xf32> to vector<1x256xf32>
    %57 = vector.broadcast %56 : vector<1x256xf32> to vector<4x256xf32>
    %58 = arith.mulf %54, %57 : vector<4x256xf32>
    %c0_54 = arith.constant 0 : index
    %c5_55 = arith.constant 5 : index
    %c0_56 = arith.constant 0 : index
    %c0_57 = arith.constant 0 : index
    %59 = vector.load %arg2[%c0_54, %c5_55, %c0_56, %c0_57] : memref<3x9x4x4xf32, #tpu.memory_space<vmem>>, vector<1x1x4x4xf32>
    %60 = vector.shape_cast %59 : vector<1x1x4x4xf32> to vector<4x4xf32>
    %cst_58 = arith.constant dense<0.000000e+00> : vector<4x256xf32>
    %61 = tpu.matmul %60, %58, %cst_58 {dimension_numbers = #tpu.dot_dimension_numbers<[1], [0], [0], [1], [0, 0, 1, 1], [], []>} : vector<4x4xf32>, vector<4x256xf32>, vector<4x256xf32> -> vector<4x256xf32>
    %62 = arith.addf %53, %61 : vector<4x256xf32>
    %c241_i32 = arith.constant 241 : i32
    %63 = tpu.dynamic_rotate %8 by %c241_i32 dim 1 : vector<4x256xf32>, i32 -> vector<4x256xf32>
    %c6 = arith.constant 6 : index
    %c0_59 = arith.constant 0 : index
    %c0_60 = arith.constant 0 : index
    %64 = vector.load %arg3[%c6, %c0_59, %c0_60] : memref<9x1x256xf32, #tpu.memory_space<vmem>>, vector<1x1x256xf32>
    %65 = vector.shape_cast %64 : vector<1x1x256xf32> to vector<1x256xf32>
    %66 = vector.broadcast %65 : vector<1x256xf32> to vector<4x256xf32>
    %67 = arith.mulf %63, %66 : vector<4x256xf32>
    %c0_61 = arith.constant 0 : index
    %c6_62 = arith.constant 6 : index
    %c0_63 = arith.constant 0 : index
    %c0_64 = arith.constant 0 : index
    %68 = vector.load %arg2[%c0_61, %c6_62, %c0_63, %c0_64] : memref<3x9x4x4xf32, #tpu.memory_space<vmem>>, vector<1x1x4x4xf32>
    %69 = vector.shape_cast %68 : vector<1x1x4x4xf32> to vector<4x4xf32>
    %cst_65 = arith.constant dense<0.000000e+00> : vector<4x256xf32>
    %70 = tpu.matmul %69, %67, %cst_65 {dimension_numbers = #tpu.dot_dimension_numbers<[1], [0], [0], [1], [0, 0, 1, 1], [], []>} : vector<4x4xf32>, vector<4x256xf32>, vector<4x256xf32> -> vector<4x256xf32>
    %71 = arith.addf %62, %70 : vector<4x256xf32>
    %c240_i32 = arith.constant 240 : i32
    %72 = tpu.dynamic_rotate %8 by %c240_i32 dim 1 : vector<4x256xf32>, i32 -> vector<4x256xf32>
    %c7 = arith.constant 7 : index
    %c0_66 = arith.constant 0 : index
    %c0_67 = arith.constant 0 : index
    %73 = vector.load %arg3[%c7, %c0_66, %c0_67] : memref<9x1x256xf32, #tpu.memory_space<vmem>>, vector<1x1x256xf32>
    %74 = vector.shape_cast %73 : vector<1x1x256xf32> to vector<1x256xf32>
    %75 = vector.broadcast %74 : vector<1x256xf32> to vector<4x256xf32>
    %76 = arith.mulf %72, %75 : vector<4x256xf32>
    %c0_68 = arith.constant 0 : index
    %c7_69 = arith.constant 7 : index
    %c0_70 = arith.constant 0 : index
    %c0_71 = arith.constant 0 : index
    %77 = vector.load %arg2[%c0_68, %c7_69, %c0_70, %c0_71] : memref<3x9x4x4xf32, #tpu.memory_space<vmem>>, vector<1x1x4x4xf32>
    %78 = vector.shape_cast %77 : vector<1x1x4x4xf32> to vector<4x4xf32>
    %cst_72 = arith.constant dense<0.000000e+00> : vector<4x256xf32>
    %79 = tpu.matmul %78, %76, %cst_72 {dimension_numbers = #tpu.dot_dimension_numbers<[1], [0], [0], [1], [0, 0, 1, 1], [], []>} : vector<4x4xf32>, vector<4x256xf32>, vector<4x256xf32> -> vector<4x256xf32>
    %80 = arith.addf %71, %79 : vector<4x256xf32>
    %c239_i32 = arith.constant 239 : i32
    %81 = tpu.dynamic_rotate %8 by %c239_i32 dim 1 : vector<4x256xf32>, i32 -> vector<4x256xf32>
    %c8 = arith.constant 8 : index
    %c0_73 = arith.constant 0 : index
    %c0_74 = arith.constant 0 : index
    %82 = vector.load %arg3[%c8, %c0_73, %c0_74] : memref<9x1x256xf32, #tpu.memory_space<vmem>>, vector<1x1x256xf32>
    %83 = vector.shape_cast %82 : vector<1x1x256xf32> to vector<1x256xf32>
    %84 = vector.broadcast %83 : vector<1x256xf32> to vector<4x256xf32>
    %85 = arith.mulf %81, %84 : vector<4x256xf32>
    %c0_75 = arith.constant 0 : index
    %c8_76 = arith.constant 8 : index
    %c0_77 = arith.constant 0 : index
    %c0_78 = arith.constant 0 : index
    %86 = vector.load %arg2[%c0_75, %c8_76, %c0_77, %c0_78] : memref<3x9x4x4xf32, #tpu.memory_space<vmem>>, vector<1x1x4x4xf32>
    %87 = vector.shape_cast %86 : vector<1x1x4x4xf32> to vector<4x4xf32>
    %cst_79 = arith.constant dense<0.000000e+00> : vector<4x256xf32>
    %88 = tpu.matmul %87, %85, %cst_79 {dimension_numbers = #tpu.dot_dimension_numbers<[1], [0], [0], [1], [0, 0, 1, 1], [], []>} : vector<4x4xf32>, vector<4x256xf32>, vector<4x256xf32> -> vector<4x256xf32>
    %89 = arith.addf %80, %88 : vector<4x256xf32>
    %90 = arith.addf %8, %89 : vector<4x256xf32>
    %c17_i32_80 = arith.constant 17 : i32
    %91 = tpu.dynamic_rotate %90 by %c17_i32_80 dim 1 : vector<4x256xf32>, i32 -> vector<4x256xf32>
    %c0_81 = arith.constant 0 : index
    %c0_82 = arith.constant 0 : index
    %c0_83 = arith.constant 0 : index
    %92 = vector.load %arg3[%c0_81, %c0_82, %c0_83] : memref<9x1x256xf32, #tpu.memory_space<vmem>>, vector<1x1x256xf32>
    %93 = vector.shape_cast %92 : vector<1x1x256xf32> to vector<1x256xf32>
    %94 = vector.broadcast %93 : vector<1x256xf32> to vector<4x256xf32>
    %95 = arith.mulf %91, %94 : vector<4x256xf32>
    %c1_84 = arith.constant 1 : index
    %c0_85 = arith.constant 0 : index
    %c0_86 = arith.constant 0 : index
    %c0_87 = arith.constant 0 : index
    %96 = vector.load %arg2[%c1_84, %c0_85, %c0_86, %c0_87] : memref<3x9x4x4xf32, #tpu.memory_space<vmem>>, vector<1x1x4x4xf32>
    %97 = vector.shape_cast %96 : vector<1x1x4x4xf32> to vector<4x4xf32>
    %cst_88 = arith.constant dense<0.000000e+00> : vector<4x256xf32>
    %98 = tpu.matmul %97, %95, %cst_88 {dimension_numbers = #tpu.dot_dimension_numbers<[1], [0], [0], [1], [0, 0, 1, 1], [], []>} : vector<4x4xf32>, vector<4x256xf32>, vector<4x256xf32> -> vector<4x256xf32>
    %c16_i32_89 = arith.constant 16 : i32
    %99 = tpu.dynamic_rotate %90 by %c16_i32_89 dim 1 : vector<4x256xf32>, i32 -> vector<4x256xf32>
    %c1_90 = arith.constant 1 : index
    %c0_91 = arith.constant 0 : index
    %c0_92 = arith.constant 0 : index
    %100 = vector.load %arg3[%c1_90, %c0_91, %c0_92] : memref<9x1x256xf32, #tpu.memory_space<vmem>>, vector<1x1x256xf32>
    %101 = vector.shape_cast %100 : vector<1x1x256xf32> to vector<1x256xf32>
    %102 = vector.broadcast %101 : vector<1x256xf32> to vector<4x256xf32>
    %103 = arith.mulf %99, %102 : vector<4x256xf32>
    %c1_93 = arith.constant 1 : index
    %c1_94 = arith.constant 1 : index
    %c0_95 = arith.constant 0 : index
    %c0_96 = arith.constant 0 : index
    %104 = vector.load %arg2[%c1_93, %c1_94, %c0_95, %c0_96] : memref<3x9x4x4xf32, #tpu.memory_space<vmem>>, vector<1x1x4x4xf32>
    %105 = vector.shape_cast %104 : vector<1x1x4x4xf32> to vector<4x4xf32>
    %cst_97 = arith.constant dense<0.000000e+00> : vector<4x256xf32>
    %106 = tpu.matmul %105, %103, %cst_97 {dimension_numbers = #tpu.dot_dimension_numbers<[1], [0], [0], [1], [0, 0, 1, 1], [], []>} : vector<4x4xf32>, vector<4x256xf32>, vector<4x256xf32> -> vector<4x256xf32>
    %107 = arith.addf %98, %106 : vector<4x256xf32>
    %c15_i32_98 = arith.constant 15 : i32
    %108 = tpu.dynamic_rotate %90 by %c15_i32_98 dim 1 : vector<4x256xf32>, i32 -> vector<4x256xf32>
    %c2_99 = arith.constant 2 : index
    %c0_100 = arith.constant 0 : index
    %c0_101 = arith.constant 0 : index
    %109 = vector.load %arg3[%c2_99, %c0_100, %c0_101] : memref<9x1x256xf32, #tpu.memory_space<vmem>>, vector<1x1x256xf32>
    %110 = vector.shape_cast %109 : vector<1x1x256xf32> to vector<1x256xf32>
    %111 = vector.broadcast %110 : vector<1x256xf32> to vector<4x256xf32>
    %112 = arith.mulf %108, %111 : vector<4x256xf32>
    %c1_102 = arith.constant 1 : index
    %c2_103 = arith.constant 2 : index
    %c0_104 = arith.constant 0 : index
    %c0_105 = arith.constant 0 : index
    %113 = vector.load %arg2[%c1_102, %c2_103, %c0_104, %c0_105] : memref<3x9x4x4xf32, #tpu.memory_space<vmem>>, vector<1x1x4x4xf32>
    %114 = vector.shape_cast %113 : vector<1x1x4x4xf32> to vector<4x4xf32>
    %cst_106 = arith.constant dense<0.000000e+00> : vector<4x256xf32>
    %115 = tpu.matmul %114, %112, %cst_106 {dimension_numbers = #tpu.dot_dimension_numbers<[1], [0], [0], [1], [0, 0, 1, 1], [], []>} : vector<4x4xf32>, vector<4x256xf32>, vector<4x256xf32> -> vector<4x256xf32>
    %116 = arith.addf %107, %115 : vector<4x256xf32>
    %c1_i32_107 = arith.constant 1 : i32
    %117 = tpu.dynamic_rotate %90 by %c1_i32_107 dim 1 : vector<4x256xf32>, i32 -> vector<4x256xf32>
    %c3_108 = arith.constant 3 : index
    %c0_109 = arith.constant 0 : index
    %c0_110 = arith.constant 0 : index
    %118 = vector.load %arg3[%c3_108, %c0_109, %c0_110] : memref<9x1x256xf32, #tpu.memory_space<vmem>>, vector<1x1x256xf32>
    %119 = vector.shape_cast %118 : vector<1x1x256xf32> to vector<1x256xf32>
    %120 = vector.broadcast %119 : vector<1x256xf32> to vector<4x256xf32>
    %121 = arith.mulf %117, %120 : vector<4x256xf32>
    %c1_111 = arith.constant 1 : index
    %c3_112 = arith.constant 3 : index
    %c0_113 = arith.constant 0 : index
    %c0_114 = arith.constant 0 : index
    %122 = vector.load %arg2[%c1_111, %c3_112, %c0_113, %c0_114] : memref<3x9x4x4xf32, #tpu.memory_space<vmem>>, vector<1x1x4x4xf32>
    %123 = vector.shape_cast %122 : vector<1x1x4x4xf32> to vector<4x4xf32>
    %cst_115 = arith.constant dense<0.000000e+00> : vector<4x256xf32>
    %124 = tpu.matmul %123, %121, %cst_115 {dimension_numbers = #tpu.dot_dimension_numbers<[1], [0], [0], [1], [0, 0, 1, 1], [], []>} : vector<4x4xf32>, vector<4x256xf32>, vector<4x256xf32> -> vector<4x256xf32>
    %125 = arith.addf %116, %124 : vector<4x256xf32>
    %c1_116 = arith.constant 1 : index
    %c4_117 = arith.constant 4 : index
    %c0_118 = arith.constant 0 : index
    %c0_119 = arith.constant 0 : index
    %126 = vector.load %arg2[%c1_116, %c4_117, %c0_118, %c0_119] : memref<3x9x4x4xf32, #tpu.memory_space<vmem>>, vector<1x1x4x4xf32>
    %127 = vector.shape_cast %126 : vector<1x1x4x4xf32> to vector<4x4xf32>
    %cst_120 = arith.constant dense<0.000000e+00> : vector<4x256xf32>
    %128 = tpu.matmul %127, %90, %cst_120 {dimension_numbers = #tpu.dot_dimension_numbers<[1], [0], [0], [1], [0, 0, 1, 1], [], []>} : vector<4x4xf32>, vector<4x256xf32>, vector<4x256xf32> -> vector<4x256xf32>
    %129 = arith.addf %125, %128 : vector<4x256xf32>
    %c255_i32_121 = arith.constant 255 : i32
    %130 = tpu.dynamic_rotate %90 by %c255_i32_121 dim 1 : vector<4x256xf32>, i32 -> vector<4x256xf32>
    %c5_122 = arith.constant 5 : index
    %c0_123 = arith.constant 0 : index
    %c0_124 = arith.constant 0 : index
    %131 = vector.load %arg3[%c5_122, %c0_123, %c0_124] : memref<9x1x256xf32, #tpu.memory_space<vmem>>, vector<1x1x256xf32>
    %132 = vector.shape_cast %131 : vector<1x1x256xf32> to vector<1x256xf32>
    %133 = vector.broadcast %132 : vector<1x256xf32> to vector<4x256xf32>
    %134 = arith.mulf %130, %133 : vector<4x256xf32>
    %c1_125 = arith.constant 1 : index
    %c5_126 = arith.constant 5 : index
    %c0_127 = arith.constant 0 : index
    %c0_128 = arith.constant 0 : index
    %135 = vector.load %arg2[%c1_125, %c5_126, %c0_127, %c0_128] : memref<3x9x4x4xf32, #tpu.memory_space<vmem>>, vector<1x1x4x4xf32>
    %136 = vector.shape_cast %135 : vector<1x1x4x4xf32> to vector<4x4xf32>
    %cst_129 = arith.constant dense<0.000000e+00> : vector<4x256xf32>
    %137 = tpu.matmul %136, %134, %cst_129 {dimension_numbers = #tpu.dot_dimension_numbers<[1], [0], [0], [1], [0, 0, 1, 1], [], []>} : vector<4x4xf32>, vector<4x256xf32>, vector<4x256xf32> -> vector<4x256xf32>
    %138 = arith.addf %129, %137 : vector<4x256xf32>
    %c241_i32_130 = arith.constant 241 : i32
    %139 = tpu.dynamic_rotate %90 by %c241_i32_130 dim 1 : vector<4x256xf32>, i32 -> vector<4x256xf32>
    %c6_131 = arith.constant 6 : index
    %c0_132 = arith.constant 0 : index
    %c0_133 = arith.constant 0 : index
    %140 = vector.load %arg3[%c6_131, %c0_132, %c0_133] : memref<9x1x256xf32, #tpu.memory_space<vmem>>, vector<1x1x256xf32>
    %141 = vector.shape_cast %140 : vector<1x1x256xf32> to vector<1x256xf32>
    %142 = vector.broadcast %141 : vector<1x256xf32> to vector<4x256xf32>
    %143 = arith.mulf %139, %142 : vector<4x256xf32>
    %c1_134 = arith.constant 1 : index
    %c6_135 = arith.constant 6 : index
    %c0_136 = arith.constant 0 : index
    %c0_137 = arith.constant 0 : index
    %144 = vector.load %arg2[%c1_134, %c6_135, %c0_136, %c0_137] : memref<3x9x4x4xf32, #tpu.memory_space<vmem>>, vector<1x1x4x4xf32>
    %145 = vector.shape_cast %144 : vector<1x1x4x4xf32> to vector<4x4xf32>
    %cst_138 = arith.constant dense<0.000000e+00> : vector<4x256xf32>
    %146 = tpu.matmul %145, %143, %cst_138 {dimension_numbers = #tpu.dot_dimension_numbers<[1], [0], [0], [1], [0, 0, 1, 1], [], []>} : vector<4x4xf32>, vector<4x256xf32>, vector<4x256xf32> -> vector<4x256xf32>
    %147 = arith.addf %138, %146 : vector<4x256xf32>
    %c240_i32_139 = arith.constant 240 : i32
    %148 = tpu.dynamic_rotate %90 by %c240_i32_139 dim 1 : vector<4x256xf32>, i32 -> vector<4x256xf32>
    %c7_140 = arith.constant 7 : index
    %c0_141 = arith.constant 0 : index
    %c0_142 = arith.constant 0 : index
    %149 = vector.load %arg3[%c7_140, %c0_141, %c0_142] : memref<9x1x256xf32, #tpu.memory_space<vmem>>, vector<1x1x256xf32>
    %150 = vector.shape_cast %149 : vector<1x1x256xf32> to vector<1x256xf32>
    %151 = vector.broadcast %150 : vector<1x256xf32> to vector<4x256xf32>
    %152 = arith.mulf %148, %151 : vector<4x256xf32>
    %c1_143 = arith.constant 1 : index
    %c7_144 = arith.constant 7 : index
    %c0_145 = arith.constant 0 : index
    %c0_146 = arith.constant 0 : index
    %153 = vector.load %arg2[%c1_143, %c7_144, %c0_145, %c0_146] : memref<3x9x4x4xf32, #tpu.memory_space<vmem>>, vector<1x1x4x4xf32>
    %154 = vector.shape_cast %153 : vector<1x1x4x4xf32> to vector<4x4xf32>
    %cst_147 = arith.constant dense<0.000000e+00> : vector<4x256xf32>
    %155 = tpu.matmul %154, %152, %cst_147 {dimension_numbers = #tpu.dot_dimension_numbers<[1], [0], [0], [1], [0, 0, 1, 1], [], []>} : vector<4x4xf32>, vector<4x256xf32>, vector<4x256xf32> -> vector<4x256xf32>
    %156 = arith.addf %147, %155 : vector<4x256xf32>
    %c239_i32_148 = arith.constant 239 : i32
    %157 = tpu.dynamic_rotate %90 by %c239_i32_148 dim 1 : vector<4x256xf32>, i32 -> vector<4x256xf32>
    %c8_149 = arith.constant 8 : index
    %c0_150 = arith.constant 0 : index
    %c0_151 = arith.constant 0 : index
    %158 = vector.load %arg3[%c8_149, %c0_150, %c0_151] : memref<9x1x256xf32, #tpu.memory_space<vmem>>, vector<1x1x256xf32>
    %159 = vector.shape_cast %158 : vector<1x1x256xf32> to vector<1x256xf32>
    %160 = vector.broadcast %159 : vector<1x256xf32> to vector<4x256xf32>
    %161 = arith.mulf %157, %160 : vector<4x256xf32>
    %c1_152 = arith.constant 1 : index
    %c8_153 = arith.constant 8 : index
    %c0_154 = arith.constant 0 : index
    %c0_155 = arith.constant 0 : index
    %162 = vector.load %arg2[%c1_152, %c8_153, %c0_154, %c0_155] : memref<3x9x4x4xf32, #tpu.memory_space<vmem>>, vector<1x1x4x4xf32>
    %163 = vector.shape_cast %162 : vector<1x1x4x4xf32> to vector<4x4xf32>
    %cst_156 = arith.constant dense<0.000000e+00> : vector<4x256xf32>
    %164 = tpu.matmul %163, %161, %cst_156 {dimension_numbers = #tpu.dot_dimension_numbers<[1], [0], [0], [1], [0, 0, 1, 1], [], []>} : vector<4x4xf32>, vector<4x256xf32>, vector<4x256xf32> -> vector<4x256xf32>
    %165 = arith.addf %156, %164 : vector<4x256xf32>
    %166 = arith.addf %11, %165 : vector<4x256xf32>
    %c17_i32_157 = arith.constant 17 : i32
    %167 = tpu.dynamic_rotate %166 by %c17_i32_157 dim 1 : vector<4x256xf32>, i32 -> vector<4x256xf32>
    %c0_158 = arith.constant 0 : index
    %c0_159 = arith.constant 0 : index
    %c0_160 = arith.constant 0 : index
    %168 = vector.load %arg3[%c0_158, %c0_159, %c0_160] : memref<9x1x256xf32, #tpu.memory_space<vmem>>, vector<1x1x256xf32>
    %169 = vector.shape_cast %168 : vector<1x1x256xf32> to vector<1x256xf32>
    %170 = vector.broadcast %169 : vector<1x256xf32> to vector<4x256xf32>
    %171 = arith.mulf %167, %170 : vector<4x256xf32>
    %c2_161 = arith.constant 2 : index
    %c0_162 = arith.constant 0 : index
    %c0_163 = arith.constant 0 : index
    %c0_164 = arith.constant 0 : index
    %172 = vector.load %arg2[%c2_161, %c0_162, %c0_163, %c0_164] : memref<3x9x4x4xf32, #tpu.memory_space<vmem>>, vector<1x1x4x4xf32>
    %173 = vector.shape_cast %172 : vector<1x1x4x4xf32> to vector<4x4xf32>
    %cst_165 = arith.constant dense<0.000000e+00> : vector<4x256xf32>
    %174 = tpu.matmul %173, %171, %cst_165 {dimension_numbers = #tpu.dot_dimension_numbers<[1], [0], [0], [1], [0, 0, 1, 1], [], []>} : vector<4x4xf32>, vector<4x256xf32>, vector<4x256xf32> -> vector<4x256xf32>
    %c16_i32_166 = arith.constant 16 : i32
    %175 = tpu.dynamic_rotate %166 by %c16_i32_166 dim 1 : vector<4x256xf32>, i32 -> vector<4x256xf32>
    %c1_167 = arith.constant 1 : index
    %c0_168 = arith.constant 0 : index
    %c0_169 = arith.constant 0 : index
    %176 = vector.load %arg3[%c1_167, %c0_168, %c0_169] : memref<9x1x256xf32, #tpu.memory_space<vmem>>, vector<1x1x256xf32>
    %177 = vector.shape_cast %176 : vector<1x1x256xf32> to vector<1x256xf32>
    %178 = vector.broadcast %177 : vector<1x256xf32> to vector<4x256xf32>
    %179 = arith.mulf %175, %178 : vector<4x256xf32>
    %c2_170 = arith.constant 2 : index
    %c1_171 = arith.constant 1 : index
    %c0_172 = arith.constant 0 : index
    %c0_173 = arith.constant 0 : index
    %180 = vector.load %arg2[%c2_170, %c1_171, %c0_172, %c0_173] : memref<3x9x4x4xf32, #tpu.memory_space<vmem>>, vector<1x1x4x4xf32>
    %181 = vector.shape_cast %180 : vector<1x1x4x4xf32> to vector<4x4xf32>
    %cst_174 = arith.constant dense<0.000000e+00> : vector<4x256xf32>
    %182 = tpu.matmul %181, %179, %cst_174 {dimension_numbers = #tpu.dot_dimension_numbers<[1], [0], [0], [1], [0, 0, 1, 1], [], []>} : vector<4x4xf32>, vector<4x256xf32>, vector<4x256xf32> -> vector<4x256xf32>
    %183 = arith.addf %174, %182 : vector<4x256xf32>
    %c15_i32_175 = arith.constant 15 : i32
    %184 = tpu.dynamic_rotate %166 by %c15_i32_175 dim 1 : vector<4x256xf32>, i32 -> vector<4x256xf32>
    %c2_176 = arith.constant 2 : index
    %c0_177 = arith.constant 0 : index
    %c0_178 = arith.constant 0 : index
    %185 = vector.load %arg3[%c2_176, %c0_177, %c0_178] : memref<9x1x256xf32, #tpu.memory_space<vmem>>, vector<1x1x256xf32>
    %186 = vector.shape_cast %185 : vector<1x1x256xf32> to vector<1x256xf32>
    %187 = vector.broadcast %186 : vector<1x256xf32> to vector<4x256xf32>
    %188 = arith.mulf %184, %187 : vector<4x256xf32>
    %c2_179 = arith.constant 2 : index
    %c2_180 = arith.constant 2 : index
    %c0_181 = arith.constant 0 : index
    %c0_182 = arith.constant 0 : index
    %189 = vector.load %arg2[%c2_179, %c2_180, %c0_181, %c0_182] : memref<3x9x4x4xf32, #tpu.memory_space<vmem>>, vector<1x1x4x4xf32>
    %190 = vector.shape_cast %189 : vector<1x1x4x4xf32> to vector<4x4xf32>
    %cst_183 = arith.constant dense<0.000000e+00> : vector<4x256xf32>
    %191 = tpu.matmul %190, %188, %cst_183 {dimension_numbers = #tpu.dot_dimension_numbers<[1], [0], [0], [1], [0, 0, 1, 1], [], []>} : vector<4x4xf32>, vector<4x256xf32>, vector<4x256xf32> -> vector<4x256xf32>
    %192 = arith.addf %183, %191 : vector<4x256xf32>
    %c1_i32_184 = arith.constant 1 : i32
    %193 = tpu.dynamic_rotate %166 by %c1_i32_184 dim 1 : vector<4x256xf32>, i32 -> vector<4x256xf32>
    %c3_185 = arith.constant 3 : index
    %c0_186 = arith.constant 0 : index
    %c0_187 = arith.constant 0 : index
    %194 = vector.load %arg3[%c3_185, %c0_186, %c0_187] : memref<9x1x256xf32, #tpu.memory_space<vmem>>, vector<1x1x256xf32>
    %195 = vector.shape_cast %194 : vector<1x1x256xf32> to vector<1x256xf32>
    %196 = vector.broadcast %195 : vector<1x256xf32> to vector<4x256xf32>
    %197 = arith.mulf %193, %196 : vector<4x256xf32>
    %c2_188 = arith.constant 2 : index
    %c3_189 = arith.constant 3 : index
    %c0_190 = arith.constant 0 : index
    %c0_191 = arith.constant 0 : index
    %198 = vector.load %arg2[%c2_188, %c3_189, %c0_190, %c0_191] : memref<3x9x4x4xf32, #tpu.memory_space<vmem>>, vector<1x1x4x4xf32>
    %199 = vector.shape_cast %198 : vector<1x1x4x4xf32> to vector<4x4xf32>
    %cst_192 = arith.constant dense<0.000000e+00> : vector<4x256xf32>
    %200 = tpu.matmul %199, %197, %cst_192 {dimension_numbers = #tpu.dot_dimension_numbers<[1], [0], [0], [1], [0, 0, 1, 1], [], []>} : vector<4x4xf32>, vector<4x256xf32>, vector<4x256xf32> -> vector<4x256xf32>
    %201 = arith.addf %192, %200 : vector<4x256xf32>
    %c2_193 = arith.constant 2 : index
    %c4_194 = arith.constant 4 : index
    %c0_195 = arith.constant 0 : index
    %c0_196 = arith.constant 0 : index
    %202 = vector.load %arg2[%c2_193, %c4_194, %c0_195, %c0_196] : memref<3x9x4x4xf32, #tpu.memory_space<vmem>>, vector<1x1x4x4xf32>
    %203 = vector.shape_cast %202 : vector<1x1x4x4xf32> to vector<4x4xf32>
    %cst_197 = arith.constant dense<0.000000e+00> : vector<4x256xf32>
    %204 = tpu.matmul %203, %166, %cst_197 {dimension_numbers = #tpu.dot_dimension_numbers<[1], [0], [0], [1], [0, 0, 1, 1], [], []>} : vector<4x4xf32>, vector<4x256xf32>, vector<4x256xf32> -> vector<4x256xf32>
    %205 = arith.addf %201, %204 : vector<4x256xf32>
    %c255_i32_198 = arith.constant 255 : i32
    %206 = tpu.dynamic_rotate %166 by %c255_i32_198 dim 1 : vector<4x256xf32>, i32 -> vector<4x256xf32>
    %c5_199 = arith.constant 5 : index
    %c0_200 = arith.constant 0 : index
    %c0_201 = arith.constant 0 : index
    %207 = vector.load %arg3[%c5_199, %c0_200, %c0_201] : memref<9x1x256xf32, #tpu.memory_space<vmem>>, vector<1x1x256xf32>
    %208 = vector.shape_cast %207 : vector<1x1x256xf32> to vector<1x256xf32>
    %209 = vector.broadcast %208 : vector<1x256xf32> to vector<4x256xf32>
    %210 = arith.mulf %206, %209 : vector<4x256xf32>
    %c2_202 = arith.constant 2 : index
    %c5_203 = arith.constant 5 : index
    %c0_204 = arith.constant 0 : index
    %c0_205 = arith.constant 0 : index
    %211 = vector.load %arg2[%c2_202, %c5_203, %c0_204, %c0_205] : memref<3x9x4x4xf32, #tpu.memory_space<vmem>>, vector<1x1x4x4xf32>
    %212 = vector.shape_cast %211 : vector<1x1x4x4xf32> to vector<4x4xf32>
    %cst_206 = arith.constant dense<0.000000e+00> : vector<4x256xf32>
    %213 = tpu.matmul %212, %210, %cst_206 {dimension_numbers = #tpu.dot_dimension_numbers<[1], [0], [0], [1], [0, 0, 1, 1], [], []>} : vector<4x4xf32>, vector<4x256xf32>, vector<4x256xf32> -> vector<4x256xf32>
    %214 = arith.addf %205, %213 : vector<4x256xf32>
    %c241_i32_207 = arith.constant 241 : i32
    %215 = tpu.dynamic_rotate %166 by %c241_i32_207 dim 1 : vector<4x256xf32>, i32 -> vector<4x256xf32>
    %c6_208 = arith.constant 6 : index
    %c0_209 = arith.constant 0 : index
    %c0_210 = arith.constant 0 : index
    %216 = vector.load %arg3[%c6_208, %c0_209, %c0_210] : memref<9x1x256xf32, #tpu.memory_space<vmem>>, vector<1x1x256xf32>
    %217 = vector.shape_cast %216 : vector<1x1x256xf32> to vector<1x256xf32>
    %218 = vector.broadcast %217 : vector<1x256xf32> to vector<4x256xf32>
    %219 = arith.mulf %215, %218 : vector<4x256xf32>
    %c2_211 = arith.constant 2 : index
    %c6_212 = arith.constant 6 : index
    %c0_213 = arith.constant 0 : index
    %c0_214 = arith.constant 0 : index
    %220 = vector.load %arg2[%c2_211, %c6_212, %c0_213, %c0_214] : memref<3x9x4x4xf32, #tpu.memory_space<vmem>>, vector<1x1x4x4xf32>
    %221 = vector.shape_cast %220 : vector<1x1x4x4xf32> to vector<4x4xf32>
    %cst_215 = arith.constant dense<0.000000e+00> : vector<4x256xf32>
    %222 = tpu.matmul %221, %219, %cst_215 {dimension_numbers = #tpu.dot_dimension_numbers<[1], [0], [0], [1], [0, 0, 1, 1], [], []>} : vector<4x4xf32>, vector<4x256xf32>, vector<4x256xf32> -> vector<4x256xf32>
    %223 = arith.addf %214, %222 : vector<4x256xf32>
    %c240_i32_216 = arith.constant 240 : i32
    %224 = tpu.dynamic_rotate %166 by %c240_i32_216 dim 1 : vector<4x256xf32>, i32 -> vector<4x256xf32>
    %c7_217 = arith.constant 7 : index
    %c0_218 = arith.constant 0 : index
    %c0_219 = arith.constant 0 : index
    %225 = vector.load %arg3[%c7_217, %c0_218, %c0_219] : memref<9x1x256xf32, #tpu.memory_space<vmem>>, vector<1x1x256xf32>
    %226 = vector.shape_cast %225 : vector<1x1x256xf32> to vector<1x256xf32>
    %227 = vector.broadcast %226 : vector<1x256xf32> to vector<4x256xf32>
    %228 = arith.mulf %224, %227 : vector<4x256xf32>
    %c2_220 = arith.constant 2 : index
    %c7_221 = arith.constant 7 : index
    %c0_222 = arith.constant 0 : index
    %c0_223 = arith.constant 0 : index
    %229 = vector.load %arg2[%c2_220, %c7_221, %c0_222, %c0_223] : memref<3x9x4x4xf32, #tpu.memory_space<vmem>>, vector<1x1x4x4xf32>
    %230 = vector.shape_cast %229 : vector<1x1x4x4xf32> to vector<4x4xf32>
    %cst_224 = arith.constant dense<0.000000e+00> : vector<4x256xf32>
    %231 = tpu.matmul %230, %228, %cst_224 {dimension_numbers = #tpu.dot_dimension_numbers<[1], [0], [0], [1], [0, 0, 1, 1], [], []>} : vector<4x4xf32>, vector<4x256xf32>, vector<4x256xf32> -> vector<4x256xf32>
    %232 = arith.addf %223, %231 : vector<4x256xf32>
    %c239_i32_225 = arith.constant 239 : i32
    %233 = tpu.dynamic_rotate %166 by %c239_i32_225 dim 1 : vector<4x256xf32>, i32 -> vector<4x256xf32>
    %c8_226 = arith.constant 8 : index
    %c0_227 = arith.constant 0 : index
    %c0_228 = arith.constant 0 : index
    %234 = vector.load %arg3[%c8_226, %c0_227, %c0_228] : memref<9x1x256xf32, #tpu.memory_space<vmem>>, vector<1x1x256xf32>
    %235 = vector.shape_cast %234 : vector<1x1x256xf32> to vector<1x256xf32>
    %236 = vector.broadcast %235 : vector<1x256xf32> to vector<4x256xf32>
    %237 = arith.mulf %233, %236 : vector<4x256xf32>
    %c2_229 = arith.constant 2 : index
    %c8_230 = arith.constant 8 : index
    %c0_231 = arith.constant 0 : index
    %c0_232 = arith.constant 0 : index
    %238 = vector.load %arg2[%c2_229, %c8_230, %c0_231, %c0_232] : memref<3x9x4x4xf32, #tpu.memory_space<vmem>>, vector<1x1x4x4xf32>
    %239 = vector.shape_cast %238 : vector<1x1x4x4xf32> to vector<4x4xf32>
    %cst_233 = arith.constant dense<0.000000e+00> : vector<4x256xf32>
    %240 = tpu.matmul %239, %237, %cst_233 {dimension_numbers = #tpu.dot_dimension_numbers<[1], [0], [0], [1], [0, 0, 1, 1], [], []>} : vector<4x4xf32>, vector<4x256xf32>, vector<4x256xf32> -> vector<4x256xf32>
    %241 = arith.addf %232, %240 : vector<4x256xf32>
    %242 = tpu.concatenate %89, %165, %241 in 0 : vector<4x256xf32>, vector<4x256xf32>, vector<4x256xf32> -> vector<12x256xf32>
    %c0_234 = arith.constant 0 : index
    %c0_235 = arith.constant 0 : index
    %c0_236 = arith.constant 0 : index
    %243 = vector.load %arg4[%c0_234, %c0_235, %c0_236] : memref<1x12x256xf32, #tpu.memory_space<vmem>>, vector<1x12x256xf32>
    %244 = vector.shape_cast %243 : vector<1x12x256xf32> to vector<12x256xf32>
    %245 = vector.shape_cast %242 : vector<12x256xf32> to vector<1x12x256xf32>
    tpu.vector_store %arg4[%c0_234, %c0_235, %c0_236], %245 {strides = array<i32>} : memref<1x12x256xf32, #tpu.memory_space<vmem>>, vector<1x12x256xf32>,
    %cst_237 = arith.constant 4.000000e+00 : f32
    %246 = vector.broadcast %cst_237 : f32 to vector<12x256xf32>
    %247 = arith.mulf %246, %242 : vector<12x256xf32>
    %248 = arith.mulf %242, %242 : vector<12x256xf32>
    %cst_238 = arith.constant 4.000000e+00 : f32
    %249 = vector.broadcast %cst_238 : f32 to vector<12x256xf32>
    %250 = arith.mulf %249, %248 : vector<12x256xf32>
    %251 = tpu.concatenate %12, %247, %14, %250 in 0 : vector<4x256xf32>, vector<12x256xf32>, vector<4x256xf32>, vector<12x256xf32> -> vector<32x256xf32>
    %cst_239 = arith.constant dense<0.000000e+00> : vector<32xf32>
    %252 = vector.multi_reduction <add>, %251, %cst_239 [1] : vector<32x256xf32> to vector<32xf32>
    %253 = vector.shape_cast %252 : vector<32xf32> to vector<32x1xf32>
    %c0_240 = arith.constant 0 : index
    %c0_241 = arith.constant 0 : index
    %c0_242 = arith.constant 0 : index
    %254 = vector.load %arg5[%c0_240, %c0_241, %c0_242] : memref<1x32x1xf32, #tpu.memory_space<vmem>>, vector<1x32x1xf32>
    %255 = vector.shape_cast %254 : vector<1x32x1xf32> to vector<32x1xf32>
    %256 = vector.shape_cast %253 : vector<32x1xf32> to vector<1x32x1xf32>
    tpu.vector_store %arg5[%c0_240, %c0_241, %c0_242], %256 {strides = array<i32>} : memref<1x32x1xf32, #tpu.memory_space<vmem>>, vector<1x32x1xf32>,
    return
  }
  func.func @transform_0(%arg0: i32) -> (i32, i32, i32, i32, i32) {
    %c0_i32 = arith.constant 0 : i32
    %c0_i32_0 = arith.constant 0 : i32
    %c0_i32_1 = arith.constant 0 : i32
    %c0_i32_2 = arith.constant 0 : i32
    %c0_i32_3 = arith.constant 0 : i32
    return %arg0, %c0_i32, %c0_i32_0, %c0_i32_1, %c0_i32_2 : i32, i32, i32, i32, i32
  }
  func.func @transform_1(%arg0: i32) -> (i32, i32, i32, i32) {
    %c0_i32 = arith.constant 0 : i32
    %c0_i32_0 = arith.constant 0 : i32
    %c0_i32_1 = arith.constant 0 : i32
    %c0_i32_2 = arith.constant 0 : i32
    %c0_i32_3 = arith.constant 0 : i32
    return %c0_i32, %c0_i32_0, %c0_i32_1, %c0_i32_2 : i32, i32, i32, i32
  }
  func.func @transform_2(%arg0: i32) -> (i32, i32, i32) {
    %c0_i32 = arith.constant 0 : i32
    %c0_i32_0 = arith.constant 0 : i32
    %c0_i32_1 = arith.constant 0 : i32
    %c0_i32_2 = arith.constant 0 : i32
    return %c0_i32, %c0_i32_0, %c0_i32_1 : i32, i32, i32
  }
  func.func @transform_3(%arg0: i32) -> (i32, i32, i32) {
    %c0_i32 = arith.constant 0 : i32
    %c0_i32_0 = arith.constant 0 : i32
    %c0_i32_1 = arith.constant 0 : i32
    return %arg0, %c0_i32, %c0_i32_0 : i32, i32, i32
  }
  func.func @transform_4(%arg0: i32) -> (i32, i32, i32) {
    %c0_i32 = arith.constant 0 : i32
    %c0_i32_0 = arith.constant 0 : i32
    %c0_i32_1 = arith.constant 0 : i32
    return %arg0, %c0_i32, %c0_i32_0 : i32, i32, i32
  }
}

</mosaic_0001>

<llo_original>
// kernel: lgcsm_forward.3
$region0: #{lgcsm_forward.3}
  #allocation0 [shape = 'u32[]', space=smem, size = 0x4, offset = 0x4, fixed_abs, tag = 'smem constant byte address 0x4 - core index']
  #allocation1 [shape = 'u32[144,128]{1,0:T(1,128)}', space=vmem, size = 0x12000, scoped, tag = 'internal scratch']
  %s0 = inlined_call_operand.vmem [shape: f32[2,4,4,4,256], index: 0, kind: input, shape index: {}]
  %s1 = inlined_call_operand.vmem [shape: f32[2,12,256], index: 1, kind: input, shape index: {}]
  %s2 = inlined_call_operand.vmem [shape: f32[2,32,1], index: 2, kind: input, shape index: {}]
  %s3 = inlined_call_operand.vmem [shape: f32[32,1], index: 3, kind: input, shape index: {}]
  %s4 = inlined_call_operand.vmem [shape: f32[2,4,16,256], index: 4, kind: output, shape index: {}]
  %s5 = sld [smem:[#allocation0]]
  $region87: #{lgcsm_forward.3} parent=0
    _
  %s7 = ssub.s32 1, %s5
  %s8 = scalar_select 0, %s7, %s5
  $region1: #{lgcsm_forward.3} parent=0
    #allocation2 [shape = 'u8[32768]{0}', space=vmem, size = 0x8000, scoped, tag = 'input window, operand 0']
    loop: start=0, step=1, limit=4
    $region2: #{lgcsm_forward.3} parent=1 // loop_pre_header
      _
    $region3: #{lgcsm_forward.3} parent=1 // loop_header
      %s10 = sphi 0, %s14
      %p11 = scmp.ge.s32.totalorder %s10, 4
      %s17 = sphi 0, %s29
      %s18 = sphi 0, %s25
      %s19 = sphi 0, %s17
      %s20 = sphi 0, %s18
      %s21 = sphi 0, %s19
      %s22 = sphi 0, %s20
      %s34 = sphi 0, %s36
      %s37 = sphi 0, %s34
      %s38 = sphi 0, %s37
      %s54 = sphi 0, %s38
      %s60 = sphi 0, %s62
      %s63 = sphi 0, %s60
      %s64 = sphi 0, %s63
      %s80 = sphi 0, %s64
      %s84 = sphi 0, %s84
      %s86 = sphi 0, %s84
      %s87 = sphi 0, %s86
      %s101 = sphi 0, %s87
      %s105 = sphi 0, %s105
      %s107 = sphi 0, %s105
      %s108 = sphi 0, %s107
      %s122 = sphi 0, %s108
      %s130 = sphi 0, %s132
      %s133 = sphi 0, %s130
      %s134 = sphi 0, %s133
      %s150 = sphi 0, %s134
    $region4: #{lgcsm_forward.3} parent=1 // loop_header_branch
      %13 = sbr.rel (%p11) target = $region8
    $region5: #{lgcsm_forward.3} parent=1 // loop_body
      %s15 = ssub.s32 %s10, 1
      %s16 = ssub.s32 %s10, 2
      %s23 = sadd.s32 1, %s18
      %p24 = scmp.ge.s32.totalorder %s23, 1
      %s25 = scalar_select %p24, 0, %s23
      %s26 = sadd.s32 1, %s17
      %s27 = scalar_select %p24, %s26, %s17
      %p28 = scmp.ge.s32.totalorder %s27, 2
      %s29 = scalar_select %p28, 0, %s27
      %s30 = ssub.s32 %s17, %s29
      %s31 = ssub.s32 %s18, %s25
      %s32 = sor.u32 %s30, %s31
      %p33 = scmp.eq.s32.totalorder %s32, 0
      %s35 = sadd.s32 %s34, 1
      %s36 = scalar_select %p33, %s34, %s35
      %p39 = pneg %p33
      %p40 = scmp.eq.s32.totalorder %s10, 1
      %p41 = por %p39, %p40
      %p42 = scmp.ne.s32.totalorder %s34, %s37
      %p43 = scmp.eq.s32.totalorder %s10, 0
      %p44 = por %p42, %p43
      %p45 = scmp.ne.s32.totalorder %s34, %s37
      %p46 = scmp.eq.s32.totalorder %s15, 1
      %p47 = por %p45, %p46
      %p48 = scmp.ne.s32.totalorder %s37, %s38
      %p49 = scmp.eq.s32.totalorder %s15, 0
      %p50 = por %p48, %p49
      %p51 = scmp.ne.s32.totalorder %s37, %s38
      %p52 = scmp.eq.s32.totalorder %s16, 1
      %p53 = por %p51, %p52
      %p55 = scmp.ne.s32.totalorder %s38, %s54
      %p56 = scmp.eq.s32.totalorder %s16, 0
      %p57 = por %p55, %p56
      %s58 = ssub.s32 %s17, %s29
      %p59 = scmp.eq.s32.totalorder %s58, 0
      %s61 = sadd.s32 %s60, 1
      %s62 = scalar_select %p59, %s60, %s61
      %p65 = pneg %p59
      %p66 = scmp.eq.s32.totalorder %s10, 1
      %p67 = por %p65, %p66
      %p68 = scmp.ne.s32.totalorder %s60, %s63
      %p69 = scmp.eq.s32.totalorder %s10, 0
      %p70 = por %p68, %p69
      %p71 = scmp.ne.s32.totalorder %s60, %s63
      %p72 = scmp.eq.s32.totalorder %s15, 1
      %p73 = por %p71, %p72
      %p74 = scmp.ne.s32.totalorder %s63, %s64
      %p75 = scmp.eq.s32.totalorder %s15, 0
      %p76 = por %p74, %p75
      %p77 = scmp.ne.s32.totalorder %s63, %s64
      %p78 = scmp.eq.s32.totalorder %s16, 1
      %p79 = por %p77, %p78
      %p81 = scmp.ne.s32.totalorder %s64, %s80
      %p82 = scmp.eq.s32.totalorder %s16, 0
      %p83 = por %p81, %p82
      %s85 = sadd.s32 %s84, 1
      %p88 = scmp.eq.s32.totalorder %s10, 1
      %p89 = scmp.ne.s32.totalorder %s84, %s86
      %p90 = scmp.eq.s32.totalorder %s10, 0
      %p91 = por %p89, %p90
      %p92 = scmp.ne.s32.totalorder %s84, %s86
      %p93 = scmp.eq.s32.totalorder %s15, 1
      %p94 = por %p92, %p93
      %p95 = scmp.ne.s32.totalorder %s86, %s87
      %p96 = scmp.eq.s32.totalorder %s15, 0
      %p97 = por %p95, %p96
      %p98 = scmp.ne.s32.totalorder %s86, %s87
      %p99 = scmp.eq.s32.totalorder %s16, 1
      %p100 = por %p98, %p99
      %p102 = scmp.ne.s32.totalorder %s87, %s101
      %p103 = scmp.eq.s32.totalorder %s16, 0
      %p104 = por %p102, %p103
      %s106 = sadd.s32 %s105, 1
      %p109 = scmp.eq.s32.totalorder %s10, 1
      %p110 = scmp.ne.s32.totalorder %s105, %s107
      %p111 = scmp.eq.s32.totalorder %s10, 0
      %p112 = por %p110, %p111
      %p113 = scmp.ne.s32.totalorder %s105, %s107
      %p114 = scmp.eq.s32.totalorder %s15, 1
      %p115 = por %p113, %p114
      %p116 = scmp.ne.s32.totalorder %s107, %s108
      %p117 = scmp.eq.s32.totalorder %s15, 0
      %p118 = por %p116, %p117
      %p119 = scmp.ne.s32.totalorder %s107, %s108
      %p120 = scmp.eq.s32.totalorder %s16, 1
      %p121 = por %p119, %p120
      %p123 = scmp.ne.s32.totalorder %s108, %s122
      %p124 = scmp.eq.s32.totalorder %s16, 0
      %p125 = por %p123, %p124
      %s126 = ssub.s32 %s17, %s29
      %s127 = ssub.s32 %s18, %s25
      %s128 = sor.u32 %s126, %s127
      %p129 = scmp.eq.s32.totalorder %s128, 0
      %s131 = sadd.s32 %s130, 1
      %s132 = scalar_select %p129, %s130, %s131
      %p135 = pneg %p129
      %p136 = scmp.eq.s32.totalorder %s10, 1
      %p137 = por %p135, %p136
      %p138 = scmp.ne.s32.totalorder %s130, %s133
      %p139 = scmp.eq.s32.totalorder %s10, 0
      %p140 = por %p138, %p139
      %p141 = scmp.ne.s32.totalorder %s130, %s133
      %p142 = scmp.eq.s32.totalorder %s15, 1
      %p143 = por %p141, %p142
      %p144 = scmp.ne.s32.totalorder %s133, %s134
      %p145 = scmp.eq.s32.totalorder %s15, 0
      %p146 = por %p144, %p145
      %p147 = scmp.ne.s32.totalorder %s133, %s134
      %p148 = scmp.eq.s32.totalorder %s16, 1
      %p149 = por %p147, %p148
      %p151 = scmp.ne.s32.totalorder %s134, %s150
      %p152 = scmp.eq.s32.totalorder %s16, 0
      %p153 = por %p151, %p152
      %p154 = scmp.le.s32.totalorder 1, %s10
      %p155 = scmp.lt.s32.totalorder %s10, 3
      %p156 = pnand %p154, %p155
      %p157 = pneg %p156
      // Predicated region
      $region9: #{lgcsm_forward.3} parent=5 // pred_check
        _
      $region10: #{lgcsm_forward.3} parent=5 // pred_check_branch
        %159 = sbr.rel (%p156) target = $region12
      $region11: #{lgcsm_forward.3} parent=5 // pred_region
        %s160 = ssub.s32 %s10, 1
        // Predicated region
        $region13: #{lgcsm_forward.3} parent=11 // pred_check
          %p161 = pneg %p97
        $region14: #{lgcsm_forward.3} parent=11 // pred_check_branch
          %163 = sbr.rel (%p161) target = $region16
        $region15: #{lgcsm_forward.3} parent=11 // pred_region
          _
        $region16: #{lgcsm_forward.3} parent=11 // pred_fallthru
          _
        // Predicated region
        $region17: #{lgcsm_forward.3} parent=11 // pred_check
          %p164 = pneg %p118
        $region18: #{lgcsm_forward.3} parent=11 // pred_check_branch
          %166 = sbr.rel (%p164) target = $region20
        $region19: #{lgcsm_forward.3} parent=11 // pred_region
          _
        $region20: #{lgcsm_forward.3} parent=11 // pred_fallthru
          _
      $region12: #{lgcsm_forward.3} parent=5 // pred_fallthru
        _
      %p167 = scmp.lt.s32.totalorder %s10, 2
      // Predicated region
      $region21: #{lgcsm_forward.3} parent=5 // pred_check
        %p168 = pneg %p167
      $region22: #{lgcsm_forward.3} parent=5 // pred_check_branch
        %170 = sbr.rel (%p168) target = $region24
      $region23: #{lgcsm_forward.3} parent=5 // pred_region
        // Predicated region
        $region25: #{lgcsm_forward.3} parent=23 // pred_check
          %p171 = pneg %p44
        $region26: #{lgcsm_forward.3} parent=23 // pred_check_branch
          %173 = sbr.rel (%p171) target = $region28
        $region27: #{lgcsm_forward.3} parent=23 // pred_region
          %s174 = sand.u32 %s34, 1
          %s175 = sand.u32 %s34, 1
          %s176 = smul.addr %s175, 32
          %s177 = scalar_lea.vmem [#allocation2], %s176
          %s178 = smul.u32 4, %s18
          %s179 = smul.addr %s178, 8
          %s180 = smul.addr %s17, 32
          %s181 = sadd.s32 %s179, %s180
          %s182 = smul.addr %s181, 4
          %s183 = scalar_lea.vmem %s0, %s182
          // Predicated region
          $region29: #{lgcsm_forward.3} parent=27 // pred_check
            _
          $region30: #{lgcsm_forward.3} parent=27 // pred_check_branch
            %185 = sbr.rel (0) target = $region32
          $region31: #{lgcsm_forward.3} parent=27 // pred_region
            // Predicated region
            $region33: #{lgcsm_forward.3} parent=31 // pred_check
              _
            $region34: #{lgcsm_forward.3} parent=31 // pred_check_branch
              %187 = sbr.rel (0) target = $region36
            $region35: #{lgcsm_forward.3} parent=31 // pred_region
              // Predicated region
              $region48: #{lgcsm_forward.3} parent=35 // pred_check
                _
              $region49: #{lgcsm_forward.3} parent=35 // pred_check_branch
                %208 = sbr.rel (0) target = $region51
              $region50: #{lgcsm_forward.3} parent=35 // pred_region
                loop: start=0, step=1, limit=1
                $region52: #{lgcsm_forward.3} parent=50 // loop_pre_header
                  _
                $region53: #{lgcsm_forward.3} parent=50 // loop_header
                  %s210 = sphi 0, %s214
                  %p211 = scmp.ge.s32.totalorder %s210, 1
                  %s215 = sphi %s183, %s183
                  %s216 = sphi %s177, %s177
                $region54: #{lgcsm_forward.3} parent=50 // loop_header_branch
                  %213 = sbr.rel (%p211) target = $region58
                $region55: #{lgcsm_forward.3} parent=50 // loop_body
                  %v217 = vld [vmem:[%s215] sm:$0xff]
                  %218 = vst [vmem:[%s216] sm:$0xff] %v217
                  %v219 = vld [vmem:[%s215 + $0x20] sm:$0xff]
                  %220 = vst [vmem:[%s216 + $0x8] sm:$0xff] %v219
                  %v221 = vld [vmem:[%s215 + $0x40] sm:$0xff]
                  %222 = vst [vmem:[%s216 + $0x10] sm:$0xff] %v221
                  %v223 = vld [vmem:[%s215 + $0x60] sm:$0xff]
                  %224 = vst [vmem:[%s216 + $0x18] sm:$0xff] %v223
                $region56: #{lgcsm_forward.3} parent=50 // loop_footer
                  %s214 = sadd.s32 1, %s210
                $region57: #{lgcsm_forward.3} parent=50 // loop_footer_branch
                  %209 = sbr.rel target = $region53
                $region58: #{lgcsm_forward.3} parent=50 // loop_exit
                  _
              $region51: #{lgcsm_forward.3} parent=35 // pred_fallthru
                _
              // Predicated region
              $region59: #{lgcsm_forward.3} parent=35 // pred_check
                _
              $region60: #{lgcsm_forward.3} parent=35 // pred_check_branch
                %226 = sbr.rel target = $region62
              $region61: #{lgcsm_forward.3} parent=35 // pred_region
                _
              $region62: #{lgcsm_forward.3} parent=35 // pred_fallthru
                _
            $region36: #{lgcsm_forward.3} parent=31 // pred_fallthru
              _
            // Predicated region
            $region37: #{lgcsm_forward.3} parent=31 // pred_check
              _
            $region38: #{lgcsm_forward.3} parent=31 // pred_check_branch
              %189 = sbr.rel target = $region40
            $region39: #{lgcsm_forward.3} parent=31 // pred_region
              loop: start=0, step=1, limit=1
              $region41: #{lgcsm_forward.3} parent=39 // loop_pre_header
                _
              $region42: #{lgcsm_forward.3} parent=39 // loop_header
                %s192 = sphi 0, %s196
                %p193 = scmp.ge.s32.totalorder %s192, 1
                %s197 = sphi %s183, %s183
                %s198 = sphi %s177, %s177
              $region43: #{lgcsm_forward.3} parent=39 // loop_header_branch
                %195 = sbr.rel (%p193) target = $region47
              $region44: #{lgcsm_forward.3} parent=39 // loop_body
                %v199 = vld [vmem:[%s197] sm:$0xff]
                %200 = vst [vmem:[%s198] sm:$0xff] %v199
                %v201 = vld [vmem:[%s197 + $0x20] sm:$0xff]
                %202 = vst [vmem:[%s198 + $0x8] sm:$0xff] %v201
                %v203 = vld [vmem:[%s197 + $0x40] sm:$0xff]
                %204 = vst [vmem:[%s198 + $0x10] sm:$0xff] %v203
                %v205 = vld [vmem:[%s197 + $0x60] sm:$0xff]
                %206 = vst [vmem:[%s198 + $0x18] sm:$0xff] %v205
              $region45: #{lgcsm_forward.3} parent=39 // loop_footer
                %s196 = sadd.s32 1, %s192
              $region46: #{lgcsm_forward.3} parent=39 // loop_footer_branch
                %191 = sbr.rel target = $region42
              $region47: #{lgcsm_forward.3} parent=39 // loop_exit
                _
            $region40: #{lgcsm_forward.3} parent=31 // pred_fallthru
              _
          $region32: #{lgcsm_forward.3} parent=27 // pred_fallthru
            _
          %227 = vnop
        $region28: #{lgcsm_forward.3} parent=23 // pred_fallthru
          _
        // Predicated region
        $region63: #{lgcsm_forward.3} parent=23 // pred_check
          %p228 = pneg %p70
        $region64: #{lgcsm_forward.3} parent=23 // pred_check_branch
          %230 = sbr.rel (%p228) target = $region66
        $region65: #{lgcsm_forward.3} parent=23 // pred_region
          %p231 = scmp.lt.s32.totalorder %s17, 1
          %s232 = scalar_select %p231, %s17, 1
          %s233 = smul.addr %s232, 4
          %s234 = smul.addr %s233, 8
          %s235 = scalar_lea.vmem %s1, %s234
        $region66: #{lgcsm_forward.3} parent=23 // pred_fallthru
          _
      $region24: #{lgcsm_forward.3} parent=5 // pred_fallthru
        _
      %p236 = scmp.le.s32.totalorder 1, %s10
      %p237 = scmp.lt.s32.totalorder %s10, 3
      %p238 = pnand %p236, %p237
      %p239 = pneg %p238
      // Predicated region
      $region67: #{lgcsm_forward.3} parent=5 // pred_check
        _
      $region68: #{lgcsm_forward.3} parent=5 // pred_check_branch
        %241 = sbr.rel (%p238) target = $region70
      $region69: #{lgcsm_forward.3} parent=5 // pred_region
        %s242 = ssub.s32 %s10, 1
        %s243 = sand.u32 %s37, 1
        %s244 = sand.u32 %s37, 1
        %s245 = smul.addr %s244, 32
        %s246 = scalar_lea.vmem [#allocation2], %s245
        // Predicated region
        $region71: #{lgcsm_forward.3} parent=69 // pred_check
          %p247 = pneg %p50
        $region72: #{lgcsm_forward.3} parent=69 // pred_check_branch
          %249 = sbr.rel (%p247) target = $region74
        $region73: #{lgcsm_forward.3} parent=69 // pred_region
          _
        $region74: #{lgcsm_forward.3} parent=69 // pred_fallthru
          _
        %s250 = sand.u32 %s37, 1
        %s251 = sand.u32 %s37, 1
        %s252 = smul.addr %s251, 32
        %s253 = scalar_lea.vmem [#allocation2], %s252
        %p254 = pneg %p50
        %p255 = pneg %p47
        %p256 = scmp.lt.s32.totalorder %s19, 1
        %s257 = scalar_select %p256, %s19, 1
        %s258 = smul.addr %s257, 4
        %s259 = smul.addr %s258, 8
        %s260 = scalar_lea.vmem %s1, %s259
        %p261 = pneg %p76
        %p262 = pneg %p73
        %p263 = pneg %p97
        %p264 = pneg %p94
        %p265 = pneg %p118
        %p266 = pneg %p115
        %p267 = pneg %p146
        %p268 = pneg %p143
        %s269 = smul.u32 4, %s20
        %p270 = scmp.lt.s32.totalorder %s19, 1
        %s271 = scalar_select %p270, %s19, 1
        %p272 = scmp.lt.s32.totalorder %s269, 3
        %s273 = scalar_select %p272, %s269, 3
        %s274 = smul.addr %s273, 4
        %s275 = smul.addr %s271, 16
        %s276 = sadd.s32 %s274, %s275
        %s277 = smul.addr %s276, 8
        %s278 = scalar_lea.vmem %s4, %s277
        %s279 = smul.u32 4, %s20
        %p280 = scmp.lt.s32.totalorder %s19, 1
        %s281 = scalar_select %p280, %s19, 1
        %s282 = smul.addr %s281, 4
        %s283 = smul.addr %s282, 8
        %s284 = scalar_lea.vmem %s1, %s283
        %s285 = smul.u32 4, %s20
        %p286 = scmp.lt.s32.totalorder %s19, 1
        %s287 = scalar_select %p286, %s19, 1
        %p288 = scmp.lt.s32.totalorder %s285, 3
        %s289 = scalar_select %p288, %s285, 3
        %s290 = smul.addr %s289, 4
        %s291 = smul.addr %s287, 16
        %s292 = sadd.s32 %s290, %s291
        %s293 = smul.addr %s292, 8
        %s294 = scalar_lea.vmem %s4, %s293
        %s295 = smul.u32 4, %s20
        %v296 = vld [vmem:[%s2] sm:$0xff]
        %v297 = vld [vmem:[%s2 + $0x8] sm:$0xff]
        %v298 = vld [vmem:[%s2 + $0x10] sm:$0xff]
        %v299 = vld [vmem:[%s2 + $0x18] sm:$0xff]
        %v300 = vld [vmem:[%s2 + $0x20] sm:$0xff]
        %v301 = vld [vmem:[%s2 + $0x28] sm:$0xff]
        %v302 = vld [vmem:[%s2 + $0x30] sm:$0xff]
        %v303 = vld [vmem:[%s2 + $0x38] sm:$0xff]
        %vm304 = vcmask 7168
        %v305 = vsel %vm304, %v296, 0.0
        %v306 = vsel %vm304, %v300, 0.0
        %v307 = vadd.f32 %v305, %v306
        %v308 = vsel %vm304, %v297, 0.0
        %v309 = vsel %vm304, %v301, 0.0
        %v310 = vadd.f32 %v308, %v309
        %v311 = vsel %vm304, %v298, 0.0
        %v312 = vsel %vm304, %v302, 0.0
        %v313 = vadd.f32 %v311, %v312
        %v314 = vsel %vm304, %v299, 0.0
        %v315 = vsel %vm304, %v303, 0.0
        %v316 = vadd.f32 %v314, %v315
        %v317 = vmul.f32 %v307, 0.00048828125
        %v318 = vmul.f32 %v310, 0.00048828125
        %v319 = vmul.f32 %v313, 0.00048828125
        %v320 = vmul.f32 %v316, 0.00048828125
        %v321 = vmul.f32 %v317, %v317
        %v322 = vmul.f32 %v318, %v318
        %v323 = vsub.f32 %v319, %v321
        %v324 = vsub.f32 %v320, %v322
        %v325 = vmax.f32 %v323, 0.0
        %v326 = vmax.f32 %v324, 0.0
        %v327 = vld [vmem:[%s3] sm:$0xff]
        %v328 = vld [vmem:[%s3 + $0x8] sm:$0xff]
        %v329 = vld [vmem:[%s3 + $0x10] sm:$0xff]
        %v330 = vld [vmem:[%s3 + $0x18] sm:$0xff]
        %v331 = vadd.f32 %v325, 1e-05
        %v332 = vadd.f32 %v326, 1e-05
        %v333 = vrsqrt.pop %v331
        %v334 = vrsqrt.pop %v332
        %v335 = vmul.f32 %v327, %v333
        %v336 = vmul.f32 %v328, %v334
        %v337 = vmul.f32 %v317, %v335
        %v338 = vmul.f32 %v318, %v336
        %v339 = vsub.f32 %v329, %v337
        %v340 = vsub.f32 %v330, %v338
        %v341 = vld [vmem:[%s284] sm:$0xff]
        %v342 = vld [vmem:[%s284 + $0x8] sm:$0xff]
        %v343 = vld [vmem:[%s284 + $0x10] sm:$0xf]
        %v344 = vld [vmem:[%s284 + $0x18] sm:$0xf]
        %346 = vset.pattern.permute.xlu0 0
        %347 = vperm.xlu0 %346, %v335
        %v348 = vpop.permute.xlu0 %347
        %350 = vset.pattern.permute.xlu0 0
        %351 = vperm.xlu0 %350, %v336
        %v352 = vpop.permute.xlu0 %351
        %vm353 = vcmask 1043456
        %v354 = vrot.slane %v348, 4
        %v355 = vrot.slane %v352, 4
        %v356 = vsel %vm353, %v354, %v355
        %v359 = vmul.f32 %v341, %v356
        %v360 = vmul.f32 %v342, %v356
        %v361 = vmul.f32 %v343, %v355
        %v362 = vmul.f32 %v344, %v355
        %364 = vset.pattern.permute.xlu0 0
        %365 = vperm.xlu0 %364, %v339
        %v366 = vpop.permute.xlu0 %365
        %368 = vset.pattern.permute.xlu0 0
        %369 = vperm.xlu0 %368, %v340
        %v370 = vpop.permute.xlu0 %369
        %v371 = vrot.slane %v366, 4
        %v372 = vrot.slane %v370, 4
        %v373 = vsel %vm353, %v371, %v372
        %v376 = vadd.f32 %v359, %v373
        %v377 = vadd.f32 %v360, %v373
        %v378 = vadd.f32 %v361, %v372
        %v379 = vadd.f32 %v362, %v372
        %v380 = vmax.f32 %v376, 0.0
        %v381 = vmax.f32 %v377, 0.0
        %v382 = vmax.f32 %v378, 0.0
        %v383 = vmax.f32 %v379, 0.0
        %v384 = vld [vmem:[%s246] sm:$0xff]
        %v386 = vunpack.c.l.s4 839922192
        %v387 = vunpack.c.0.s8 %v386
        %v388 = vlaneseq
        %v389 = vshrl.u32 %v388, 7
        %v390 = vsub.s32 %v387, %v389
        %v391 = vrot.slane %v348, %v390
        %v393 = vmul.f32 %v384, %v391
        %v395 = vunpack.c.l.s4 839922192
        %v396 = vunpack.c.0.s8 %v395
        %v397 = vlaneseq
        %v398 = vshrl.u32 %v397, 7
        %v399 = vsub.s32 %v396, %v398
        %v400 = vrot.slane %v366, %v399
        %v402 = vadd.f32 %v393, %v400
        %v403 = vmax.f32 %v402, 0.0
        %v405 = vcombine.high %v403, %v403
        %v411 = vrot.slane %v380, 4
        %v412 = vrot.slane %v381, 4
        %v413 = vrot.slane %v382, 4
        %v414 = vsel %vm353, %v411, %v413
        %v415 = vrot.slane %v383, 4
        %v416 = vsel %vm353, %v412, %v415
        %v421 = vsel %vm353, %v403, %v411
        %v422 = vsel %vm353, %v405, %v412
        %423 = vst [vmem:[%s294] sm:$0xff] %v421
        %424 = vst [vmem:[%s294 + $0x8] sm:$0xff] %v422
        %425 = vst [vmem:[%s294 + $0x10] sm:$0xff] %v414
        %426 = vst [vmem:[%s294 + $0x18] sm:$0xff] %v416
        %s427 = scalar_lea.vmem %s246, 8 [#allocation2]
        %v428 = vld [vmem:[%s427] sm:$0xff]
        %v429 = vmul.f32 %v428, %v391
        %v430 = vadd.f32 %v429, %v400
        %v431 = vmax.f32 %v430, 0.0
        %v433 = vcombine.high %v431, %v431
        %v435 = vsel %vm353, %v431, %v411
        %v436 = vsel %vm353, %v433, %v412
        %s437 = scalar_lea.vmem %s294, 32
        %438 = vst [vmem:[%s437] sm:$0xff] %v435
        %439 = vst [vmem:[%s437 + $0x8] sm:$0xff] %v436
        %440 = vst [vmem:[%s437 + $0x10] sm:$0xff] %v414
        %441 = vst [vmem:[%s437 + $0x18] sm:$0xff] %v416
        %s442 = scalar_lea.vmem %s246, 16 [#allocation2]
        %v443 = vld [vmem:[%s442] sm:$0xff]
        %v444 = vmul.f32 %v443, %v391
        %v445 = vadd.f32 %v444, %v400
        %v446 = vmax.f32 %v445, 0.0
        %v448 = vcombine.high %v446, %v446
        %v450 = vsel %vm353, %v446, %v411
        %v451 = vsel %vm353, %v448, %v412
        %s452 = scalar_lea.vmem %s294, 64
        %453 = vst [vmem:[%s452] sm:$0xff] %v450
        %454 = vst [vmem:[%s452 + $0x8] sm:$0xff] %v451
        %455 = vst [vmem:[%s452 + $0x10] sm:$0xff] %v414
        %456 = vst [vmem:[%s452 + $0x18] sm:$0xff] %v416
        %s457 = scalar_lea.vmem %s246, 24 [#allocation2]
        %v458 = vld [vmem:[%s457] sm:$0xff]
        %v459 = vmul.f32 %v458, %v391
        %v460 = vadd.f32 %v459, %v400
        %v461 = vmax.f32 %v460, 0.0
        %v463 = vcombine.high %v461, %v461
        %v465 = vsel %vm353, %v461, %v411
        %v466 = vsel %vm353, %v463, %v412
        %s467 = scalar_lea.vmem %s294, 96
        %468 = vst [vmem:[%s467] sm:$0xff] %v465
        %469 = vst [vmem:[%s467 + $0x8] sm:$0xff] %v466
        %470 = vst [vmem:[%s467 + $0x10] sm:$0xff] %v414
        %471 = vst [vmem:[%s467 + $0x18] sm:$0xff] %v416
        %s472 = smul.u32 4, %s20
        %p473 = scmp.lt.s32.totalorder %s19, 1
        %s474 = scalar_select %p473, %s19, 1
        %p475 = scmp.lt.s32.totalorder %s472, 3
        %s476 = scalar_select %p475, %s472, 3
        %s477 = smul.addr %s476, 4
        %s478 = smul.addr %s474, 16
        %s479 = sadd.s32 %s477, %s478
        %s480 = smul.addr %s479, 8
        %s481 = scalar_lea.vmem %s4, %s480
        // Predicated region
        $region75: #{lgcsm_forward.3} parent=69 // pred_check
          %p482 = pneg %p143
        $region76: #{lgcsm_forward.3} parent=69 // pred_check_branch
          %484 = sbr.rel (%p482) target = $region78
        $region77: #{lgcsm_forward.3} parent=69 // pred_region
          %s485 = smul.u32 4, %s20
        $region78: #{lgcsm_forward.3} parent=69 // pred_fallthru
          _
      $region70: #{lgcsm_forward.3} parent=5 // pred_fallthru
        _
      %p486 = scmp.le.s32.totalorder 2, %s10
      // Predicated region
      $region79: #{lgcsm_forward.3} parent=5 // pred_check
        %p487 = pneg %p486
      $region80: #{lgcsm_forward.3} parent=5 // pred_check_branch
        %489 = sbr.rel (%p487) target = $region82
      $region81: #{lgcsm_forward.3} parent=5 // pred_region
        %s490 = ssub.s32 %s10, 2
        // Predicated region
        $region83: #{lgcsm_forward.3} parent=81 // pred_check
          %p491 = pneg %p149
        $region84: #{lgcsm_forward.3} parent=81 // pred_check_branch
          %493 = sbr.rel (%p491) target = $region86
        $region85: #{lgcsm_forward.3} parent=81 // pred_region
          %s494 = smul.u32 4, %s22
          %p495 = scmp.lt.s32.totalorder %s21, 1
          %s496 = scalar_select %p495, %s21, 1
          %p497 = scmp.lt.s32.totalorder %s494, 3
          %s498 = scalar_select %p497, %s494, 3
          %s499 = smul.addr %s498, 4
          %s500 = smul.addr %s496, 16
          %s501 = sadd.s32 %s499, %s500
          %s502 = smul.addr %s501, 8
          %s503 = scalar_lea.vmem %s4, %s502
        $region86: #{lgcsm_forward.3} parent=81 // pred_fallthru
          _
      $region82: #{lgcsm_forward.3} parent=5 // pred_fallthru
        _
    $region6: #{lgcsm_forward.3} parent=1 // loop_footer
      %s14 = sadd.s32 1, %s10
    $region7: #{lgcsm_forward.3} parent=1 // loop_footer_branch
      %9 = sbr.rel target = $region3
    $region8: #{lgcsm_forward.3} parent=1 // loop_exit
      _

// kernel: lgcsm_forward.2
$region0: #{lgcsm_forward.2}
  #allocation0 [shape = 'u32[]', space=smem, size = 0x4, offset = 0x4, fixed_abs, tag = 'smem constant byte address 0x4 - core index']
  #allocation1 [shape = 'u32[144,128]{1,0:T(1,128)}', space=vmem, size = 0x12000, scoped, tag = 'internal scratch']
  %s0 = inlined_call_operand.vmem [shape: f32[2,4,4,4,256], index: 0, kind: input, shape index: {}]
  %s1 = inlined_call_operand.vmem [shape: f32[3,9,4,4], index: 1, kind: input, shape index: {}]
  %s2 = inlined_call_operand.vmem [shape: f32[9,1,256], index: 2, kind: input, shape index: {}]
  %s3 = inlined_call_operand.vmem [shape: f32[2,12,256], index: 3, kind: output, shape index: {0}]
  %s4 = inlined_call_operand.vmem [shape: f32[2,32,1], index: 4, kind: output, shape index: {1}]
  %5 = xla_tuple %s3, %s4
  %s6 = sld [smem:[#allocation0]]
  $region91: #{lgcsm_forward.2} parent=0
    _
  %s8 = ssub.s32 1, %s6
  %s9 = scalar_select 0, %s8, %s6
  $region1: #{lgcsm_forward.2} parent=0
    #allocation2 [shape = 'u8[98304]{0}', space=vmem, size = 0x18000, scoped, tag = 'input window, operand 0']
    loop: start=0, step=1, limit=4
    $region2: #{lgcsm_forward.2} parent=1 // loop_pre_header
      _
    $region3: #{lgcsm_forward.2} parent=1 // loop_header
      %s11 = sphi 0, %s15
      %p12 = scmp.ge.s32.totalorder %s11, 4
      %s21 = sphi 0, %s23
      %s24 = sphi 0, %s21
      %s25 = sphi 0, %s24
      %s41 = sphi 0, %s25
      %s45 = sphi 0, %s45
      %s47 = sphi 0, %s45
      %s48 = sphi 0, %s47
      %s62 = sphi 0, %s48
      %s66 = sphi 0, %s66
      %s68 = sphi 0, %s66
      %s69 = sphi 0, %s68
      %s83 = sphi 0, %s69
      %s89 = sphi 0, %s91
      %s92 = sphi 0, %s89
      %s93 = sphi 0, %s92
      %s109 = sphi 0, %s93
      %s115 = sphi 0, %s117
      %s118 = sphi 0, %s115
      %s119 = sphi 0, %s118
      %s135 = sphi 0, %s119
    $region4: #{lgcsm_forward.2} parent=1 // loop_header_branch
      %14 = sbr.rel (%p12) target = $region8
    $region5: #{lgcsm_forward.2} parent=1 // loop_body
      %s16 = ssub.s32 %s11, 1
      %s17 = ssub.s32 %s11, 2
      %s18 = sadd.s32 %s11, 1
      %s19 = ssub.s32 %s11, %s18
      %p20 = scmp.eq.s32.totalorder %s19, 0
      %s22 = sadd.s32 %s21, 1
      %s23 = scalar_select %p20, %s21, %s22
      %p26 = pneg %p20
      %p27 = scmp.eq.s32.totalorder %s11, 1
      %p28 = por %p26, %p27
      %p29 = scmp.ne.s32.totalorder %s21, %s24
      %p30 = scmp.eq.s32.totalorder %s11, 0
      %p31 = por %p29, %p30
      %p32 = scmp.ne.s32.totalorder %s21, %s24
      %p33 = scmp.eq.s32.totalorder %s16, 1
      %p34 = por %p32, %p33
      %p35 = scmp.ne.s32.totalorder %s24, %s25
      %p36 = scmp.eq.s32.totalorder %s16, 0
      %p37 = por %p35, %p36
      %p38 = scmp.ne.s32.totalorder %s24, %s25
      %p39 = scmp.eq.s32.totalorder %s17, 1
      %p40 = por %p38, %p39
      %p42 = scmp.ne.s32.totalorder %s25, %s41
      %p43 = scmp.eq.s32.totalorder %s17, 0
      %p44 = por %p42, %p43
      %s46 = sadd.s32 %s45, 1
      %p49 = scmp.eq.s32.totalorder %s11, 1
      %p50 = scmp.ne.s32.totalorder %s45, %s47
      %p51 = scmp.eq.s32.totalorder %s11, 0
      %p52 = por %p50, %p51
      %p53 = scmp.ne.s32.totalorder %s45, %s47
      %p54 = scmp.eq.s32.totalorder %s16, 1
      %p55 = por %p53, %p54
      %p56 = scmp.ne.s32.totalorder %s47, %s48
      %p57 = scmp.eq.s32.totalorder %s16, 0
      %p58 = por %p56, %p57
      %p59 = scmp.ne.s32.totalorder %s47, %s48
      %p60 = scmp.eq.s32.totalorder %s17, 1
      %p61 = por %p59, %p60
      %p63 = scmp.ne.s32.totalorder %s48, %s62
      %p64 = scmp.eq.s32.totalorder %s17, 0
      %p65 = por %p63, %p64
      %s67 = sadd.s32 %s66, 1
      %p70 = scmp.eq.s32.totalorder %s11, 1
      %p71 = scmp.ne.s32.totalorder %s66, %s68
      %p72 = scmp.eq.s32.totalorder %s11, 0
      %p73 = por %p71, %p72
      %p74 = scmp.ne.s32.totalorder %s66, %s68
      %p75 = scmp.eq.s32.totalorder %s16, 1
      %p76 = por %p74, %p75
      %p77 = scmp.ne.s32.totalorder %s68, %s69
      %p78 = scmp.eq.s32.totalorder %s16, 0
      %p79 = por %p77, %p78
      %p80 = scmp.ne.s32.totalorder %s68, %s69
      %p81 = scmp.eq.s32.totalorder %s17, 1
      %p82 = por %p80, %p81
      %p84 = scmp.ne.s32.totalorder %s69, %s83
      %p85 = scmp.eq.s32.totalorder %s17, 0
      %p86 = por %p84, %p85
      %s87 = ssub.s32 %s11, %s18
      %p88 = scmp.eq.s32.totalorder %s87, 0
      %s90 = sadd.s32 %s89, 1
      %s91 = scalar_select %p88, %s89, %s90
      %p94 = pneg %p88
      %p95 = scmp.eq.s32.totalorder %s11, 1
      %p96 = por %p94, %p95
      %p97 = scmp.ne.s32.totalorder %s89, %s92
      %p98 = scmp.eq.s32.totalorder %s11, 0
      %p99 = por %p97, %p98
      %p100 = scmp.ne.s32.totalorder %s89, %s92
      %p101 = scmp.eq.s32.totalorder %s16, 1
      %p102 = por %p100, %p101
      %p103 = scmp.ne.s32.totalorder %s92, %s93
      %p104 = scmp.eq.s32.totalorder %s16, 0
      %p105 = por %p103, %p104
      %p106 = scmp.ne.s32.totalorder %s92, %s93
      %p107 = scmp.eq.s32.totalorder %s17, 1
      %p108 = por %p106, %p107
      %p110 = scmp.ne.s32.totalorder %s93, %s109
      %p111 = scmp.eq.s32.totalorder %s17, 0
      %p112 = por %p110, %p111
      %s113 = ssub.s32 %s11, %s18
      %p114 = scmp.eq.s32.totalorder %s113, 0
      %s116 = sadd.s32 %s115, 1
      %s117 = scalar_select %p114, %s115, %s116
      %p120 = pneg %p114
      %p121 = scmp.eq.s32.totalorder %s11, 1
      %p122 = por %p120, %p121
      %p123 = scmp.ne.s32.totalorder %s115, %s118
      %p124 = scmp.eq.s32.totalorder %s11, 0
      %p125 = por %p123, %p124
      %p126 = scmp.ne.s32.totalorder %s115, %s118
      %p127 = scmp.eq.s32.totalorder %s16, 1
      %p128 = por %p126, %p127
      %p129 = scmp.ne.s32.totalorder %s118, %s119
      %p130 = scmp.eq.s32.totalorder %s16, 0
      %p131 = por %p129, %p130
      %p132 = scmp.ne.s32.totalorder %s118, %s119
      %p133 = scmp.eq.s32.totalorder %s17, 1
      %p134 = por %p132, %p133
      %p136 = scmp.ne.s32.totalorder %s119, %s135
      %p137 = scmp.eq.s32.totalorder %s17, 0
      %p138 = por %p136, %p137
      %p139 = scmp.le.s32.totalorder 1, %s11
      %p140 = scmp.lt.s32.totalorder %s11, 3
      %p141 = pnand %p139, %p140
      %p142 = pneg %p141
      // Predicated region
      $region9: #{lgcsm_forward.2} parent=5 // pred_check
        _
      $region10: #{lgcsm_forward.2} parent=5 // pred_check_branch
        %144 = sbr.rel (%p141) target = $region12
      $region11: #{lgcsm_forward.2} parent=5 // pred_region
        %s145 = ssub.s32 %s11, 1
        // Predicated region
        $region13: #{lgcsm_forward.2} parent=11 // pred_check
          %p146 = pneg %p58
        $region14: #{lgcsm_forward.2} parent=11 // pred_check_branch
          %148 = sbr.rel (%p146) target = $region16
        $region15: #{lgcsm_forward.2} parent=11 // pred_region
          _
        $region16: #{lgcsm_forward.2} parent=11 // pred_fallthru
          _
        // Predicated region
        $region17: #{lgcsm_forward.2} parent=11 // pred_check
          %p149 = pneg %p79
        $region18: #{lgcsm_forward.2} parent=11 // pred_check_branch
          %151 = sbr.rel (%p149) target = $region20
        $region19: #{lgcsm_forward.2} parent=11 // pred_region
          _
        $region20: #{lgcsm_forward.2} parent=11 // pred_fallthru
          _
      $region12: #{lgcsm_forward.2} parent=5 // pred_fallthru
        _
      %p152 = scmp.lt.s32.totalorder %s11, 2
      // Predicated region
      $region21: #{lgcsm_forward.2} parent=5 // pred_check
        %p153 = pneg %p152
      $region22: #{lgcsm_forward.2} parent=5 // pred_check_branch
        %155 = sbr.rel (%p153) target = $region24
      $region23: #{lgcsm_forward.2} parent=5 // pred_region
        // Predicated region
        $region25: #{lgcsm_forward.2} parent=23 // pred_check
          %p156 = pneg %p31
        $region26: #{lgcsm_forward.2} parent=23 // pred_check_branch
          %158 = sbr.rel (%p156) target = $region28
        $region27: #{lgcsm_forward.2} parent=23 // pred_region
          %s159 = sand.u32 %s21, 1
          %s160 = sand.u32 %s21, 1
          %s161 = smul.addr %s160, 96
          %s162 = scalar_lea.vmem [#allocation2], %s161
          %s163 = smul.addr %s11, 32
          %s164 = smul.addr %s163, 4
          %s165 = scalar_lea.vmem %s0, %s164
          // Predicated region
          $region29: #{lgcsm_forward.2} parent=27 // pred_check
            _
          $region30: #{lgcsm_forward.2} parent=27 // pred_check_branch
            %167 = sbr.rel (0) target = $region32
          $region31: #{lgcsm_forward.2} parent=27 // pred_region
            // Predicated region
            $region33: #{lgcsm_forward.2} parent=31 // pred_check
              _
            $region34: #{lgcsm_forward.2} parent=31 // pred_check_branch
              %169 = sbr.rel (0) target = $region36
            $region35: #{lgcsm_forward.2} parent=31 // pred_region
              // Predicated region
              $region48: #{lgcsm_forward.2} parent=35 // pred_check
                _
              $region49: #{lgcsm_forward.2} parent=35 // pred_check_branch
                %206 = sbr.rel (0) target = $region51
              $region50: #{lgcsm_forward.2} parent=35 // pred_region
                loop: start=0, step=1, limit=1
                $region52: #{lgcsm_forward.2} parent=50 // loop_pre_header
                  _
                $region53: #{lgcsm_forward.2} parent=50 // loop_header
                  %s208 = sphi 0, %s212
                  %p209 = scmp.ge.s32.totalorder %s208, 1
                  %s213 = sphi %s165, %s165
                  %s214 = sphi %s162, %s162
                $region54: #{lgcsm_forward.2} parent=50 // loop_header_branch
                  %211 = sbr.rel (%p209) target = $region58
                $region55: #{lgcsm_forward.2} parent=50 // loop_body
                  %v215 = vld [vmem:[%s213] sm:$0xff]
                  %216 = vst [vmem:[%s214] sm:$0xff] %v215
                  %v217 = vld [vmem:[%s213 + $0x8] sm:$0xff]
                  %218 = vst [vmem:[%s214 + $0x8] sm:$0xff] %v217
                  %v219 = vld [vmem:[%s213 + $0x10] sm:$0xff]
                  %220 = vst [vmem:[%s214 + $0x10] sm:$0xff] %v219
                  %v221 = vld [vmem:[%s213 + $0x20] sm:$0xff]
                  %222 = vst [vmem:[%s214 + $0x18] sm:$0xff] %v221
                  %v223 = vld [vmem:[%s213 + $0x28] sm:$0xff]
                  %224 = vst [vmem:[%s214 + $0x20] sm:$0xff] %v223
                  %v225 = vld [vmem:[%s213 + $0x30] sm:$0xff]
                  %226 = vst [vmem:[%s214 + $0x28] sm:$0xff] %v225
                  %v227 = vld [vmem:[%s213 + $0x40] sm:$0xff]
                  %228 = vst [vmem:[%s214 + $0x30] sm:$0xff] %v227
                  %v229 = vld [vmem:[%s213 + $0x48] sm:$0xff]
                  %230 = vst [vmem:[%s214 + $0x38] sm:$0xff] %v229
                  %v231 = vld [vmem:[%s213 + $0x50] sm:$0xff]
                  %232 = vst [vmem:[%s214 + $0x40] sm:$0xff] %v231
                  %v233 = vld [vmem:[%s213 + $0x60] sm:$0xff]
                  %234 = vst [vmem:[%s214 + $0x48] sm:$0xff] %v233
                  %v235 = vld [vmem:[%s213 + $0x68] sm:$0xff]
                  %236 = vst [vmem:[%s214 + $0x50] sm:$0xff] %v235
                  %v237 = vld [vmem:[%s213 + $0x70] sm:$0xff]
                  %238 = vst [vmem:[%s214 + $0x58] sm:$0xff] %v237
                $region56: #{lgcsm_forward.2} parent=50 // loop_footer
                  %s212 = sadd.s32 1, %s208
                $region57: #{lgcsm_forward.2} parent=50 // loop_footer_branch
                  %207 = sbr.rel target = $region53
                $region58: #{lgcsm_forward.2} parent=50 // loop_exit
                  _
              $region51: #{lgcsm_forward.2} parent=35 // pred_fallthru
                _
              // Predicated region
              $region59: #{lgcsm_forward.2} parent=35 // pred_check
                _
              $region60: #{lgcsm_forward.2} parent=35 // pred_check_branch
                %240 = sbr.rel target = $region62
              $region61: #{lgcsm_forward.2} parent=35 // pred_region
                _
              $region62: #{lgcsm_forward.2} parent=35 // pred_fallthru
                _
            $region36: #{lgcsm_forward.2} parent=31 // pred_fallthru
              _
            // Predicated region
            $region37: #{lgcsm_forward.2} parent=31 // pred_check
              _
            $region38: #{lgcsm_forward.2} parent=31 // pred_check_branch
              %171 = sbr.rel target = $region40
            $region39: #{lgcsm_forward.2} parent=31 // pred_region
              loop: start=0, step=1, limit=1
              $region41: #{lgcsm_forward.2} parent=39 // loop_pre_header
                _
              $region42: #{lgcsm_forward.2} parent=39 // loop_header
                %s174 = sphi 0, %s178
                %p175 = scmp.ge.s32.totalorder %s174, 1
                %s179 = sphi %s165, %s165
                %s180 = sphi %s162, %s162
              $region43: #{lgcsm_forward.2} parent=39 // loop_header_branch
                %177 = sbr.rel (%p175) target = $region47
              $region44: #{lgcsm_forward.2} parent=39 // loop_body
                %v181 = vld [vmem:[%s179] sm:$0xff]
                %182 = vst [vmem:[%s180] sm:$0xff] %v181
                %v183 = vld [vmem:[%s179 + $0x8] sm:$0xff]
                %184 = vst [vmem:[%s180 + $0x8] sm:$0xff] %v183
                %v185 = vld [vmem:[%s179 + $0x10] sm:$0xff]
                %186 = vst [vmem:[%s180 + $0x10] sm:$0xff] %v185
                %v187 = vld [vmem:[%s179 + $0x20] sm:$0xff]
                %188 = vst [vmem:[%s180 + $0x18] sm:$0xff] %v187
                %v189 = vld [vmem:[%s179 + $0x28] sm:$0xff]
                %190 = vst [vmem:[%s180 + $0x20] sm:$0xff] %v189
                %v191 = vld [vmem:[%s179 + $0x30] sm:$0xff]
                %192 = vst [vmem:[%s180 + $0x28] sm:$0xff] %v191
                %v193 = vld [vmem:[%s179 + $0x40] sm:$0xff]
                %194 = vst [vmem:[%s180 + $0x30] sm:$0xff] %v193
                %v195 = vld [vmem:[%s179 + $0x48] sm:$0xff]
                %196 = vst [vmem:[%s180 + $0x38] sm:$0xff] %v195
                %v197 = vld [vmem:[%s179 + $0x50] sm:$0xff]
                %198 = vst [vmem:[%s180 + $0x40] sm:$0xff] %v197
                %v199 = vld [vmem:[%s179 + $0x60] sm:$0xff]
                %200 = vst [vmem:[%s180 + $0x48] sm:$0xff] %v199
                %v201 = vld [vmem:[%s179 + $0x68] sm:$0xff]
                %202 = vst [vmem:[%s180 + $0x50] sm:$0xff] %v201
                %v203 = vld [vmem:[%s179 + $0x70] sm:$0xff]
                %204 = vst [vmem:[%s180 + $0x58] sm:$0xff] %v203
              $region45: #{lgcsm_forward.2} parent=39 // loop_footer
                %s178 = sadd.s32 1, %s174
              $region46: #{lgcsm_forward.2} parent=39 // loop_footer_branch
                %173 = sbr.rel target = $region42
              $region47: #{lgcsm_forward.2} parent=39 // loop_exit
                _
            $region40: #{lgcsm_forward.2} parent=31 // pred_fallthru
              _
          $region32: #{lgcsm_forward.2} parent=27 // pred_fallthru
            _
          %241 = vnop
        $region28: #{lgcsm_forward.2} parent=23 // pred_fallthru
          _
      $region24: #{lgcsm_forward.2} parent=5 // pred_fallthru
        _
      %p242 = scmp.le.s32.totalorder 1, %s11
      %p243 = scmp.lt.s32.totalorder %s11, 3
      %p244 = pnand %p242, %p243
      %p245 = pneg %p244
      // Predicated region
      $region63: #{lgcsm_forward.2} parent=5 // pred_check
        _
      $region64: #{lgcsm_forward.2} parent=5 // pred_check_branch
        %247 = sbr.rel (%p244) target = $region66
      $region65: #{lgcsm_forward.2} parent=5 // pred_region
        %s248 = ssub.s32 %s11, 1
        %s249 = sand.u32 %s24, 1
        %s250 = sand.u32 %s24, 1
        %s251 = smul.addr %s250, 96
        %s252 = scalar_lea.vmem [#allocation2], %s251
        // Predicated region
        $region67: #{lgcsm_forward.2} parent=65 // pred_check
          %p253 = pneg %p37
        $region68: #{lgcsm_forward.2} parent=65 // pred_check_branch
          %255 = sbr.rel (%p253) target = $region70
        $region69: #{lgcsm_forward.2} parent=65 // pred_region
          _
        $region70: #{lgcsm_forward.2} parent=65 // pred_fallthru
          _
        %s256 = sand.u32 %s24, 1
        %s257 = sand.u32 %s24, 1
        %s258 = smul.addr %s257, 96
        %s259 = scalar_lea.vmem [#allocation2], %s258
        %p260 = pneg %p37
        %p261 = pneg %p34
        %p262 = pneg %p58
        %p263 = pneg %p55
        %p264 = pneg %p79
        %p265 = pneg %p76
        %p266 = pneg %p105
        %p267 = pneg %p102
        %p268 = scmp.lt.s32.totalorder %s16, 1
        %s269 = scalar_select %p268, %s16, 1
        %s270 = smul.addr %s269, 4
        %s271 = smul.addr %s270, 8
        %s272 = scalar_lea.vmem %s3, %s271
        %p273 = pneg %p131
        %p274 = pneg %p128
        %p275 = scmp.lt.s32.totalorder %s16, 1
        %s276 = scalar_select %p275, %s16, 1
        %s277 = smul.addr %s276, 4
        %s278 = smul.addr %s277, 8
        %s279 = scalar_lea.vmem %s4, %s278
        %p280 = scmp.lt.s32.totalorder %s16, 1
        %s281 = scalar_select %p280, %s16, 1
        %s282 = smul.addr %s281, 4
        %s283 = smul.addr %s282, 8
        %s284 = scalar_lea.vmem %s3, %s283
        %p285 = scmp.lt.s32.totalorder %s16, 1
        %s286 = scalar_select %p285, %s16, 1
        %s287 = smul.addr %s286, 4
        %s288 = smul.addr %s287, 8
        %s289 = scalar_lea.vmem %s4, %s288
        %v290 = vld [vmem:[%s252] sm:$0xff]
        %v291 = vld [vmem:[%s252 + $0x18] sm:$0xff]
        %v292 = vld [vmem:[%s252 + $0x30] sm:$0xff]
        %v293 = vld [vmem:[%s252 + $0x48] sm:$0xff]
        %s294 = scalar_lea.vmem %s252, 8 [#allocation2]
        %v295 = vld [vmem:[%s294] sm:$0xff]
        %v296 = vld [vmem:[%s294 + $0x18] sm:$0xff]
        %v297 = vld [vmem:[%s294 + $0x30] sm:$0xff]
        %v298 = vld [vmem:[%s294 + $0x48] sm:$0xff]
        %s299 = scalar_lea.vmem %s252, 16 [#allocation2]
        %v300 = vld [vmem:[%s299] sm:$0xff]
        %v301 = vld [vmem:[%s299 + $0x18] sm:$0xff]
        %v302 = vld [vmem:[%s299 + $0x30] sm:$0xff]
        %v303 = vld [vmem:[%s299 + $0x48] sm:$0xff]
        %v308 = vcombine.high %v295, %v295
        %v309 = vcombine.high %v296, %v296
        %v310 = vcombine.high %v297, %v297
        %v311 = vcombine.high %v298, %v298
        %vm316 = vcmask 1043456
        %v317 = vsel %vm316, %v295, 0.0
        %v318 = vsel %vm316, %v296, 0.0
        %v319 = vadd.f32 %v317, %v318
        %v320 = vsel %vm316, %v297, 0.0
        %v321 = vadd.f32 %v319, %v320
        %v322 = vsel %vm316, %v298, 0.0
        %v323 = vadd.f32 %v321, %v322
        %v324 = vsel %vm316, %v308, 0.0
        %v325 = vsel %vm316, %v309, 0.0
        %v326 = vadd.f32 %v324, %v325
        %v327 = vsel %vm316, %v310, 0.0
        %v328 = vadd.f32 %v326, %v327
        %v329 = vsel %vm316, %v311, 0.0
        %v330 = vadd.f32 %v328, %v329
        %v331 = vmul.f32 %v323, 0.25
        %v332 = vmul.f32 %v330, 0.25
        %v337 = vcombine.high %v300, %v300
        %v338 = vcombine.high %v301, %v301
        %v339 = vcombine.high %v302, %v302
        %v340 = vcombine.high %v303, %v303
        %v345 = vsel %vm316, %v300, 0.0
        %v346 = vsel %vm316, %v301, 0.0
        %v347 = vadd.f32 %v345, %v346
        %v348 = vsel %vm316, %v302, 0.0
        %v349 = vadd.f32 %v347, %v348
        %v350 = vsel %vm316, %v303, 0.0
        %v351 = vadd.f32 %v349, %v350
        %v352 = vsel %vm316, %v337, 0.0
        %v353 = vsel %vm316, %v338, 0.0
        %v354 = vadd.f32 %v352, %v353
        %v355 = vsel %vm316, %v339, 0.0
        %v356 = vadd.f32 %v354, %v355
        %v357 = vsel %vm316, %v340, 0.0
        %v358 = vadd.f32 %v356, %v357
        %v359 = vmul.f32 %v351, 0.25
        %v360 = vmul.f32 %v358, 0.25
        %v365 = vcombine.high %v290, %v290
        %v366 = vcombine.high %v291, %v291
        %v367 = vcombine.high %v292, %v292
        %v368 = vcombine.high %v293, %v293
        %v373 = vsel %vm316, %v290, 0.0
        %v374 = vsel %vm316, %v291, 0.0
        %v375 = vadd.f32 %v373, %v374
        %v376 = vsel %vm316, %v292, 0.0
        %v377 = vadd.f32 %v375, %v376
        %v378 = vsel %vm316, %v293, 0.0
        %v379 = vadd.f32 %v377, %v378
        %v380 = vsel %vm316, %v365, 0.0
        %v381 = vsel %vm316, %v366, 0.0
        %v382 = vadd.f32 %v380, %v381
        %v383 = vsel %vm316, %v367, 0.0
        %v384 = vadd.f32 %v382, %v383
        %v385 = vsel %vm316, %v368, 0.0
        %v386 = vadd.f32 %v384, %v385
        %v387 = vmul.f32 %v290, %v290
        %v388 = vmul.f32 %v291, %v291
        %v389 = vmul.f32 %v292, %v292
        %v390 = vmul.f32 %v293, %v293
        %v395 = vcombine.high %v387, %v387
        %v396 = vcombine.high %v388, %v388
        %v397 = vcombine.high %v389, %v389
        %v398 = vcombine.high %v390, %v390
        %v403 = vsel %vm316, %v387, 0.0
        %v404 = vsel %vm316, %v388, 0.0
        %v405 = vadd.f32 %v403, %v404
        %v406 = vsel %vm316, %v389, 0.0
        %v407 = vadd.f32 %v405, %v406
        %v408 = vsel %vm316, %v390, 0.0
        %v409 = vadd.f32 %v407, %v408
        %v410 = vsel %vm316, %v395, 0.0
        %v411 = vsel %vm316, %v396, 0.0
        %v412 = vadd.f32 %v410, %v411
        %v413 = vsel %vm316, %v397, 0.0
        %v414 = vadd.f32 %v412, %v413
        %v415 = vsel %vm316, %v398, 0.0
        %v416 = vadd.f32 %v414, %v415
        %417 = vrot.lane.b32.xlu0 %v331, 17
        %v418 = vpop.permute.xlu0 %417
        %419 = vrot.lane.b32.xlu0 %v332, 17
        %v420 = vpop.permute.xlu0 %419
        %v421 = vlaneseq
        %v422 = vand.u32 %v421, 127
        %vm423 = vcmp.lt.s32.totalorder %v422, 17
        %v424 = vsel %vm423, %v418, %v420
        %v425 = vsel %vm423, %v420, %v418
        %v426 = vld [vmem:[%s2] sm:$0x3]
        %v428 = vlaneseq
        %v429 = vshrl.u32 %v428, 7
        %v430 = vsub.s32 0, %v429
        %v431 = vrot.slane %v426, %v430
        %v432 = vlaneseq
        %v433 = vshrl.u32 %v432, 7
        %v434 = vsub.s32 1, %v433
        %v435 = vrot.slane %v426, %v434
        %v438 = vmul.f32 %v425, %v431
        %v439 = vmul.f32 %v424, %v435
        %v440 = vld [vmem:[%s1] sm:$0xf]
        %441 = vrot.lane.b32.xlu0 %v331, 16
        %v442 = vpop.permute.xlu0 %441
        %443 = vrot.lane.b32.xlu0 %v332, 16
        %v444 = vpop.permute.xlu0 %443
        %vm445 = vcmp.lt.s32.totalorder %v422, 16
        %v446 = vsel %vm445, %v442, %v444
        %v447 = vsel %vm445, %v444, %v442
        %s448 = scalar_lea.vmem %s2, 2
        %v449 = vld [vmem:[%s448] sm:$0x3]
        %v451 = vlaneseq
        %v452 = vshrl.u32 %v451, 7
        %v453 = vsub.s32 0, %v452
        %v454 = vrot.slane %v449, %v453
        %v455 = vlaneseq
        %v456 = vshrl.u32 %v455, 7
        %v457 = vsub.s32 1, %v456
        %v458 = vrot.slane %v449, %v457
        %v461 = vmul.f32 %v447, %v454
        %v462 = vmul.f32 %v446, %v458
        %s463 = scalar_lea.vmem %s1, 4
        %v464 = vld [vmem:[%s463] sm:$0xf]
        %vm465 = vcmask 31744
        %v467 = vsel %vm465, %v464, 0
        %v470 = vsel %vm316, %v461, 0
        %v473 = vsel %vm316, %v462, 0
        %475 = vmatprep.subr.mxu0 %v473
        %476 = vmatpush1.msra.mxu0 %v470
        %477 = vmatprep.subr.mxu0 0.0
        %478 = vmatpush1.msra.mxu0 0.0
        %479 = vmatprep.subr.mxu0 0.0
        %480 = vmatpush1.msra.mxu0 0.0
        %481 = vmatprep.subr.mxu0 0.0
        %482 = vmatpush1.msra.mxu0 0.0
        %483 = vmatprep.subr.mxu0 0.0
        %484 = vmatpush1.msra.mxu0 0.0
        %485 = vmatprep.subr.mxu0 0.0
        %486 = vmatpush1.msra.mxu0 0.0
        %487 = vmatprep.subr.mxu0 0.0
        %488 = vmatpush1.msra.mxu0 0.0
        %489 = vmatprep.subr.mxu0 0.0
        %490 = vmatpush1.msra.mxu0 0.0
        %491 = vmatprep.subr.mxu0 0.0
        %492 = vmatpush1.msra.mxu0 0.0
        %493 = vmatprep.subr.mxu0 0.0
        %494 = vmatpush1.msra.mxu0 0.0
        %495 = vmatprep.subr.mxu0 0.0
        %496 = vmatpush1.msra.mxu0 0.0
        %497 = vmatprep.subr.mxu0 0.0
        %498 = vmatpush1.msra.mxu0 0.0
        %499 = vmatprep.subr.mxu0 0.0
        %500 = vmatpush1.msra.mxu0 0.0
        %501 = vmatprep.subr.mxu0 0.0
        %502 = vmatpush1.msra.mxu0 0.0
        %503 = vmatprep.subr.mxu0 0.0
        %504 = vmatpush1.msra.mxu0 0.0
        %505 = vmatprep.subr.mxu0 0.0
        %506 = vmatpush1.msra.mxu0 0.0
        %507 = vmatprep.subr.mxu0 0.0
        %508 = vmatpush1.msra.mxu0 0.0
        %509 = vmatprep.subr.mxu0 0.0
        %510 = vmatpush1.msra.mxu0 0.0
        %511 = vmatprep.subr.mxu0 0.0
        %512 = vmatpush1.msra.mxu0 0.0
        %513 = vmatprep.subr.mxu0 0.0
        %514 = vmatpush1.msra.mxu0 0.0
        %515 = vmatprep.subr.mxu0 0.0
        %516 = vmatpush1.msra.mxu0 0.0
        %517 = vmatprep.subr.mxu0 0.0
        %518 = vmatpush1.msra.mxu0 0.0
        %519 = vmatprep.subr.mxu0 0.0
        %520 = vmatpush1.msra.mxu0 0.0
        %521 = vmatprep.subr.mxu0 0.0
        %522 = vmatpush1.msra.mxu0 0.0
        %523 = vmatprep.subr.mxu0 0.0
        %524 = vmatpush1.msra.mxu0 0.0
        %525 = vmatprep.subr.mxu0 0.0
        %526 = vmatpush1.msra.mxu0 0.0
        %527 = vmatprep.subr.mxu0 0.0
        %528 = vmatpush1.msra.mxu0 0.0
        %529 = vmatprep.subr.mxu0 0.0
        %530 = vmatpush1.msra.mxu0 0.0
        %531 = vmatprep.subr.mxu0 0.0
        %532 = vmatpush1.msra.mxu0 0.0
        %533 = vmatprep.subr.mxu0 0.0
        %534 = vmatpush1.msra.mxu0 0.0
        %535 = vmatprep.subr.mxu0 0.0
        %536 = vmatpush1.msra.mxu0 0.0
        %537 = vmatprep.subr.mxu0 0.0
        %538 = vmatpush1.msra.mxu0 0.0
        %539 = vmatprep.mubr.f32.mxu0 0.0
        %540 = vmatmul.mubr.f32.gmra.mrb[0].mxu0 %v467
        %v541 = vpop.f32.mrb[0].mxu0
        %v542 = vadd.f32 0.0, %v541
        %v543 = vpop.f32.mrb[0].mxu0
        %v544 = vadd.f32 0.0, %v543
        %545 = vdwg.mxu0
        %v547 = vsel %vm465, %v440, 0
        %v550 = vsel %vm316, %v438, 0
        %v553 = vsel %vm316, %v439, 0
        %555 = vmatprep.subr.mxu0 %v553
        %556 = vmatpush1.msra.mxu0 %v550
        %557 = vmatprep.subr.mxu0 0.0
        %558 = vmatpush1.msra.mxu0 0.0
        %559 = vmatprep.subr.mxu0 0.0
        %560 = vmatpush1.msra.mxu0 0.0
        %561 = vmatprep.subr.mxu0 0.0
        %562 = vmatpush1.msra.mxu0 0.0
        %563 = vmatprep.subr.mxu0 0.0
        %564 = vmatpush1.msra.mxu0 0.0
        %565 = vmatprep.subr.mxu0 0.0
        %566 = vmatpush1.msra.mxu0 0.0
        %567 = vmatprep.subr.mxu0 0.0
        %568 = vmatpush1.msra.mxu0 0.0
        %569 = vmatprep.subr.mxu0 0.0
        %570 = vmatpush1.msra.mxu0 0.0
        %571 = vmatprep.subr.mxu0 0.0
        %572 = vmatpush1.msra.mxu0 0.0
        %573 = vmatprep.subr.mxu0 0.0
        %574 = vmatpush1.msra.mxu0 0.0
        %575 = vmatprep.subr.mxu0 0.0
        %576 = vmatpush1.msra.mxu0 0.0
        %577 = vmatprep.subr.mxu0 0.0
        %578 = vmatpush1.msra.mxu0 0.0
        %579 = vmatprep.subr.mxu0 0.0
        %580 = vmatpush1.msra.mxu0 0.0
        %581 = vmatprep.subr.mxu0 0.0
        %582 = vmatpush1.msra.mxu0 0.0
        %583 = vmatprep.subr.mxu0 0.0
        %584 = vmatpush1.msra.mxu0 0.0
        %585 = vmatprep.subr.mxu0 0.0
        %586 = vmatpush1.msra.mxu0 0.0
        %587 = vmatprep.subr.mxu0 0.0
        %588 = vmatpush1.msra.mxu0 0.0
        %589 = vmatprep.subr.mxu0 0.0
        %590 = vmatpush1.msra.mxu0 0.0
        %591 = vmatprep.subr.mxu0 0.0
        %592 = vmatpush1.msra.mxu0 0.0
        %593 = vmatprep.subr.mxu0 0.0
        %594 = vmatpush1.msra.mxu0 0.0
        %595 = vmatprep.subr.mxu0 0.0
        %596 = vmatpush1.msra.mxu0 0.0
        %597 = vmatprep.subr.mxu0 0.0
        %598 = vmatpush1.msra.mxu0 0.0
        %599 = vmatprep.subr.mxu0 0.0
        %600 = vmatpush1.msra.mxu0 0.0
        %601 = vmatprep.subr.mxu0 0.0
        %602 = vmatpush1.msra.mxu0 0.0
        %603 = vmatprep.subr.mxu0 0.0
        %604 = vmatpush1.msra.mxu0 0.0
        %605 = vmatprep.subr.mxu0 0.0
        %606 = vmatpush1.msra.mxu0 0.0
        %607 = vmatprep.subr.mxu0 0.0
        %608 = vmatpush1.msra.mxu0 0.0
        %609 = vmatprep.subr.mxu0 0.0
        %610 = vmatpush1.msra.mxu0 0.0
        %611 = vmatprep.subr.mxu0 0.0
        %612 = vmatpush1.msra.mxu0 0.0
        %613 = vmatprep.subr.mxu0 0.0
        %614 = vmatpush1.msra.mxu0 0.0
        %615 = vmatprep.subr.mxu0 0.0
        %616 = vmatpush1.msra.mxu0 0.0
        %617 = vmatprep.subr.mxu0 0.0
        %618 = vmatpush1.msra.mxu0 0.0
        %619 = vmatprep.mubr.f32.mxu0 0.0
        %620 = vmatmul.mubr.f32.gmra.mrb[0].mxu0 %v547
        %v621 = vpop.f32.mrb[0].mxu0
        %v622 = vadd.f32 %v542, %v621
        %v623 = vpop.f32.mrb[0].mxu0
        %v624 = vadd.f32 %v544, %v623
        %625 = vdwg.mxu0
        %626 = vrot.lane.b32.xlu0 %v331, 15
        %v627 = vpop.permute.xlu0 %626
        %628 = vrot.lane.b32.xlu0 %v332, 15
        %v629 = vpop.permute.xlu0 %628
        %vm630 = vcmp.lt.s32.totalorder %v422, 15
        %v631 = vsel %vm630, %v627, %v629
        %v632 = vsel %vm630, %v629, %v627
        %s633 = scalar_lea.vmem %s2, 4
        %v634 = vld [vmem:[%s633] sm:$0x3]
        %v636 = vlaneseq
        %v637 = vshrl.u32 %v636, 7
        %v638 = vsub.s32 0, %v637
        %v639 = vrot.slane %v634, %v638
        %v640 = vlaneseq
        %v641 = vshrl.u32 %v640, 7
        %v642 = vsub.s32 1, %v641
        %v643 = vrot.slane %v634, %v642
        %v646 = vmul.f32 %v632, %v639
        %v647 = vmul.f32 %v631, %v643
        %s648 = scalar_lea.vmem %s1, 8
        %v649 = vld [vmem:[%s648] sm:$0xf]
        %v651 = vsel %vm465, %v649, 0
        %v654 = vsel %vm316, %v646, 0
        %v657 = vsel %vm316, %v647, 0
        %659 = vmatprep.subr.mxu0 %v657
        %660 = vmatpush1.msra.mxu0 %v654
        %661 = vmatprep.subr.mxu0 0.0
        %662 = vmatpush1.msra.mxu0 0.0
        %663 = vmatprep.subr.mxu0 0.0
        %664 = vmatpush1.msra.mxu0 0.0
        %665 = vmatprep.subr.mxu0 0.0
        %666 = vmatpush1.msra.mxu0 0.0
        %667 = vmatprep.subr.mxu0 0.0
        %668 = vmatpush1.msra.mxu0 0.0
        %669 = vmatprep.subr.mxu0 0.0
        %670 = vmatpush1.msra.mxu0 0.0
        %671 = vmatprep.subr.mxu0 0.0
        %672 = vmatpush1.msra.mxu0 0.0
        %673 = vmatprep.subr.mxu0 0.0
        %674 = vmatpush1.msra.mxu0 0.0
        %675 = vmatprep.subr.mxu0 0.0
        %676 = vmatpush1.msra.mxu0 0.0
        %677 = vmatprep.subr.mxu0 0.0
        %678 = vmatpush1.msra.mxu0 0.0
        %679 = vmatprep.subr.mxu0 0.0
        %680 = vmatpush1.msra.mxu0 0.0
        %681 = vmatprep.subr.mxu0 0.0
        %682 = vmatpush1.msra.mxu0 0.0
        %683 = vmatprep.subr.mxu0 0.0
        %684 = vmatpush1.msra.mxu0 0.0
        %685 = vmatprep.subr.mxu0 0.0
        %686 = vmatpush1.msra.mxu0 0.0
        %687 = vmatprep.subr.mxu0 0.0
        %688 = vmatpush1.msra.mxu0 0.0
        %689 = vmatprep.subr.mxu0 0.0
        %690 = vmatpush1.msra.mxu0 0.0
        %691 = vmatprep.subr.mxu0 0.0
        %692 = vmatpush1.msra.mxu0 0.0
        %693 = vmatprep.subr.mxu0 0.0
        %694 = vmatpush1.msra.mxu0 0.0
        %695 = vmatprep.subr.mxu0 0.0
        %696 = vmatpush1.msra.mxu0 0.0
        %697 = vmatprep.subr.mxu0 0.0
        %698 = vmatpush1.msra.mxu0 0.0
        %699 = vmatprep.subr.mxu0 0.0
        %700 = vmatpush1.msra.mxu0 0.0
        %701 = vmatprep.subr.mxu0 0.0
        %702 = vmatpush1.msra.mxu0 0.0
        %703 = vmatprep.subr.mxu0 0.0
        %704 = vmatpush1.msra.mxu0 0.0
        %705 = vmatprep.subr.mxu0 0.0
        %706 = vmatpush1.msra.mxu0 0.0
        %707 = vmatprep.subr.mxu0 0.0
        %708 = vmatpush1.msra.mxu0 0.0
        %709 = vmatprep.subr.mxu0 0.0
        %710 = vmatpush1.msra.mxu0 0.0
        %711 = vmatprep.subr.mxu0 0.0
        %712 = vmatpush1.msra.mxu0 0.0
        %713 = vmatprep.subr.mxu0 0.0
        %714 = vmatpush1.msra.mxu0 0.0
        %715 = vmatprep.subr.mxu0 0.0
        %716 = vmatpush1.msra.mxu0 0.0
        %717 = vmatprep.subr.mxu0 0.0
        %718 = vmatpush1.msra.mxu0 0.0
        %719 = vmatprep.subr.mxu0 0.0
        %720 = vmatpush1.msra.mxu0 0.0
        %721 = vmatprep.subr.mxu0 0.0
        %722 = vmatpush1.msra.mxu0 0.0
        %723 = vmatprep.mubr.f32.mxu0 0.0
        %724 = vmatmul.mubr.f32.gmra.mrb[0].mxu0 %v651
        %v725 = vpop.f32.mrb[0].mxu0
        %v726 = vadd.f32 0.0, %v725
        %v727 = vpop.f32.mrb[0].mxu0
        %v728 = vadd.f32 0.0, %v727
        %729 = vdwg.mxu0
        %v730 = vadd.f32 %v622, %v726
        %v731 = vadd.f32 %v624, %v728
        %732 = vrot.lane.b32.xlu0 %v331, 1
        %v733 = vpop.permute.xlu0 %732
        %734 = vrot.lane.b32.xlu0 %v332, 1
        %v735 = vpop.permute.xlu0 %734
        %vm736 = vcmp.lt.s32.totalorder %v422, 1
        %v737 = vsel %vm736, %v733, %v735
        %v738 = vsel %vm736, %v735, %v733
        %s739 = scalar_lea.vmem %s2, 6
        %v740 = vld [vmem:[%s739] sm:$0x3]
        %v742 = vlaneseq
        %v743 = vshrl.u32 %v742, 7
        %v744 = vsub.s32 0, %v743
        %v745 = vrot.slane %v740, %v744
        %v746 = vlaneseq
        %v747 = vshrl.u32 %v746, 7
        %v748 = vsub.s32 1, %v747
        %v749 = vrot.slane %v740, %v748
        %v752 = vmul.f32 %v738, %v745
        %v753 = vmul.f32 %v737, %v749
        %s754 = scalar_lea.vmem %s1, 12
        %v755 = vld [vmem:[%s754] sm:$0xf]
        %v757 = vsel %vm465, %v755, 0
        %v760 = vsel %vm316, %v752, 0
        %v763 = vsel %vm316, %v753, 0
        %765 = vmatprep.subr.mxu0 %v763
        %766 = vmatpush1.msra.mxu0 %v760
        %767 = vmatprep.subr.mxu0 0.0
        %768 = vmatpush1.msra.mxu0 0.0
        %769 = vmatprep.subr.mxu0 0.0
        %770 = vmatpush1.msra.mxu0 0.0
        %771 = vmatprep.subr.mxu0 0.0
        %772 = vmatpush1.msra.mxu0 0.0
        %773 = vmatprep.subr.mxu0 0.0
        %774 = vmatpush1.msra.mxu0 0.0
        %775 = vmatprep.subr.mxu0 0.0
        %776 = vmatpush1.msra.mxu0 0.0
        %777 = vmatprep.subr.mxu0 0.0
        %778 = vmatpush1.msra.mxu0 0.0
        %779 = vmatprep.subr.mxu0 0.0
        %780 = vmatpush1.msra.mxu0 0.0
        %781 = vmatprep.subr.mxu0 0.0
        %782 = vmatpush1.msra.mxu0 0.0
        %783 = vmatprep.subr.mxu0 0.0
        %784 = vmatpush1.msra.mxu0 0.0
        %785 = vmatprep.subr.mxu0 0.0
        %786 = vmatpush1.msra.mxu0 0.0
        %787 = vmatprep.subr.mxu0 0.0
        %788 = vmatpush1.msra.mxu0 0.0
        %789 = vmatprep.subr.mxu0 0.0
        %790 = vmatpush1.msra.mxu0 0.0
        %791 = vmatprep.subr.mxu0 0.0
        %792 = vmatpush1.msra.mxu0 0.0
        %793 = vmatprep.subr.mxu0 0.0
        %794 = vmatpush1.msra.mxu0 0.0
        %795 = vmatprep.subr.mxu0 0.0
        %796 = vmatpush1.msra.mxu0 0.0
        %797 = vmatprep.subr.mxu0 0.0
        %798 = vmatpush1.msra.mxu0 0.0
        %799 = vmatprep.subr.mxu0 0.0
        %800 = vmatpush1.msra.mxu0 0.0
        %801 = vmatprep.subr.mxu0 0.0
        %802 = vmatpush1.msra.mxu0 0.0
        %803 = vmatprep.subr.mxu0 0.0
        %804 = vmatpush1.msra.mxu0 0.0
        %805 = vmatprep.subr.mxu0 0.0
        %806 = vmatpush1.msra.mxu0 0.0
        %807 = vmatprep.subr.mxu0 0.0
        %808 = vmatpush1.msra.mxu0 0.0
        %809 = vmatprep.subr.mxu0 0.0
        %810 = vmatpush1.msra.mxu0 0.0
        %811 = vmatprep.subr.mxu0 0.0
        %812 = vmatpush1.msra.mxu0 0.0
        %813 = vmatprep.subr.mxu0 0.0
        %814 = vmatpush1.msra.mxu0 0.0
        %815 = vmatprep.subr.mxu0 0.0
        %816 = vmatpush1.msra.mxu0 0.0
        %817 = vmatprep.subr.mxu0 0.0
        %818 = vmatpush1.msra.mxu0 0.0
        %819 = vmatprep.subr.mxu0 0.0
        %820 = vmatpush1.msra.mxu0 0.0
        %821 = vmatprep.subr.mxu0 0.0
        %822 = vmatpush1.msra.mxu0 0.0
        %823 = vmatprep.subr.mxu0 0.0
        %824 = vmatpush1.msra.mxu0 0.0
        %825 = vmatprep.subr.mxu0 0.0
        %826 = vmatpush1.msra.mxu0 0.0
        %827 = vmatprep.subr.mxu0 0.0
        %828 = vmatpush1.msra.mxu0 0.0
        %829 = vmatprep.mubr.f32.mxu0 0.0
        %830 = vmatmul.mubr.f32.gmra.mrb[0].mxu0 %v757
        %v831 = vpop.f32.mrb[0].mxu0
        %v832 = vadd.f32 0.0, %v831
        %v833 = vpop.f32.mrb[0].mxu0
        %v834 = vadd.f32 0.0, %v833
        %835 = vdwg.mxu0
        %v836 = vadd.f32 %v730, %v832
        %v837 = vadd.f32 %v731, %v834
        %s838 = scalar_lea.vmem %s1, 16
        %v839 = vld [vmem:[%s838] sm:$0xf]
        %v841 = vsel %vm465, %v839, 0
        %v844 = vsel %vm316, %v331, 0
        %v847 = vsel %vm316, %v332, 0
        %849 = vmatprep.subr.mxu0 %v847
        %850 = vmatpush1.msra.mxu0 %v844
        %851 = vmatprep.subr.mxu0 0.0
        %852 = vmatpush1.msra.mxu0 0.0
        %853 = vmatprep.subr.mxu0 0.0
        %854 = vmatpush1.msra.mxu0 0.0
        %855 = vmatprep.subr.mxu0 0.0
        %856 = vmatpush1.msra.mxu0 0.0
        %857 = vmatprep.subr.mxu0 0.0
        %858 = vmatpush1.msra.mxu0 0.0
        %859 = vmatprep.subr.mxu0 0.0
        %860 = vmatpush1.msra.mxu0 0.0
        %861 = vmatprep.subr.mxu0 0.0
        %862 = vmatpush1.msra.mxu0 0.0
        %863 = vmatprep.subr.mxu0 0.0
        %864 = vmatpush1.msra.mxu0 0.0
        %865 = vmatprep.subr.mxu0 0.0
        %866 = vmatpush1.msra.mxu0 0.0
        %867 = vmatprep.subr.mxu0 0.0
        %868 = vmatpush1.msra.mxu0 0.0
        %869 = vmatprep.subr.mxu0 0.0
        %870 = vmatpush1.msra.mxu0 0.0
        %871 = vmatprep.subr.mxu0 0.0
        %872 = vmatpush1.msra.mxu0 0.0
        %873 = vmatprep.subr.mxu0 0.0
        %874 = vmatpush1.msra.mxu0 0.0
        %875 = vmatprep.subr.mxu0 0.0
        %876 = vmatpush1.msra.mxu0 0.0
        %877 = vmatprep.subr.mxu0 0.0
        %878 = vmatpush1.msra.mxu0 0.0
        %879 = vmatprep.subr.mxu0 0.0
        %880 = vmatpush1.msra.mxu0 0.0
        %881 = vmatprep.subr.mxu0 0.0
        %882 = vmatpush1.msra.mxu0 0.0
        %883 = vmatprep.subr.mxu0 0.0
        %884 = vmatpush1.msra.mxu0 0.0
        %885 = vmatprep.subr.mxu0 0.0
        %886 = vmatpush1.msra.mxu0 0.0
        %887 = vmatprep.subr.mxu0 0.0
        %888 = vmatpush1.msra.mxu0 0.0
        %889 = vmatprep.subr.mxu0 0.0
        %890 = vmatpush1.msra.mxu0 0.0
        %891 = vmatprep.subr.mxu0 0.0
        %892 = vmatpush1.msra.mxu0 0.0
        %893 = vmatprep.subr.mxu0 0.0
        %894 = vmatpush1.msra.mxu0 0.0
        %895 = vmatprep.subr.mxu0 0.0
        %896 = vmatpush1.msra.mxu0 0.0
        %897 = vmatprep.subr.mxu0 0.0
        %898 = vmatpush1.msra.mxu0 0.0
        %899 = vmatprep.subr.mxu0 0.0
        %900 = vmatpush1.msra.mxu0 0.0
        %901 = vmatprep.subr.mxu0 0.0
        %902 = vmatpush1.msra.mxu0 0.0
        %903 = vmatprep.subr.mxu0 0.0
        %904 = vmatpush1.msra.mxu0 0.0
        %905 = vmatprep.subr.mxu0 0.0
        %906 = vmatpush1.msra.mxu0 0.0
        %907 = vmatprep.subr.mxu0 0.0
        %908 = vmatpush1.msra.mxu0 0.0
        %909 = vmatprep.subr.mxu0 0.0
        %910 = vmatpush1.msra.mxu0 0.0
        %911 = vmatprep.subr.mxu0 0.0
        %912 = vmatpush1.msra.mxu0 0.0
        %913 = vmatprep.mubr.f32.mxu0 0.0
        %914 = vmatmul.mubr.f32.gmra.mrb[0].mxu0 %v841
        %v915 = vpop.f32.mrb[0].mxu0
        %v916 = vadd.f32 0.0, %v915
        %v917 = vpop.f32.mrb[0].mxu0
        %v918 = vadd.f32 0.0, %v917
        %919 = vdwg.mxu0
        %v920 = vadd.f32 %v836, %v916
        %v921 = vadd.f32 %v837, %v918
        %922 = vrot.lane.b32.xlu0 %v331, 127
        %v923 = vpop.permute.xlu0 %922
        %924 = vrot.lane.b32.xlu0 %v332, 127
        %v925 = vpop.permute.xlu0 %924
        %vm926 = vcmp.lt.s32.totalorder %v422, 127
        %v927 = vsel %vm926, %v923, %v925
        %v928 = vsel %vm926, %v925, %v923
        %s929 = scalar_lea.vmem %s2, 10
        %v930 = vld [vmem:[%s929] sm:$0x3]
        %v932 = vlaneseq
        %v933 = vshrl.u32 %v932, 7
        %v934 = vsub.s32 0, %v933
        %v935 = vrot.slane %v930, %v934
        %v936 = vlaneseq
        %v937 = vshrl.u32 %v936, 7
        %v938 = vsub.s32 1, %v937
        %v939 = vrot.slane %v930, %v938
        %v942 = vmul.f32 %v927, %v935
        %v943 = vmul.f32 %v928, %v939
        %s944 = scalar_lea.vmem %s1, 20
        %v945 = vld [vmem:[%s944] sm:$0xf]
        %v947 = vsel %vm465, %v945, 0
        %v950 = vsel %vm316, %v942, 0
        %v953 = vsel %vm316, %v943, 0
        %955 = vmatprep.subr.mxu0 %v953
        %956 = vmatpush1.msra.mxu0 %v950
        %957 = vmatprep.subr.mxu0 0.0
        %958 = vmatpush1.msra.mxu0 0.0
        %959 = vmatprep.subr.mxu0 0.0
        %960 = vmatpush1.msra.mxu0 0.0
        %961 = vmatprep.subr.mxu0 0.0
        %962 = vmatpush1.msra.mxu0 0.0
        %963 = vmatprep.subr.mxu0 0.0
        %964 = vmatpush1.msra.mxu0 0.0
        %965 = vmatprep.subr.mxu0 0.0
        %966 = vmatpush1.msra.mxu0 0.0
        %967 = vmatprep.subr.mxu0 0.0
        %968 = vmatpush1.msra.mxu0 0.0
        %969 = vmatprep.subr.mxu0 0.0
        %970 = vmatpush1.msra.mxu0 0.0
        %971 = vmatprep.subr.mxu0 0.0
        %972 = vmatpush1.msra.mxu0 0.0
        %973 = vmatprep.subr.mxu0 0.0
        %974 = vmatpush1.msra.mxu0 0.0
        %975 = vmatprep.subr.mxu0 0.0
        %976 = vmatpush1.msra.mxu0 0.0
        %977 = vmatprep.subr.mxu0 0.0
        %978 = vmatpush1.msra.mxu0 0.0
        %979 = vmatprep.subr.mxu0 0.0
        %980 = vmatpush1.msra.mxu0 0.0
        %981 = vmatprep.subr.mxu0 0.0
        %982 = vmatpush1.msra.mxu0 0.0
        %983 = vmatprep.subr.mxu0 0.0
        %984 = vmatpush1.msra.mxu0 0.0
        %985 = vmatprep.subr.mxu0 0.0
        %986 = vmatpush1.msra.mxu0 0.0
        %987 = vmatprep.subr.mxu0 0.0
        %988 = vmatpush1.msra.mxu0 0.0
        %989 = vmatprep.subr.mxu0 0.0
        %990 = vmatpush1.msra.mxu0 0.0
        %991 = vmatprep.subr.mxu0 0.0
        %992 = vmatpush1.msra.mxu0 0.0
        %993 = vmatprep.subr.mxu0 0.0
        %994 = vmatpush1.msra.mxu0 0.0
        %995 = vmatprep.subr.mxu0 0.0
        %996 = vmatpush1.msra.mxu0 0.0
        %997 = vmatprep.subr.mxu0 0.0
        %998 = vmatpush1.msra.mxu0 0.0
        %999 = vmatprep.subr.mxu0 0.0
        %1000 = vmatpush1.msra.mxu0 0.0
        %1001 = vmatprep.subr.mxu0 0.0
        %1002 = vmatpush1.msra.mxu0 0.0
        %1003 = vmatprep.subr.mxu0 0.0
        %1004 = vmatpush1.msra.mxu0 0.0
        %1005 = vmatprep.subr.mxu0 0.0
        %1006 = vmatpush1.msra.mxu0 0.0
        %1007 = vmatprep.subr.mxu0 0.0
        %1008 = vmatpush1.msra.mxu0 0.0
        %1009 = vmatprep.subr.mxu0 0.0
        %1010 = vmatpush1.msra.mxu0 0.0
        %1011 = vmatprep.subr.mxu0 0.0
        %1012 = vmatpush1.msra.mxu0 0.0
        %1013 = vmatprep.subr.mxu0 0.0
        %1014 = vmatpush1.msra.mxu0 0.0
        %1015 = vmatprep.subr.mxu0 0.0
        %1016 = vmatpush1.msra.mxu0 0.0
        %1017 = vmatprep.subr.mxu0 0.0
        %1018 = vmatpush1.msra.mxu0 0.0
        %1019 = vmatprep.mubr.f32.mxu0 0.0
        %1020 = vmatmul.mubr.f32.gmra.mrb[0].mxu0 %v947
        %v1021 = vpop.f32.mrb[0].mxu0
        %v1022 = vadd.f32 0.0, %v1021
        %v1023 = vpop.f32.mrb[0].mxu0
        %v1024 = vadd.f32 0.0, %v1023
        %1025 = vdwg.mxu0
        %v1026 = vadd.f32 %v920, %v1022
        %v1027 = vadd.f32 %v921, %v1024
        %1028 = vrot.lane.b32.xlu0 %v331, 113
        %v1029 = vpop.permute.xlu0 %1028
        %1030 = vrot.lane.b32.xlu0 %v332, 113
        %v1031 = vpop.permute.xlu0 %1030
        %vm1032 = vcmp.lt.s32.totalorder %v422, 113
        %v1033 = vsel %vm1032, %v1029, %v1031
        %v1034 = vsel %vm1032, %v1031, %v1029
        %s1035 = scalar_lea.vmem %s2, 12
        %v1036 = vld [vmem:[%s1035] sm:$0x3]
        %v1038 = vlaneseq
        %v1039 = vshrl.u32 %v1038, 7
        %v1040 = vsub.s32 0, %v1039
        %v1041 = vrot.slane %v1036, %v1040
        %v1042 = vlaneseq
        %v1043 = vshrl.u32 %v1042, 7
        %v1044 = vsub.s32 1, %v1043
        %v1045 = vrot.slane %v1036, %v1044
        %v1048 = vmul.f32 %v1033, %v1041
        %v1049 = vmul.f32 %v1034, %v1045
        %s1050 = scalar_lea.vmem %s1, 24
        %v1051 = vld [vmem:[%s1050] sm:$0xf]
        %v1053 = vsel %vm465, %v1051, 0
        %v1056 = vsel %vm316, %v1048, 0
        %v1059 = vsel %vm316, %v1049, 0
        %1061 = vmatprep.subr.mxu0 %v1059
        %1062 = vmatpush1.msra.mxu0 %v1056
        %1063 = vmatprep.subr.mxu0 0.0
        %1064 = vmatpush1.msra.mxu0 0.0
        %1065 = vmatprep.subr.mxu0 0.0
        %1066 = vmatpush1.msra.mxu0 0.0
        %1067 = vmatprep.subr.mxu0 0.0
        %1068 = vmatpush1.msra.mxu0 0.0
        %1069 = vmatprep.subr.mxu0 0.0
        %1070 = vmatpush1.msra.mxu0 0.0
        %1071 = vmatprep.subr.mxu0 0.0
        %1072 = vmatpush1.msra.mxu0 0.0
        %1073 = vmatprep.subr.mxu0 0.0
        %1074 = vmatpush1.msra.mxu0 0.0
        %1075 = vmatprep.subr.mxu0 0.0
        %1076 = vmatpush1.msra.mxu0 0.0
        %1077 = vmatprep.subr.mxu0 0.0
        %1078 = vmatpush1.msra.mxu0 0.0
        %1079 = vmatprep.subr.mxu0 0.0
        %1080 = vmatpush1.msra.mxu0 0.0
        %1081 = vmatprep.subr.mxu0 0.0
        %1082 = vmatpush1.msra.mxu0 0.0
        %1083 = vmatprep.subr.mxu0 0.0
        %1084 = vmatpush1.msra.mxu0 0.0
        %1085 = vmatprep.subr.mxu0 0.0
        %1086 = vmatpush1.msra.mxu0 0.0
        %1087 = vmatprep.subr.mxu0 0.0
        %1088 = vmatpush1.msra.mxu0 0.0
        %1089 = vmatprep.subr.mxu0 0.0
        %1090 = vmatpush1.msra.mxu0 0.0
        %1091 = vmatprep.subr.mxu0 0.0
        %1092 = vmatpush1.msra.mxu0 0.0
        %1093 = vmatprep.subr.mxu0 0.0
        %1094 = vmatpush1.msra.mxu0 0.0
        %1095 = vmatprep.subr.mxu0 0.0
        %1096 = vmatpush1.msra.mxu0 0.0
        %1097 = vmatprep.subr.mxu0 0.0
        %1098 = vmatpush1.msra.mxu0 0.0
        %1099 = vmatprep.subr.mxu0 0.0
        %1100 = vmatpush1.msra.mxu0 0.0
        %1101 = vmatprep.subr.mxu0 0.0
        %1102 = vmatpush1.msra.mxu0 0.0
        %1103 = vmatprep.subr.mxu0 0.0
        %1104 = vmatpush1.msra.mxu0 0.0
        %1105 = vmatprep.subr.mxu0 0.0
        %1106 = vmatpush1.msra.mxu0 0.0
        %1107 = vmatprep.subr.mxu0 0.0
        %1108 = vmatpush1.msra.mxu0 0.0
        %1109 = vmatprep.subr.mxu0 0.0
        %1110 = vmatpush1.msra.mxu0 0.0
        %1111 = vmatprep.subr.mxu0 0.0
        %1112 = vmatpush1.msra.mxu0 0.0
        %1113 = vmatprep.subr.mxu0 0.0
        %1114 = vmatpush1.msra.mxu0 0.0
        %1115 = vmatprep.subr.mxu0 0.0
        %1116 = vmatpush1.msra.mxu0 0.0
        %1117 = vmatprep.subr.mxu0 0.0
        %1118 = vmatpush1.msra.mxu0 0.0
        %1119 = vmatprep.subr.mxu0 0.0
        %1120 = vmatpush1.msra.mxu0 0.0
        %1121 = vmatprep.subr.mxu0 0.0
        %1122 = vmatpush1.msra.mxu0 0.0
        %1123 = vmatprep.subr.mxu0 0.0
        %1124 = vmatpush1.msra.mxu0 0.0
        %1125 = vmatprep.mubr.f32.mxu0 0.0
        %1126 = vmatmul.mubr.f32.gmra.mrb[0].mxu0 %v1053
        %v1127 = vpop.f32.mrb[0].mxu0
        %v1128 = vadd.f32 0.0, %v1127
        %v1129 = vpop.f32.mrb[0].mxu0
        %v1130 = vadd.f32 0.0, %v1129
        %1131 = vdwg.mxu0
        %v1132 = vadd.f32 %v1026, %v1128
        %v1133 = vadd.f32 %v1027, %v1130
        %1134 = vrot.lane.b32.xlu0 %v331, 112
        %v1135 = vpop.permute.xlu0 %1134
        %1136 = vrot.lane.b32.xlu0 %v332, 112
        %v1137 = vpop.permute.xlu0 %1136
        %vm1138 = vcmp.lt.s32.totalorder %v422, 112
        %v1139 = vsel %vm1138, %v1135, %v1137
        %v1140 = vsel %vm1138, %v1137, %v1135
        %s1141 = scalar_lea.vmem %s2, 14
        %v1142 = vld [vmem:[%s1141] sm:$0x3]
        %v1144 = vlaneseq
        %v1145 = vshrl.u32 %v1144, 7
        %v1146 = vsub.s32 0, %v1145
        %v1147 = vrot.slane %v1142, %v1146
        %v1148 = vlaneseq
        %v1149 = vshrl.u32 %v1148, 7
        %v1150 = vsub.s32 1, %v1149
        %v1151 = vrot.slane %v1142, %v1150
        %v1154 = vmul.f32 %v1139, %v1147
        %v1155 = vmul.f32 %v1140, %v1151
        %s1156 = scalar_lea.vmem %s1, 28
        %v1157 = vld [vmem:[%s1156] sm:$0xf]
        %v1159 = vsel %vm465, %v1157, 0
        %v1162 = vsel %vm316, %v1154, 0
        %v1165 = vsel %vm316, %v1155, 0
        %1167 = vmatprep.subr.mxu0 %v1165
        %1168 = vmatpush1.msra.mxu0 %v1162
        %1169 = vmatprep.subr.mxu0 0.0
        %1170 = vmatpush1.msra.mxu0 0.0
        %1171 = vmatprep.subr.mxu0 0.0
        %1172 = vmatpush1.msra.mxu0 0.0
        %1173 = vmatprep.subr.mxu0 0.0
        %1174 = vmatpush1.msra.mxu0 0.0
        %1175 = vmatprep.subr.mxu0 0.0
        %1176 = vmatpush1.msra.mxu0 0.0
        %1177 = vmatprep.subr.mxu0 0.0
        %1178 = vmatpush1.msra.mxu0 0.0
        %1179 = vmatprep.subr.mxu0 0.0
        %1180 = vmatpush1.msra.mxu0 0.0
        %1181 = vmatprep.subr.mxu0 0.0
        %1182 = vmatpush1.msra.mxu0 0.0
        %1183 = vmatprep.subr.mxu0 0.0
        %1184 = vmatpush1.msra.mxu0 0.0
        %1185 = vmatprep.subr.mxu0 0.0
        %1186 = vmatpush1.msra.mxu0 0.0
        %1187 = vmatprep.subr.mxu0 0.0
        %1188 = vmatpush1.msra.mxu0 0.0
        %1189 = vmatprep.subr.mxu0 0.0
        %1190 = vmatpush1.msra.mxu0 0.0
        %1191 = vmatprep.subr.mxu0 0.0
        %1192 = vmatpush1.msra.mxu0 0.0
        %1193 = vmatprep.subr.mxu0 0.0
        %1194 = vmatpush1.msra.mxu0 0.0
        %1195 = vmatprep.subr.mxu0 0.0
        %1196 = vmatpush1.msra.mxu0 0.0
        %1197 = vmatprep.subr.mxu0 0.0
        %1198 = vmatpush1.msra.mxu0 0.0
        %1199 = vmatprep.subr.mxu0 0.0
        %1200 = vmatpush1.msra.mxu0 0.0
        %1201 = vmatprep.subr.mxu0 0.0
        %1202 = vmatpush1.msra.mxu0 0.0
        %1203 = vmatprep.subr.mxu0 0.0
        %1204 = vmatpush1.msra.mxu0 0.0
        %1205 = vmatprep.subr.mxu0 0.0
        %1206 = vmatpush1.msra.mxu0 0.0
        %1207 = vmatprep.subr.mxu0 0.0
        %1208 = vmatpush1.msra.mxu0 0.0
        %1209 = vmatprep.subr.mxu0 0.0
        %1210 = vmatpush1.msra.mxu0 0.0
        %1211 = vmatprep.subr.mxu0 0.0
        %1212 = vmatpush1.msra.mxu0 0.0
        %1213 = vmatprep.subr.mxu0 0.0
        %1214 = vmatpush1.msra.mxu0 0.0
        %1215 = vmatprep.subr.mxu0 0.0
        %1216 = vmatpush1.msra.mxu0 0.0
        %1217 = vmatprep.subr.mxu0 0.0
        %1218 = vmatpush1.msra.mxu0 0.0
        %1219 = vmatprep.subr.mxu0 0.0
        %1220 = vmatpush1.msra.mxu0 0.0
        %1221 = vmatprep.subr.mxu0 0.0
        %1222 = vmatpush1.msra.mxu0 0.0
        %1223 = vmatprep.subr.mxu0 0.0
        %1224 = vmatpush1.msra.mxu0 0.0
        %1225 = vmatprep.subr.mxu0 0.0
        %1226 = vmatpush1.msra.mxu0 0.0
        %1227 = vmatprep.subr.mxu0 0.0
        %1228 = vmatpush1.msra.mxu0 0.0
        %1229 = vmatprep.subr.mxu0 0.0
        %1230 = vmatpush1.msra.mxu0 0.0
        %1231 = vmatprep.mubr.f32.mxu0 0.0
        %1232 = vmatmul.mubr.f32.gmra.mrb[0].mxu0 %v1159
        %v1233 = vpop.f32.mrb[0].mxu0
        %v1234 = vadd.f32 0.0, %v1233
        %v1235 = vpop.f32.mrb[0].mxu0
        %v1236 = vadd.f32 0.0, %v1235
        %1237 = vdwg.mxu0
        %v1238 = vadd.f32 %v1132, %v1234
        %v1239 = vadd.f32 %v1133, %v1236
        %1240 = vrot.lane.b32.xlu0 %v331, 111
        %v1241 = vpop.permute.xlu0 %1240
        %1242 = vrot.lane.b32.xlu0 %v332, 111
        %v1243 = vpop.permute.xlu0 %1242
        %vm1244 = vcmp.lt.s32.totalorder %v422, 111
        %v1245 = vsel %vm1244, %v1241, %v1243
        %v1246 = vsel %vm1244, %v1243, %v1241
        %s1247 = scalar_lea.vmem %s2, 16
        %v1248 = vld [vmem:[%s1247] sm:$0x3]
        %v1250 = vlaneseq
        %v1251 = vshrl.u32 %v1250, 7
        %v1252 = vsub.s32 0, %v1251
        %v1253 = vrot.slane %v1248, %v1252
        %v1254 = vlaneseq
        %v1255 = vshrl.u32 %v1254, 7
        %v1256 = vsub.s32 1, %v1255
        %v1257 = vrot.slane %v1248, %v1256
        %v1260 = vmul.f32 %v1245, %v1253
        %v1261 = vmul.f32 %v1246, %v1257
        %s1262 = scalar_lea.vmem %s1, 32
        %v1263 = vld [vmem:[%s1262] sm:$0xf]
        %v1265 = vsel %vm465, %v1263, 0
        %v1268 = vsel %vm316, %v1260, 0
        %v1271 = vsel %vm316, %v1261, 0
        %1273 = vmatprep.subr.mxu0 %v1271
        %1274 = vmatpush1.msra.mxu0 %v1268
        %1275 = vmatprep.subr.mxu0 0.0
        %1276 = vmatpush1.msra.mxu0 0.0
        %1277 = vmatprep.subr.mxu0 0.0
        %1278 = vmatpush1.msra.mxu0 0.0
        %1279 = vmatprep.subr.mxu0 0.0
        %1280 = vmatpush1.msra.mxu0 0.0
        %1281 = vmatprep.subr.mxu0 0.0
        %1282 = vmatpush1.msra.mxu0 0.0
        %1283 = vmatprep.subr.mxu0 0.0
        %1284 = vmatpush1.msra.mxu0 0.0
        %1285 = vmatprep.subr.mxu0 0.0
        %1286 = vmatpush1.msra.mxu0 0.0
        %1287 = vmatprep.subr.mxu0 0.0
        %1288 = vmatpush1.msra.mxu0 0.0
        %1289 = vmatprep.subr.mxu0 0.0
        %1290 = vmatpush1.msra.mxu0 0.0
        %1291 = vmatprep.subr.mxu0 0.0
        %1292 = vmatpush1.msra.mxu0 0.0
        %1293 = vmatprep.subr.mxu0 0.0
        %1294 = vmatpush1.msra.mxu0 0.0
        %1295 = vmatprep.subr.mxu0 0.0
        %1296 = vmatpush1.msra.mxu0 0.0
        %1297 = vmatprep.subr.mxu0 0.0
        %1298 = vmatpush1.msra.mxu0 0.0
        %1299 = vmatprep.subr.mxu0 0.0
        %1300 = vmatpush1.msra.mxu0 0.0
        %1301 = vmatprep.subr.mxu0 0.0
        %1302 = vmatpush1.msra.mxu0 0.0
        %1303 = vmatprep.subr.mxu0 0.0
        %1304 = vmatpush1.msra.mxu0 0.0
        %1305 = vmatprep.subr.mxu0 0.0
        %1306 = vmatpush1.msra.mxu0 0.0
        %1307 = vmatprep.subr.mxu0 0.0
        %1308 = vmatpush1.msra.mxu0 0.0
        %1309 = vmatprep.subr.mxu0 0.0
        %1310 = vmatpush1.msra.mxu0 0.0
        %1311 = vmatprep.subr.mxu0 0.0
        %1312 = vmatpush1.msra.mxu0 0.0
        %1313 = vmatprep.subr.mxu0 0.0
        %1314 = vmatpush1.msra.mxu0 0.0
        %1315 = vmatprep.subr.mxu0 0.0
        %1316 = vmatpush1.msra.mxu0 0.0
        %1317 = vmatprep.subr.mxu0 0.0
        %1318 = vmatpush1.msra.mxu0 0.0
        %1319 = vmatprep.subr.mxu0 0.0
        %1320 = vmatpush1.msra.mxu0 0.0
        %1321 = vmatprep.subr.mxu0 0.0
        %1322 = vmatpush1.msra.mxu0 0.0
        %1323 = vmatprep.subr.mxu0 0.0
        %1324 = vmatpush1.msra.mxu0 0.0
        %1325 = vmatprep.subr.mxu0 0.0
        %1326 = vmatpush1.msra.mxu0 0.0
        %1327 = vmatprep.subr.mxu0 0.0
        %1328 = vmatpush1.msra.mxu0 0.0
        %1329 = vmatprep.subr.mxu0 0.0
        %1330 = vmatpush1.msra.mxu0 0.0
        %1331 = vmatprep.subr.mxu0 0.0
        %1332 = vmatpush1.msra.mxu0 0.0
        %1333 = vmatprep.subr.mxu0 0.0
        %1334 = vmatpush1.msra.mxu0 0.0
        %1335 = vmatprep.subr.mxu0 0.0
        %1336 = vmatpush1.msra.mxu0 0.0
        %1337 = vmatprep.mubr.f32.mxu0 0.0
        %1338 = vmatmul.mubr.f32.gmra.mrb[0].mxu0 %v1265
        %v1339 = vpop.f32.mrb[0].mxu0
        %v1340 = vadd.f32 0.0, %v1339
        %v1341 = vpop.f32.mrb[0].mxu0
        %v1342 = vadd.f32 0.0, %v1341
        %1343 = vdwg.mxu0
        %v1344 = vadd.f32 %v1238, %v1340
        %v1345 = vadd.f32 %v1239, %v1342
        %v1346 = vadd.f32 %v331, %v1344
        %v1347 = vadd.f32 %v332, %v1345
        %1348 = vrot.lane.b32.xlu0 %v1346, 17
        %v1349 = vpop.permute.xlu0 %1348
        %1350 = vrot.lane.b32.xlu0 %v1347, 17
        %v1351 = vpop.permute.xlu0 %1350
        %v1352 = vsel %vm423, %v1349, %v1351
        %v1353 = vsel %vm423, %v1351, %v1349
        %v1354 = vmul.f32 %v1353, %v431
        %v1355 = vmul.f32 %v1352, %v435
        %s1356 = scalar_lea.vmem %s1, 36
        %v1357 = vld [vmem:[%s1356] sm:$0xf]
        %1358 = vrot.lane.b32.xlu0 %v1346, 16
        %v1359 = vpop.permute.xlu0 %1358
        %1360 = vrot.lane.b32.xlu0 %v1347, 16
        %v1361 = vpop.permute.xlu0 %1360
        %v1362 = vsel %vm445, %v1359, %v1361
        %v1363 = vsel %vm445, %v1361, %v1359
        %v1364 = vmul.f32 %v1363, %v454
        %v1365 = vmul.f32 %v1362, %v458
        %s1366 = scalar_lea.vmem %s1, 40
        %v1367 = vld [vmem:[%s1366] sm:$0xf]
        %v1369 = vsel %vm465, %v1367, 0
        %v1372 = vsel %vm316, %v1364, 0
        %v1375 = vsel %vm316, %v1365, 0
        %1377 = vmatprep.subr.mxu0 %v1375
        %1378 = vmatpush1.msra.mxu0 %v1372
        %1379 = vmatprep.subr.mxu0 0.0
        %1380 = vmatpush1.msra.mxu0 0.0
        %1381 = vmatprep.subr.mxu0 0.0
        %1382 = vmatpush1.msra.mxu0 0.0
        %1383 = vmatprep.subr.mxu0 0.0
        %1384 = vmatpush1.msra.mxu0 0.0
        %1385 = vmatprep.subr.mxu0 0.0
        %1386 = vmatpush1.msra.mxu0 0.0
        %1387 = vmatprep.subr.mxu0 0.0
        %1388 = vmatpush1.msra.mxu0 0.0
        %1389 = vmatprep.subr.mxu0 0.0
        %1390 = vmatpush1.msra.mxu0 0.0
        %1391 = vmatprep.subr.mxu0 0.0
        %1392 = vmatpush1.msra.mxu0 0.0
        %1393 = vmatprep.subr.mxu0 0.0
        %1394 = vmatpush1.msra.mxu0 0.0
        %1395 = vmatprep.subr.mxu0 0.0
        %1396 = vmatpush1.msra.mxu0 0.0
        %1397 = vmatprep.subr.mxu0 0.0
        %1398 = vmatpush1.msra.mxu0 0.0
        %1399 = vmatprep.subr.mxu0 0.0
        %1400 = vmatpush1.msra.mxu0 0.0
        %1401 = vmatprep.subr.mxu0 0.0
        %1402 = vmatpush1.msra.mxu0 0.0
        %1403 = vmatprep.subr.mxu0 0.0
        %1404 = vmatpush1.msra.mxu0 0.0
        %1405 = vmatprep.subr.mxu0 0.0
        %1406 = vmatpush1.msra.mxu0 0.0
        %1407 = vmatprep.subr.mxu0 0.0
        %1408 = vmatpush1.msra.mxu0 0.0
        %1409 = vmatprep.subr.mxu0 0.0
        %1410 = vmatpush1.msra.mxu0 0.0
        %1411 = vmatprep.subr.mxu0 0.0
        %1412 = vmatpush1.msra.mxu0 0.0
        %1413 = vmatprep.subr.mxu0 0.0
        %1414 = vmatpush1.msra.mxu0 0.0
        %1415 = vmatprep.subr.mxu0 0.0
        %1416 = vmatpush1.msra.mxu0 0.0
        %1417 = vmatprep.subr.mxu0 0.0
        %1418 = vmatpush1.msra.mxu0 0.0
        %1419 = vmatprep.subr.mxu0 0.0
        %1420 = vmatpush1.msra.mxu0 0.0
        %1421 = vmatprep.subr.mxu0 0.0
        %1422 = vmatpush1.msra.mxu0 0.0
        %1423 = vmatprep.subr.mxu0 0.0
        %1424 = vmatpush1.msra.mxu0 0.0
        %1425 = vmatprep.subr.mxu0 0.0
        %1426 = vmatpush1.msra.mxu0 0.0
        %1427 = vmatprep.subr.mxu0 0.0
        %1428 = vmatpush1.msra.mxu0 0.0
        %1429 = vmatprep.subr.mxu0 0.0
        %1430 = vmatpush1.msra.mxu0 0.0
        %1431 = vmatprep.subr.mxu0 0.0
        %1432 = vmatpush1.msra.mxu0 0.0
        %1433 = vmatprep.subr.mxu0 0.0
        %1434 = vmatpush1.msra.mxu0 0.0
        %1435 = vmatprep.subr.mxu0 0.0
        %1436 = vmatpush1.msra.mxu0 0.0
        %1437 = vmatprep.subr.mxu0 0.0
        %1438 = vmatpush1.msra.mxu0 0.0
        %1439 = vmatprep.subr.mxu0 0.0
        %1440 = vmatpush1.msra.mxu0 0.0
        %1441 = vmatprep.mubr.f32.mxu0 0.0
        %1442 = vmatmul.mubr.f32.gmra.mrb[0].mxu0 %v1369
        %v1443 = vpop.f32.mrb[0].mxu0
        %v1444 = vadd.f32 0.0, %v1443
        %v1445 = vpop.f32.mrb[0].mxu0
        %v1446 = vadd.f32 0.0, %v1445
        %1447 = vdwg.mxu0
        %v1449 = vsel %vm465, %v1357, 0
        %v1452 = vsel %vm316, %v1354, 0
        %v1455 = vsel %vm316, %v1355, 0
        %1457 = vmatprep.subr.mxu0 %v1455
        %1458 = vmatpush1.msra.mxu0 %v1452
        %1459 = vmatprep.subr.mxu0 0.0
        %1460 = vmatpush1.msra.mxu0 0.0
        %1461 = vmatprep.subr.mxu0 0.0
        %1462 = vmatpush1.msra.mxu0 0.0
        %1463 = vmatprep.subr.mxu0 0.0
        %1464 = vmatpush1.msra.mxu0 0.0
        %1465 = vmatprep.subr.mxu0 0.0
        %1466 = vmatpush1.msra.mxu0 0.0
        %1467 = vmatprep.subr.mxu0 0.0
        %1468 = vmatpush1.msra.mxu0 0.0
        %1469 = vmatprep.subr.mxu0 0.0
        %1470 = vmatpush1.msra.mxu0 0.0
        %1471 = vmatprep.subr.mxu0 0.0
        %1472 = vmatpush1.msra.mxu0 0.0
        %1473 = vmatprep.subr.mxu0 0.0
        %1474 = vmatpush1.msra.mxu0 0.0
        %1475 = vmatprep.subr.mxu0 0.0
        %1476 = vmatpush1.msra.mxu0 0.0
        %1477 = vmatprep.subr.mxu0 0.0
        %1478 = vmatpush1.msra.mxu0 0.0
        %1479 = vmatprep.subr.mxu0 0.0
        %1480 = vmatpush1.msra.mxu0 0.0
        %1481 = vmatprep.subr.mxu0 0.0
        %1482 = vmatpush1.msra.mxu0 0.0
        %1483 = vmatprep.subr.mxu0 0.0
        %1484 = vmatpush1.msra.mxu0 0.0
        %1485 = vmatprep.subr.mxu0 0.0
        %1486 = vmatpush1.msra.mxu0 0.0
        %1487 = vmatprep.subr.mxu0 0.0
        %1488 = vmatpush1.msra.mxu0 0.0
        %1489 = vmatprep.subr.mxu0 0.0
        %1490 = vmatpush1.msra.mxu0 0.0
        %1491 = vmatprep.subr.mxu0 0.0
        %1492 = vmatpush1.msra.mxu0 0.0
        %1493 = vmatprep.subr.mxu0 0.0
        %1494 = vmatpush1.msra.mxu0 0.0
        %1495 = vmatprep.subr.mxu0 0.0
        %1496 = vmatpush1.msra.mxu0 0.0
        %1497 = vmatprep.subr.mxu0 0.0
        %1498 = vmatpush1.msra.mxu0 0.0
        %1499 = vmatprep.subr.mxu0 0.0
        %1500 = vmatpush1.msra.mxu0 0.0
        %1501 = vmatprep.subr.mxu0 0.0
        %1502 = vmatpush1.msra.mxu0 0.0
        %1503 = vmatprep.subr.mxu0 0.0
        %1504 = vmatpush1.msra.mxu0 0.0
        %1505 = vmatprep.subr.mxu0 0.0
        %1506 = vmatpush1.msra.mxu0 0.0
        %1507 = vmatprep.subr.mxu0 0.0
        %1508 = vmatpush1.msra.mxu0 0.0
        %1509 = vmatprep.subr.mxu0 0.0
        %1510 = vmatpush1.msra.mxu0 0.0
        %1511 = vmatprep.subr.mxu0 0.0
        %1512 = vmatpush1.msra.mxu0 0.0
        %1513 = vmatprep.subr.mxu0 0.0
        %1514 = vmatpush1.msra.mxu0 0.0
        %1515 = vmatprep.subr.mxu0 0.0
        %1516 = vmatpush1.msra.mxu0 0.0
        %1517 = vmatprep.subr.mxu0 0.0
        %1518 = vmatpush1.msra.mxu0 0.0
        %1519 = vmatprep.subr.mxu0 0.0
        %1520 = vmatpush1.msra.mxu0 0.0
        %1521 = vmatprep.mubr.f32.mxu0 0.0
        %1522 = vmatmul.mubr.f32.gmra.mrb[0].mxu0 %v1449
        %v1523 = vpop.f32.mrb[0].mxu0
        %v1524 = vadd.f32 %v1444, %v1523
        %v1525 = vpop.f32.mrb[0].mxu0
        %v1526 = vadd.f32 %v1446, %v1525
        %1527 = vdwg.mxu0
        %1528 = vrot.lane.b32.xlu0 %v1346, 15
        %v1529 = vpop.permute.xlu0 %1528
        %1530 = vrot.lane.b32.xlu0 %v1347, 15
        %v1531 = vpop.permute.xlu0 %1530
        %v1532 = vsel %vm630, %v1529, %v1531
        %v1533 = vsel %vm630, %v1531, %v1529
        %v1534 = vmul.f32 %v1533, %v639
        %v1535 = vmul.f32 %v1532, %v643
        %s1536 = scalar_lea.vmem %s1, 44
        %v1537 = vld [vmem:[%s1536] sm:$0xf]
        %v1539 = vsel %vm465, %v1537, 0
        %v1542 = vsel %vm316, %v1534, 0
        %v1545 = vsel %vm316, %v1535, 0
        %1547 = vmatprep.subr.mxu0 %v1545
        %1548 = vmatpush1.msra.mxu0 %v1542
        %1549 = vmatprep.subr.mxu0 0.0
        %1550 = vmatpush1.msra.mxu0 0.0
        %1551 = vmatprep.subr.mxu0 0.0
        %1552 = vmatpush1.msra.mxu0 0.0
        %1553 = vmatprep.subr.mxu0 0.0
        %1554 = vmatpush1.msra.mxu0 0.0
        %1555 = vmatprep.subr.mxu0 0.0
        %1556 = vmatpush1.msra.mxu0 0.0
        %1557 = vmatprep.subr.mxu0 0.0
        %1558 = vmatpush1.msra.mxu0 0.0
        %1559 = vmatprep.subr.mxu0 0.0
        %1560 = vmatpush1.msra.mxu0 0.0
        %1561 = vmatprep.subr.mxu0 0.0
        %1562 = vmatpush1.msra.mxu0 0.0
        %1563 = vmatprep.subr.mxu0 0.0
        %1564 = vmatpush1.msra.mxu0 0.0
        %1565 = vmatprep.subr.mxu0 0.0
        %1566 = vmatpush1.msra.mxu0 0.0
        %1567 = vmatprep.subr.mxu0 0.0
        %1568 = vmatpush1.msra.mxu0 0.0
        %1569 = vmatprep.subr.mxu0 0.0
        %1570 = vmatpush1.msra.mxu0 0.0
        %1571 = vmatprep.subr.mxu0 0.0
        %1572 = vmatpush1.msra.mxu0 0.0
        %1573 = vmatprep.subr.mxu0 0.0
        %1574 = vmatpush1.msra.mxu0 0.0
        %1575 = vmatprep.subr.mxu0 0.0
        %1576 = vmatpush1.msra.mxu0 0.0
        %1577 = vmatprep.subr.mxu0 0.0
        %1578 = vmatpush1.msra.mxu0 0.0
        %1579 = vmatprep.subr.mxu0 0.0
        %1580 = vmatpush1.msra.mxu0 0.0
        %1581 = vmatprep.subr.mxu0 0.0
        %1582 = vmatpush1.msra.mxu0 0.0
        %1583 = vmatprep.subr.mxu0 0.0
        %1584 = vmatpush1.msra.mxu0 0.0
        %1585 = vmatprep.subr.mxu0 0.0
        %1586 = vmatpush1.msra.mxu0 0.0
        %1587 = vmatprep.subr.mxu0 0.0
        %1588 = vmatpush1.msra.mxu0 0.0
        %1589 = vmatprep.subr.mxu0 0.0
        %1590 = vmatpush1.msra.mxu0 0.0
        %1591 = vmatprep.subr.mxu0 0.0
        %1592 = vmatpush1.msra.mxu0 0.0
        %1593 = vmatprep.subr.mxu0 0.0
        %1594 = vmatpush1.msra.mxu0 0.0
        %1595 = vmatprep.subr.mxu0 0.0
        %1596 = vmatpush1.msra.mxu0 0.0
        %1597 = vmatprep.subr.mxu0 0.0
        %1598 = vmatpush1.msra.mxu0 0.0
        %1599 = vmatprep.subr.mxu0 0.0
        %1600 = vmatpush1.msra.mxu0 0.0
        %1601 = vmatprep.subr.mxu0 0.0
        %1602 = vmatpush1.msra.mxu0 0.0
        %1603 = vmatprep.subr.mxu0 0.0
        %1604 = vmatpush1.msra.mxu0 0.0
        %1605 = vmatprep.subr.mxu0 0.0
        %1606 = vmatpush1.msra.mxu0 0.0
        %1607 = vmatprep.subr.mxu0 0.0
        %1608 = vmatpush1.msra.mxu0 0.0
        %1609 = vmatprep.subr.mxu0 0.0
        %1610 = vmatpush1.msra.mxu0 0.0
        %1611 = vmatprep.mubr.f32.mxu0 0.0
        %1612 = vmatmul.mubr.f32.gmra.mrb[0].mxu0 %v1539
        %v1613 = vpop.f32.mrb[0].mxu0
        %v1614 = vadd.f32 0.0, %v1613
        %v1615 = vpop.f32.mrb[0].mxu0
        %v1616 = vadd.f32 0.0, %v1615
        %1617 = vdwg.mxu0
        %v1618 = vadd.f32 %v1524, %v1614
        %v1619 = vadd.f32 %v1526, %v1616
        %1620 = vrot.lane.b32.xlu0 %v1346, 1
        %v1621 = vpop.permute.xlu0 %1620
        %1622 = vrot.lane.b32.xlu0 %v1347, 1
        %v1623 = vpop.permute.xlu0 %1622
        %v1624 = vsel %vm736, %v1621, %v1623
        %v1625 = vsel %vm736, %v1623, %v1621
        %v1626 = vmul.f32 %v1625, %v745
        %v1627 = vmul.f32 %v1624, %v749
        %s1628 = scalar_lea.vmem %s1, 48
        %v1629 = vld [vmem:[%s1628] sm:$0xf]
        %v1631 = vsel %vm465, %v1629, 0
        %v1634 = vsel %vm316, %v1626, 0
        %v1637 = vsel %vm316, %v1627, 0
        %1639 = vmatprep.subr.mxu0 %v1637
        %1640 = vmatpush1.msra.mxu0 %v1634
        %1641 = vmatprep.subr.mxu0 0.0
        %1642 = vmatpush1.msra.mxu0 0.0
        %1643 = vmatprep.subr.mxu0 0.0
        %1644 = vmatpush1.msra.mxu0 0.0
        %1645 = vmatprep.subr.mxu0 0.0
        %1646 = vmatpush1.msra.mxu0 0.0
        %1647 = vmatprep.subr.mxu0 0.0
        %1648 = vmatpush1.msra.mxu0 0.0
        %1649 = vmatprep.subr.mxu0 0.0
        %1650 = vmatpush1.msra.mxu0 0.0
        %1651 = vmatprep.subr.mxu0 0.0
        %1652 = vmatpush1.msra.mxu0 0.0
        %1653 = vmatprep.subr.mxu0 0.0
        %1654 = vmatpush1.msra.mxu0 0.0
        %1655 = vmatprep.subr.mxu0 0.0
        %1656 = vmatpush1.msra.mxu0 0.0
        %1657 = vmatprep.subr.mxu0 0.0
        %1658 = vmatpush1.msra.mxu0 0.0
        %1659 = vmatprep.subr.mxu0 0.0
        %1660 = vmatpush1.msra.mxu0 0.0
        %1661 = vmatprep.subr.mxu0 0.0
        %1662 = vmatpush1.msra.mxu0 0.0
        %1663 = vmatprep.subr.mxu0 0.0
        %1664 = vmatpush1.msra.mxu0 0.0
        %1665 = vmatprep.subr.mxu0 0.0
        %1666 = vmatpush1.msra.mxu0 0.0
        %1667 = vmatprep.subr.mxu0 0.0
        %1668 = vmatpush1.msra.mxu0 0.0
        %1669 = vmatprep.subr.mxu0 0.0
        %1670 = vmatpush1.msra.mxu0 0.0
        %1671 = vmatprep.subr.mxu0 0.0
        %1672 = vmatpush1.msra.mxu0 0.0
        %1673 = vmatprep.subr.mxu0 0.0
        %1674 = vmatpush1.msra.mxu0 0.0
        %1675 = vmatprep.subr.mxu0 0.0
        %1676 = vmatpush1.msra.mxu0 0.0
        %1677 = vmatprep.subr.mxu0 0.0
        %1678 = vmatpush1.msra.mxu0 0.0
        %1679 = vmatprep.subr.mxu0 0.0
        %1680 = vmatpush1.msra.mxu0 0.0
        %1681 = vmatprep.subr.mxu0 0.0
        %1682 = vmatpush1.msra.mxu0 0.0
        %1683 = vmatprep.subr.mxu0 0.0
        %1684 = vmatpush1.msra.mxu0 0.0
        %1685 = vmatprep.subr.mxu0 0.0
        %1686 = vmatpush1.msra.mxu0 0.0
        %1687 = vmatprep.subr.mxu0 0.0
        %1688 = vmatpush1.msra.mxu0 0.0
        %1689 = vmatprep.subr.mxu0 0.0
        %1690 = vmatpush1.msra.mxu0 0.0
        %1691 = vmatprep.subr.mxu0 0.0
        %1692 = vmatpush1.msra.mxu0 0.0
        %1693 = vmatprep.subr.mxu0 0.0
        %1694 = vmatpush1.msra.mxu0 0.0
        %1695 = vmatprep.subr.mxu0 0.0
        %1696 = vmatpush1.msra.mxu0 0.0
        %1697 = vmatprep.subr.mxu0 0.0
        %1698 = vmatpush1.msra.mxu0 0.0
        %1699 = vmatprep.subr.mxu0 0.0
        %1700 = vmatpush1.msra.mxu0 0.0
        %1701 = vmatprep.subr.mxu0 0.0
        %1702 = vmatpush1.msra.mxu0 0.0
        %1703 = vmatprep.mubr.f32.mxu0 0.0
        %1704 = vmatmul.mubr.f32.gmra.mrb[0].mxu0 %v1631
        %v1705 = vpop.f32.mrb[0].mxu0
        %v1706 = vadd.f32 0.0, %v1705
        %v1707 = vpop.f32.mrb[0].mxu0
        %v1708 = vadd.f32 0.0, %v1707
        %1709 = vdwg.mxu0
        %v1710 = vadd.f32 %v1618, %v1706
        %v1711 = vadd.f32 %v1619, %v1708
        %s1712 = scalar_lea.vmem %s1, 52
        %v1713 = vld [vmem:[%s1712] sm:$0xf]
        %v1715 = vsel %vm465, %v1713, 0
        %v1718 = vsel %vm316, %v1346, 0
        %v1721 = vsel %vm316, %v1347, 0
        %1723 = vmatprep.subr.mxu0 %v1721
        %1724 = vmatpush1.msra.mxu0 %v1718
        %1725 = vmatprep.subr.mxu0 0.0
        %1726 = vmatpush1.msra.mxu0 0.0
        %1727 = vmatprep.subr.mxu0 0.0
        %1728 = vmatpush1.msra.mxu0 0.0
        %1729 = vmatprep.subr.mxu0 0.0
        %1730 = vmatpush1.msra.mxu0 0.0
        %1731 = vmatprep.subr.mxu0 0.0
        %1732 = vmatpush1.msra.mxu0 0.0
        %1733 = vmatprep.subr.mxu0 0.0
        %1734 = vmatpush1.msra.mxu0 0.0
        %1735 = vmatprep.subr.mxu0 0.0
        %1736 = vmatpush1.msra.mxu0 0.0
        %1737 = vmatprep.subr.mxu0 0.0
        %1738 = vmatpush1.msra.mxu0 0.0
        %1739 = vmatprep.subr.mxu0 0.0
        %1740 = vmatpush1.msra.mxu0 0.0
        %1741 = vmatprep.subr.mxu0 0.0
        %1742 = vmatpush1.msra.mxu0 0.0
        %1743 = vmatprep.subr.mxu0 0.0
        %1744 = vmatpush1.msra.mxu0 0.0
        %1745 = vmatprep.subr.mxu0 0.0
        %1746 = vmatpush1.msra.mxu0 0.0
        %1747 = vmatprep.subr.mxu0 0.0
        %1748 = vmatpush1.msra.mxu0 0.0
        %1749 = vmatprep.subr.mxu0 0.0
        %1750 = vmatpush1.msra.mxu0 0.0
        %1751 = vmatprep.subr.mxu0 0.0
        %1752 = vmatpush1.msra.mxu0 0.0
        %1753 = vmatprep.subr.mxu0 0.0
        %1754 = vmatpush1.msra.mxu0 0.0
        %1755 = vmatprep.subr.mxu0 0.0
        %1756 = vmatpush1.msra.mxu0 0.0
        %1757 = vmatprep.subr.mxu0 0.0
        %1758 = vmatpush1.msra.mxu0 0.0
        %1759 = vmatprep.subr.mxu0 0.0
        %1760 = vmatpush1.msra.mxu0 0.0
        %1761 = vmatprep.subr.mxu0 0.0
        %1762 = vmatpush1.msra.mxu0 0.0
        %1763 = vmatprep.subr.mxu0 0.0
        %1764 = vmatpush1.msra.mxu0 0.0
        %1765 = vmatprep.subr.mxu0 0.0
        %1766 = vmatpush1.msra.mxu0 0.0
        %1767 = vmatprep.subr.mxu0 0.0
        %1768 = vmatpush1.msra.mxu0 0.0
        %1769 = vmatprep.subr.mxu0 0.0
        %1770 = vmatpush1.msra.mxu0 0.0
        %1771 = vmatprep.subr.mxu0 0.0
        %1772 = vmatpush1.msra.mxu0 0.0
        %1773 = vmatprep.subr.mxu0 0.0
        %1774 = vmatpush1.msra.mxu0 0.0
        %1775 = vmatprep.subr.mxu0 0.0
        %1776 = vmatpush1.msra.mxu0 0.0
        %1777 = vmatprep.subr.mxu0 0.0
        %1778 = vmatpush1.msra.mxu0 0.0
        %1779 = vmatprep.subr.mxu0 0.0
        %1780 = vmatpush1.msra.mxu0 0.0
        %1781 = vmatprep.subr.mxu0 0.0
        %1782 = vmatpush1.msra.mxu0 0.0
        %1783 = vmatprep.subr.mxu0 0.0
        %1784 = vmatpush1.msra.mxu0 0.0
        %1785 = vmatprep.subr.mxu0 0.0
        %1786 = vmatpush1.msra.mxu0 0.0
        %1787 = vmatprep.mubr.f32.mxu0 0.0
        %1788 = vmatmul.mubr.f32.gmra.mrb[0].mxu0 %v1715
        %v1789 = vpop.f32.mrb[0].mxu0
        %v1790 = vadd.f32 0.0, %v1789
        %v1791 = vpop.f32.mrb[0].mxu0
        %v1792 = vadd.f32 0.0, %v1791
        %1793 = vdwg.mxu0
        %v1794 = vadd.f32 %v1710, %v1790
        %v1795 = vadd.f32 %v1711, %v1792
        %1796 = vrot.lane.b32.xlu0 %v1346, 127
        %v1797 = vpop.permute.xlu0 %1796
        %1798 = vrot.lane.b32.xlu0 %v1347, 127
        %v1799 = vpop.permute.xlu0 %1798
        %v1800 = vsel %vm926, %v1797, %v1799
        %v1801 = vsel %vm926, %v1799, %v1797
        %v1802 = vmul.f32 %v1800, %v935
        %v1803 = vmul.f32 %v1801, %v939
        %s1804 = scalar_lea.vmem %s1, 56
        %v1805 = vld [vmem:[%s1804] sm:$0xf]
        %v1807 = vsel %vm465, %v1805, 0
        %v1810 = vsel %vm316, %v1802, 0
        %v1813 = vsel %vm316, %v1803, 0
        %1815 = vmatprep.subr.mxu0 %v1813
        %1816 = vmatpush1.msra.mxu0 %v1810
        %1817 = vmatprep.subr.mxu0 0.0
        %1818 = vmatpush1.msra.mxu0 0.0
        %1819 = vmatprep.subr.mxu0 0.0
        %1820 = vmatpush1.msra.mxu0 0.0
        %1821 = vmatprep.subr.mxu0 0.0
        %1822 = vmatpush1.msra.mxu0 0.0
        %1823 = vmatprep.subr.mxu0 0.0
        %1824 = vmatpush1.msra.mxu0 0.0
        %1825 = vmatprep.subr.mxu0 0.0
        %1826 = vmatpush1.msra.mxu0 0.0
        %1827 = vmatprep.subr.mxu0 0.0
        %1828 = vmatpush1.msra.mxu0 0.0
        %1829 = vmatprep.subr.mxu0 0.0
        %1830 = vmatpush1.msra.mxu0 0.0
        %1831 = vmatprep.subr.mxu0 0.0
        %1832 = vmatpush1.msra.mxu0 0.0
        %1833 = vmatprep.subr.mxu0 0.0
        %1834 = vmatpush1.msra.mxu0 0.0
        %1835 = vmatprep.subr.mxu0 0.0
        %1836 = vmatpush1.msra.mxu0 0.0
        %1837 = vmatprep.subr.mxu0 0.0
        %1838 = vmatpush1.msra.mxu0 0.0
        %1839 = vmatprep.subr.mxu0 0.0
        %1840 = vmatpush1.msra.mxu0 0.0
        %1841 = vmatprep.subr.mxu0 0.0
        %1842 = vmatpush1.msra.mxu0 0.0
        %1843 = vmatprep.subr.mxu0 0.0
        %1844 = vmatpush1.msra.mxu0 0.0
        %1845 = vmatprep.subr.mxu0 0.0
        %1846 = vmatpush1.msra.mxu0 0.0
        %1847 = vmatprep.subr.mxu0 0.0
        %1848 = vmatpush1.msra.mxu0 0.0
        %1849 = vmatprep.subr.mxu0 0.0
        %1850 = vmatpush1.msra.mxu0 0.0
        %1851 = vmatprep.subr.mxu0 0.0
        %1852 = vmatpush1.msra.mxu0 0.0
        %1853 = vmatprep.subr.mxu0 0.0
        %1854 = vmatpush1.msra.mxu0 0.0
        %1855 = vmatprep.subr.mxu0 0.0
        %1856 = vmatpush1.msra.mxu0 0.0
        %1857 = vmatprep.subr.mxu0 0.0
        %1858 = vmatpush1.msra.mxu0 0.0
        %1859 = vmatprep.subr.mxu0 0.0
        %1860 = vmatpush1.msra.mxu0 0.0
        %1861 = vmatprep.subr.mxu0 0.0
        %1862 = vmatpush1.msra.mxu0 0.0
        %1863 = vmatprep.subr.mxu0 0.0
        %1864 = vmatpush1.msra.mxu0 0.0
        %1865 = vmatprep.subr.mxu0 0.0
        %1866 = vmatpush1.msra.mxu0 0.0
        %1867 = vmatprep.subr.mxu0 0.0
        %1868 = vmatpush1.msra.mxu0 0.0
        %1869 = vmatprep.subr.mxu0 0.0
        %1870 = vmatpush1.msra.mxu0 0.0
        %1871 = vmatprep.subr.mxu0 0.0
        %1872 = vmatpush1.msra.mxu0 0.0
        %1873 = vmatprep.subr.mxu0 0.0
        %1874 = vmatpush1.msra.mxu0 0.0
        %1875 = vmatprep.subr.mxu0 0.0
        %1876 = vmatpush1.msra.mxu0 0.0
        %1877 = vmatprep.subr.mxu0 0.0
        %1878 = vmatpush1.msra.mxu0 0.0
        %1879 = vmatprep.mubr.f32.mxu0 0.0
        %1880 = vmatmul.mubr.f32.gmra.mrb[0].mxu0 %v1807
        %v1881 = vpop.f32.mrb[0].mxu0
        %v1882 = vadd.f32 0.0, %v1881
        %v1883 = vpop.f32.mrb[0].mxu0
        %v1884 = vadd.f32 0.0, %v1883
        %1885 = vdwg.mxu0
        %v1886 = vadd.f32 %v1794, %v1882
        %v1887 = vadd.f32 %v1795, %v1884
        %1888 = vrot.lane.b32.xlu0 %v1346, 113
        %v1889 = vpop.permute.xlu0 %1888
        %1890 = vrot.lane.b32.xlu0 %v1347, 113
        %v1891 = vpop.permute.xlu0 %1890
        %v1892 = vsel %vm1032, %v1889, %v1891
        %v1893 = vsel %vm1032, %v1891, %v1889
        %v1894 = vmul.f32 %v1892, %v1041
        %v1895 = vmul.f32 %v1893, %v1045
        %s1896 = scalar_lea.vmem %s1, 60
        %v1897 = vld [vmem:[%s1896] sm:$0xf]
        %v1899 = vsel %vm465, %v1897, 0
        %v1902 = vsel %vm316, %v1894, 0
        %v1905 = vsel %vm316, %v1895, 0
        %1907 = vmatprep.subr.mxu0 %v1905
        %1908 = vmatpush1.msra.mxu0 %v1902
        %1909 = vmatprep.subr.mxu0 0.0
        %1910 = vmatpush1.msra.mxu0 0.0
        %1911 = vmatprep.subr.mxu0 0.0
        %1912 = vmatpush1.msra.mxu0 0.0
        %1913 = vmatprep.subr.mxu0 0.0
        %1914 = vmatpush1.msra.mxu0 0.0
        %1915 = vmatprep.subr.mxu0 0.0
        %1916 = vmatpush1.msra.mxu0 0.0
        %1917 = vmatprep.subr.mxu0 0.0
        %1918 = vmatpush1.msra.mxu0 0.0
        %1919 = vmatprep.subr.mxu0 0.0
        %1920 = vmatpush1.msra.mxu0 0.0
        %1921 = vmatprep.subr.mxu0 0.0
        %1922 = vmatpush1.msra.mxu0 0.0
        %1923 = vmatprep.subr.mxu0 0.0
        %1924 = vmatpush1.msra.mxu0 0.0
        %1925 = vmatprep.subr.mxu0 0.0
        %1926 = vmatpush1.msra.mxu0 0.0
        %1927 = vmatprep.subr.mxu0 0.0
        %1928 = vmatpush1.msra.mxu0 0.0
        %1929 = vmatprep.subr.mxu0 0.0
        %1930 = vmatpush1.msra.mxu0 0.0
        %1931 = vmatprep.subr.mxu0 0.0
        %1932 = vmatpush1.msra.mxu0 0.0
        %1933 = vmatprep.subr.mxu0 0.0
        %1934 = vmatpush1.msra.mxu0 0.0
        %1935 = vmatprep.subr.mxu0 0.0
        %1936 = vmatpush1.msra.mxu0 0.0
        %1937 = vmatprep.subr.mxu0 0.0
        %1938 = vmatpush1.msra.mxu0 0.0
        %1939 = vmatprep.subr.mxu0 0.0
        %1940 = vmatpush1.msra.mxu0 0.0
        %1941 = vmatprep.subr.mxu0 0.0
        %1942 = vmatpush1.msra.mxu0 0.0
        %1943 = vmatprep.subr.mxu0 0.0
        %1944 = vmatpush1.msra.mxu0 0.0
        %1945 = vmatprep.subr.mxu0 0.0
        %1946 = vmatpush1.msra.mxu0 0.0
        %1947 = vmatprep.subr.mxu0 0.0
        %1948 = vmatpush1.msra.mxu0 0.0
        %1949 = vmatprep.subr.mxu0 0.0
        %1950 = vmatpush1.msra.mxu0 0.0
        %1951 = vmatprep.subr.mxu0 0.0
        %1952 = vmatpush1.msra.mxu0 0.0
        %1953 = vmatprep.subr.mxu0 0.0
        %1954 = vmatpush1.msra.mxu0 0.0
        %1955 = vmatprep.subr.mxu0 0.0
        %1956 = vmatpush1.msra.mxu0 0.0
        %1957 = vmatprep.subr.mxu0 0.0
        %1958 = vmatpush1.msra.mxu0 0.0
        %1959 = vmatprep.subr.mxu0 0.0
        %1960 = vmatpush1.msra.mxu0 0.0
        %1961 = vmatprep.subr.mxu0 0.0
        %1962 = vmatpush1.msra.mxu0 0.0
        %1963 = vmatprep.subr.mxu0 0.0
        %1964 = vmatpush1.msra.mxu0 0.0
        %1965 = vmatprep.subr.mxu0 0.0
        %1966 = vmatpush1.msra.mxu0 0.0
        %1967 = vmatprep.subr.mxu0 0.0
        %1968 = vmatpush1.msra.mxu0 0.0
        %1969 = vmatprep.subr.mxu0 0.0
        %1970 = vmatpush1.msra.mxu0 0.0
        %1971 = vmatprep.mubr.f32.mxu0 0.0
        %1972 = vmatmul.mubr.f32.gmra.mrb[0].mxu0 %v1899
        %v1973 = vpop.f32.mrb[0].mxu0
        %v1974 = vadd.f32 0.0, %v1973
        %v1975 = vpop.f32.mrb[0].mxu0
        %v1976 = vadd.f32 0.0, %v1975
        %1977 = vdwg.mxu0
        %v1978 = vadd.f32 %v1886, %v1974
        %v1979 = vadd.f32 %v1887, %v1976
        %1980 = vrot.lane.b32.xlu0 %v1346, 112
        %v1981 = vpop.permute.xlu0 %1980
        %1982 = vrot.lane.b32.xlu0 %v1347, 112
        %v1983 = vpop.permute.xlu0 %1982
        %v1984 = vsel %vm1138, %v1981, %v1983
        %v1985 = vsel %vm1138, %v1983, %v1981
        %v1986 = vmul.f32 %v1984, %v1147
        %v1987 = vmul.f32 %v1985, %v1151
        %s1988 = scalar_lea.vmem %s1, 64
        %v1989 = vld [vmem:[%s1988] sm:$0xf]
        %v1991 = vsel %vm465, %v1989, 0
        %v1994 = vsel %vm316, %v1986, 0
        %v1997 = vsel %vm316, %v1987, 0
        %1999 = vmatprep.subr.mxu0 %v1997
        %2000 = vmatpush1.msra.mxu0 %v1994
        %2001 = vmatprep.subr.mxu0 0.0
        %2002 = vmatpush1.msra.mxu0 0.0
        %2003 = vmatprep.subr.mxu0 0.0
        %2004 = vmatpush1.msra.mxu0 0.0
        %2005 = vmatprep.subr.mxu0 0.0
        %2006 = vmatpush1.msra.mxu0 0.0
        %2007 = vmatprep.subr.mxu0 0.0
        %2008 = vmatpush1.msra.mxu0 0.0
        %2009 = vmatprep.subr.mxu0 0.0
        %2010 = vmatpush1.msra.mxu0 0.0
        %2011 = vmatprep.subr.mxu0 0.0
        %2012 = vmatpush1.msra.mxu0 0.0
        %2013 = vmatprep.subr.mxu0 0.0
        %2014 = vmatpush1.msra.mxu0 0.0
        %2015 = vmatprep.subr.mxu0 0.0
        %2016 = vmatpush1.msra.mxu0 0.0
        %2017 = vmatprep.subr.mxu0 0.0
        %2018 = vmatpush1.msra.mxu0 0.0
        %2019 = vmatprep.subr.mxu0 0.0
        %2020 = vmatpush1.msra.mxu0 0.0
        %2021 = vmatprep.subr.mxu0 0.0
        %2022 = vmatpush1.msra.mxu0 0.0
        %2023 = vmatprep.subr.mxu0 0.0
        %2024 = vmatpush1.msra.mxu0 0.0
        %2025 = vmatprep.subr.mxu0 0.0
        %2026 = vmatpush1.msra.mxu0 0.0
        %2027 = vmatprep.subr.mxu0 0.0
        %2028 = vmatpush1.msra.mxu0 0.0
        %2029 = vmatprep.subr.mxu0 0.0
        %2030 = vmatpush1.msra.mxu0 0.0
        %2031 = vmatprep.subr.mxu0 0.0
        %2032 = vmatpush1.msra.mxu0 0.0
        %2033 = vmatprep.subr.mxu0 0.0
        %2034 = vmatpush1.msra.mxu0 0.0
        %2035 = vmatprep.subr.mxu0 0.0
        %2036 = vmatpush1.msra.mxu0 0.0
        %2037 = vmatprep.subr.mxu0 0.0
        %2038 = vmatpush1.msra.mxu0 0.0
        %2039 = vmatprep.subr.mxu0 0.0
        %2040 = vmatpush1.msra.mxu0 0.0
        %2041 = vmatprep.subr.mxu0 0.0
        %2042 = vmatpush1.msra.mxu0 0.0
        %2043 = vmatprep.subr.mxu0 0.0
        %2044 = vmatpush1.msra.mxu0 0.0
        %2045 = vmatprep.subr.mxu0 0.0
        %2046 = vmatpush1.msra.mxu0 0.0
        %2047 = vmatprep.subr.mxu0 0.0
        %2048 = vmatpush1.msra.mxu0 0.0
        %2049 = vmatprep.subr.mxu0 0.0
        %2050 = vmatpush1.msra.mxu0 0.0
        %2051 = vmatprep.subr.mxu0 0.0
        %2052 = vmatpush1.msra.mxu0 0.0
        %2053 = vmatprep.subr.mxu0 0.0
        %2054 = vmatpush1.msra.mxu0 0.0
        %2055 = vmatprep.subr.mxu0 0.0
        %2056 = vmatpush1.msra.mxu0 0.0
        %2057 = vmatprep.subr.mxu0 0.0
        %2058 = vmatpush1.msra.mxu0 0.0
        %2059 = vmatprep.subr.mxu0 0.0
        %2060 = vmatpush1.msra.mxu0 0.0
        %2061 = vmatprep.subr.mxu0 0.0
        %2062 = vmatpush1.msra.mxu0 0.0
        %2063 = vmatprep.mubr.f32.mxu0 0.0
        %2064 = vmatmul.mubr.f32.gmra.mrb[0].mxu0 %v1991
        %v2065 = vpop.f32.mrb[0].mxu0
        %v2066 = vadd.f32 0.0, %v2065
        %v2067 = vpop.f32.mrb[0].mxu0
        %v2068 = vadd.f32 0.0, %v2067
        %2069 = vdwg.mxu0
        %v2070 = vadd.f32 %v1978, %v2066
        %v2071 = vadd.f32 %v1979, %v2068
        %2072 = vrot.lane.b32.xlu0 %v1346, 111
        %v2073 = vpop.permute.xlu0 %2072
        %2074 = vrot.lane.b32.xlu0 %v1347, 111
        %v2075 = vpop.permute.xlu0 %2074
        %v2076 = vsel %vm1244, %v2073, %v2075
        %v2077 = vsel %vm1244, %v2075, %v2073
        %v2078 = vmul.f32 %v2076, %v1253
        %v2079 = vmul.f32 %v2077, %v1257
        %s2080 = scalar_lea.vmem %s1, 68
        %v2081 = vld [vmem:[%s2080] sm:$0xf]
        %v2083 = vsel %vm465, %v2081, 0
        %v2086 = vsel %vm316, %v2078, 0
        %v2089 = vsel %vm316, %v2079, 0
        %2091 = vmatprep.subr.mxu0 %v2089
        %2092 = vmatpush1.msra.mxu0 %v2086
        %2093 = vmatprep.subr.mxu0 0.0
        %2094 = vmatpush1.msra.mxu0 0.0
        %2095 = vmatprep.subr.mxu0 0.0
        %2096 = vmatpush1.msra.mxu0 0.0
        %2097 = vmatprep.subr.mxu0 0.0
        %2098 = vmatpush1.msra.mxu0 0.0
        %2099 = vmatprep.subr.mxu0 0.0
        %2100 = vmatpush1.msra.mxu0 0.0
        %2101 = vmatprep.subr.mxu0 0.0
        %2102 = vmatpush1.msra.mxu0 0.0
        %2103 = vmatprep.subr.mxu0 0.0
        %2104 = vmatpush1.msra.mxu0 0.0
        %2105 = vmatprep.subr.mxu0 0.0
        %2106 = vmatpush1.msra.mxu0 0.0
        %2107 = vmatprep.subr.mxu0 0.0
        %2108 = vmatpush1.msra.mxu0 0.0
        %2109 = vmatprep.subr.mxu0 0.0
        %2110 = vmatpush1.msra.mxu0 0.0
        %2111 = vmatprep.subr.mxu0 0.0
        %2112 = vmatpush1.msra.mxu0 0.0
        %2113 = vmatprep.subr.mxu0 0.0
        %2114 = vmatpush1.msra.mxu0 0.0
        %2115 = vmatprep.subr.mxu0 0.0
        %2116 = vmatpush1.msra.mxu0 0.0
        %2117 = vmatprep.subr.mxu0 0.0
        %2118 = vmatpush1.msra.mxu0 0.0
        %2119 = vmatprep.subr.mxu0 0.0
        %2120 = vmatpush1.msra.mxu0 0.0
        %2121 = vmatprep.subr.mxu0 0.0
        %2122 = vmatpush1.msra.mxu0 0.0
        %2123 = vmatprep.subr.mxu0 0.0
        %2124 = vmatpush1.msra.mxu0 0.0
        %2125 = vmatprep.subr.mxu0 0.0
        %2126 = vmatpush1.msra.mxu0 0.0
        %2127 = vmatprep.subr.mxu0 0.0
        %2128 = vmatpush1.msra.mxu0 0.0
        %2129 = vmatprep.subr.mxu0 0.0
        %2130 = vmatpush1.msra.mxu0 0.0
        %2131 = vmatprep.subr.mxu0 0.0
        %2132 = vmatpush1.msra.mxu0 0.0
        %2133 = vmatprep.subr.mxu0 0.0
        %2134 = vmatpush1.msra.mxu0 0.0
        %2135 = vmatprep.subr.mxu0 0.0
        %2136 = vmatpush1.msra.mxu0 0.0
        %2137 = vmatprep.subr.mxu0 0.0
        %2138 = vmatpush1.msra.mxu0 0.0
        %2139 = vmatprep.subr.mxu0 0.0
        %2140 = vmatpush1.msra.mxu0 0.0
        %2141 = vmatprep.subr.mxu0 0.0
        %2142 = vmatpush1.msra.mxu0 0.0
        %2143 = vmatprep.subr.mxu0 0.0
        %2144 = vmatpush1.msra.mxu0 0.0
        %2145 = vmatprep.subr.mxu0 0.0
        %2146 = vmatpush1.msra.mxu0 0.0
        %2147 = vmatprep.subr.mxu0 0.0
        %2148 = vmatpush1.msra.mxu0 0.0
        %2149 = vmatprep.subr.mxu0 0.0
        %2150 = vmatpush1.msra.mxu0 0.0
        %2151 = vmatprep.subr.mxu0 0.0
        %2152 = vmatpush1.msra.mxu0 0.0
        %2153 = vmatprep.subr.mxu0 0.0
        %2154 = vmatpush1.msra.mxu0 0.0
        %2155 = vmatprep.mubr.f32.mxu0 0.0
        %2156 = vmatmul.mubr.f32.gmra.mrb[0].mxu0 %v2083
        %v2157 = vpop.f32.mrb[0].mxu0
        %v2158 = vadd.f32 0.0, %v2157
        %v2159 = vpop.f32.mrb[0].mxu0
        %v2160 = vadd.f32 0.0, %v2159
        %2161 = vdwg.mxu0
        %v2162 = vadd.f32 %v2070, %v2158
        %v2163 = vadd.f32 %v2071, %v2160
        %v2164 = vadd.f32 %v359, %v2162
        %v2165 = vadd.f32 %v360, %v2163
        %2166 = vrot.lane.b32.xlu0 %v2164, 17
        %v2167 = vpop.permute.xlu0 %2166
        %2168 = vrot.lane.b32.xlu0 %v2165, 17
        %v2169 = vpop.permute.xlu0 %2168
        %v2170 = vsel %vm423, %v2167, %v2169
        %v2171 = vsel %vm423, %v2169, %v2167
        %v2172 = vmul.f32 %v2171, %v431
        %v2173 = vmul.f32 %v2170, %v435
        %s2174 = scalar_lea.vmem %s1, 72
        %v2175 = vld [vmem:[%s2174] sm:$0xf]
        %2176 = vrot.lane.b32.xlu0 %v2164, 16
        %v2177 = vpop.permute.xlu0 %2176
        %2178 = vrot.lane.b32.xlu0 %v2165, 16
        %v2179 = vpop.permute.xlu0 %2178
        %v2180 = vsel %vm445, %v2177, %v2179
        %v2181 = vsel %vm445, %v2179, %v2177
        %v2182 = vmul.f32 %v2181, %v454
        %v2183 = vmul.f32 %v2180, %v458
        %s2184 = scalar_lea.vmem %s1, 76
        %v2185 = vld [vmem:[%s2184] sm:$0xf]
        %v2187 = vsel %vm465, %v2185, 0
        %v2190 = vsel %vm316, %v2182, 0
        %v2193 = vsel %vm316, %v2183, 0
        %2195 = vmatprep.subr.mxu0 %v2193
        %2196 = vmatpush1.msra.mxu0 %v2190
        %2197 = vmatprep.subr.mxu0 0.0
        %2198 = vmatpush1.msra.mxu0 0.0
        %2199 = vmatprep.subr.mxu0 0.0
        %2200 = vmatpush1.msra.mxu0 0.0
        %2201 = vmatprep.subr.mxu0 0.0
        %2202 = vmatpush1.msra.mxu0 0.0
        %2203 = vmatprep.subr.mxu0 0.0
        %2204 = vmatpush1.msra.mxu0 0.0
        %2205 = vmatprep.subr.mxu0 0.0
        %2206 = vmatpush1.msra.mxu0 0.0
        %2207 = vmatprep.subr.mxu0 0.0
        %2208 = vmatpush1.msra.mxu0 0.0
        %2209 = vmatprep.subr.mxu0 0.0
        %2210 = vmatpush1.msra.mxu0 0.0
        %2211 = vmatprep.subr.mxu0 0.0
        %2212 = vmatpush1.msra.mxu0 0.0
        %2213 = vmatprep.subr.mxu0 0.0
        %2214 = vmatpush1.msra.mxu0 0.0
        %2215 = vmatprep.subr.mxu0 0.0
        %2216 = vmatpush1.msra.mxu0 0.0
        %2217 = vmatprep.subr.mxu0 0.0
        %2218 = vmatpush1.msra.mxu0 0.0
        %2219 = vmatprep.subr.mxu0 0.0
        %2220 = vmatpush1.msra.mxu0 0.0
        %2221 = vmatprep.subr.mxu0 0.0
        %2222 = vmatpush1.msra.mxu0 0.0
        %2223 = vmatprep.subr.mxu0 0.0
        %2224 = vmatpush1.msra.mxu0 0.0
        %2225 = vmatprep.subr.mxu0 0.0
        %2226 = vmatpush1.msra.mxu0 0.0
        %2227 = vmatprep.subr.mxu0 0.0
        %2228 = vmatpush1.msra.mxu0 0.0
        %2229 = vmatprep.subr.mxu0 0.0
        %2230 = vmatpush1.msra.mxu0 0.0
        %2231 = vmatprep.subr.mxu0 0.0
        %2232 = vmatpush1.msra.mxu0 0.0
        %2233 = vmatprep.subr.mxu0 0.0
        %2234 = vmatpush1.msra.mxu0 0.0
        %2235 = vmatprep.subr.mxu0 0.0
        %2236 = vmatpush1.msra.mxu0 0.0
        %2237 = vmatprep.subr.mxu0 0.0
        %2238 = vmatpush1.msra.mxu0 0.0
        %2239 = vmatprep.subr.mxu0 0.0
        %2240 = vmatpush1.msra.mxu0 0.0
        %2241 = vmatprep.subr.mxu0 0.0
        %2242 = vmatpush1.msra.mxu0 0.0
        %2243 = vmatprep.subr.mxu0 0.0
        %2244 = vmatpush1.msra.mxu0 0.0
        %2245 = vmatprep.subr.mxu0 0.0
        %2246 = vmatpush1.msra.mxu0 0.0
        %2247 = vmatprep.subr.mxu0 0.0
        %2248 = vmatpush1.msra.mxu0 0.0
        %2249 = vmatprep.subr.mxu0 0.0
        %2250 = vmatpush1.msra.mxu0 0.0
        %2251 = vmatprep.subr.mxu0 0.0
        %2252 = vmatpush1.msra.mxu0 0.0
        %2253 = vmatprep.subr.mxu0 0.0
        %2254 = vmatpush1.msra.mxu0 0.0
        %2255 = vmatprep.subr.mxu0 0.0
        %2256 = vmatpush1.msra.mxu0 0.0
        %2257 = vmatprep.subr.mxu0 0.0
        %2258 = vmatpush1.msra.mxu0 0.0
        %2259 = vmatprep.mubr.f32.mxu0 0.0
        %2260 = vmatmul.mubr.f32.gmra.mrb[0].mxu0 %v2187
        %v2261 = vpop.f32.mrb[0].mxu0
        %v2262 = vadd.f32 0.0, %v2261
        %v2263 = vpop.f32.mrb[0].mxu0
        %v2264 = vadd.f32 0.0, %v2263
        %2265 = vdwg.mxu0
        %v2267 = vsel %vm465, %v2175, 0
        %v2270 = vsel %vm316, %v2172, 0
        %v2273 = vsel %vm316, %v2173, 0
        %2275 = vmatprep.subr.mxu0 %v2273
        %2276 = vmatpush1.msra.mxu0 %v2270
        %2277 = vmatprep.subr.mxu0 0.0
        %2278 = vmatpush1.msra.mxu0 0.0
        %2279 = vmatprep.subr.mxu0 0.0
        %2280 = vmatpush1.msra.mxu0 0.0
        %2281 = vmatprep.subr.mxu0 0.0
        %2282 = vmatpush1.msra.mxu0 0.0
        %2283 = vmatprep.subr.mxu0 0.0
        %2284 = vmatpush1.msra.mxu0 0.0
        %2285 = vmatprep.subr.mxu0 0.0
        %2286 = vmatpush1.msra.mxu0 0.0
        %2287 = vmatprep.subr.mxu0 0.0
        %2288 = vmatpush1.msra.mxu0 0.0
        %2289 = vmatprep.subr.mxu0 0.0
        %2290 = vmatpush1.msra.mxu0 0.0
        %2291 = vmatprep.subr.mxu0 0.0
        %2292 = vmatpush1.msra.mxu0 0.0
        %2293 = vmatprep.subr.mxu0 0.0
        %2294 = vmatpush1.msra.mxu0 0.0
        %2295 = vmatprep.subr.mxu0 0.0
        %2296 = vmatpush1.msra.mxu0 0.0
        %2297 = vmatprep.subr.mxu0 0.0
        %2298 = vmatpush1.msra.mxu0 0.0
        %2299 = vmatprep.subr.mxu0 0.0
        %2300 = vmatpush1.msra.mxu0 0.0
        %2301 = vmatprep.subr.mxu0 0.0
        %2302 = vmatpush1.msra.mxu0 0.0
        %2303 = vmatprep.subr.mxu0 0.0
        %2304 = vmatpush1.msra.mxu0 0.0
        %2305 = vmatprep.subr.mxu0 0.0
        %2306 = vmatpush1.msra.mxu0 0.0
        %2307 = vmatprep.subr.mxu0 0.0
        %2308 = vmatpush1.msra.mxu0 0.0
        %2309 = vmatprep.subr.mxu0 0.0
        %2310 = vmatpush1.msra.mxu0 0.0
        %2311 = vmatprep.subr.mxu0 0.0
        %2312 = vmatpush1.msra.mxu0 0.0
        %2313 = vmatprep.subr.mxu0 0.0
        %2314 = vmatpush1.msra.mxu0 0.0
        %2315 = vmatprep.subr.mxu0 0.0
        %2316 = vmatpush1.msra.mxu0 0.0
        %2317 = vmatprep.subr.mxu0 0.0
        %2318 = vmatpush1.msra.mxu0 0.0
        %2319 = vmatprep.subr.mxu0 0.0
        %2320 = vmatpush1.msra.mxu0 0.0
        %2321 = vmatprep.subr.mxu0 0.0
        %2322 = vmatpush1.msra.mxu0 0.0
        %2323 = vmatprep.subr.mxu0 0.0
        %2324 = vmatpush1.msra.mxu0 0.0
        %2325 = vmatprep.subr.mxu0 0.0
        %2326 = vmatpush1.msra.mxu0 0.0
        %2327 = vmatprep.subr.mxu0 0.0
        %2328 = vmatpush1.msra.mxu0 0.0
        %2329 = vmatprep.subr.mxu0 0.0
        %2330 = vmatpush1.msra.mxu0 0.0
        %2331 = vmatprep.subr.mxu0 0.0
        %2332 = vmatpush1.msra.mxu0 0.0
        %2333 = vmatprep.subr.mxu0 0.0
        %2334 = vmatpush1.msra.mxu0 0.0
        %2335 = vmatprep.subr.mxu0 0.0
        %2336 = vmatpush1.msra.mxu0 0.0
        %2337 = vmatprep.subr.mxu0 0.0
        %2338 = vmatpush1.msra.mxu0 0.0
        %2339 = vmatprep.mubr.f32.mxu0 0.0
        %2340 = vmatmul.mubr.f32.gmra.mrb[0].mxu0 %v2267
        %v2341 = vpop.f32.mrb[0].mxu0
        %v2342 = vadd.f32 %v2262, %v2341
        %v2343 = vpop.f32.mrb[0].mxu0
        %v2344 = vadd.f32 %v2264, %v2343
        %2345 = vdwg.mxu0
        %2346 = vrot.lane.b32.xlu0 %v2164, 15
        %v2347 = vpop.permute.xlu0 %2346
        %2348 = vrot.lane.b32.xlu0 %v2165, 15
        %v2349 = vpop.permute.xlu0 %2348
        %v2350 = vsel %vm630, %v2347, %v2349
        %v2351 = vsel %vm630, %v2349, %v2347
        %v2352 = vmul.f32 %v2351, %v639
        %v2353 = vmul.f32 %v2350, %v643
        %s2354 = scalar_lea.vmem %s1, 80
        %v2355 = vld [vmem:[%s2354] sm:$0xf]
        %v2357 = vsel %vm465, %v2355, 0
        %v2360 = vsel %vm316, %v2352, 0
        %v2363 = vsel %vm316, %v2353, 0
        %2365 = vmatprep.subr.mxu0 %v2363
        %2366 = vmatpush1.msra.mxu0 %v2360
        %2367 = vmatprep.subr.mxu0 0.0
        %2368 = vmatpush1.msra.mxu0 0.0
        %2369 = vmatprep.subr.mxu0 0.0
        %2370 = vmatpush1.msra.mxu0 0.0
        %2371 = vmatprep.subr.mxu0 0.0
        %2372 = vmatpush1.msra.mxu0 0.0
        %2373 = vmatprep.subr.mxu0 0.0
        %2374 = vmatpush1.msra.mxu0 0.0
        %2375 = vmatprep.subr.mxu0 0.0
        %2376 = vmatpush1.msra.mxu0 0.0
        %2377 = vmatprep.subr.mxu0 0.0
        %2378 = vmatpush1.msra.mxu0 0.0
        %2379 = vmatprep.subr.mxu0 0.0
        %2380 = vmatpush1.msra.mxu0 0.0
        %2381 = vmatprep.subr.mxu0 0.0
        %2382 = vmatpush1.msra.mxu0 0.0
        %2383 = vmatprep.subr.mxu0 0.0
        %2384 = vmatpush1.msra.mxu0 0.0
        %2385 = vmatprep.subr.mxu0 0.0
        %2386 = vmatpush1.msra.mxu0 0.0
        %2387 = vmatprep.subr.mxu0 0.0
        %2388 = vmatpush1.msra.mxu0 0.0
        %2389 = vmatprep.subr.mxu0 0.0
        %2390 = vmatpush1.msra.mxu0 0.0
        %2391 = vmatprep.subr.mxu0 0.0
        %2392 = vmatpush1.msra.mxu0 0.0
        %2393 = vmatprep.subr.mxu0 0.0
        %2394 = vmatpush1.msra.mxu0 0.0
        %2395 = vmatprep.subr.mxu0 0.0
        %2396 = vmatpush1.msra.mxu0 0.0
        %2397 = vmatprep.subr.mxu0 0.0
        %2398 = vmatpush1.msra.mxu0 0.0
        %2399 = vmatprep.subr.mxu0 0.0
        %2400 = vmatpush1.msra.mxu0 0.0
        %2401 = vmatprep.subr.mxu0 0.0
        %2402 = vmatpush1.msra.mxu0 0.0
        %2403 = vmatprep.subr.mxu0 0.0
        %2404 = vmatpush1.msra.mxu0 0.0
        %2405 = vmatprep.subr.mxu0 0.0
        %2406 = vmatpush1.msra.mxu0 0.0
        %2407 = vmatprep.subr.mxu0 0.0
        %2408 = vmatpush1.msra.mxu0 0.0
        %2409 = vmatprep.subr.mxu0 0.0
        %2410 = vmatpush1.msra.mxu0 0.0
        %2411 = vmatprep.subr.mxu0 0.0
        %2412 = vmatpush1.msra.mxu0 0.0
        %2413 = vmatprep.subr.mxu0 0.0
        %2414 = vmatpush1.msra.mxu0 0.0
        %2415 = vmatprep.subr.mxu0 0.0
        %2416 = vmatpush1.msra.mxu0 0.0
        %2417 = vmatprep.subr.mxu0 0.0
        %2418 = vmatpush1.msra.mxu0 0.0
        %2419 = vmatprep.subr.mxu0 0.0
        %2420 = vmatpush1.msra.mxu0 0.0
        %2421 = vmatprep.subr.mxu0 0.0
        %2422 = vmatpush1.msra.mxu0 0.0
        %2423 = vmatprep.subr.mxu0 0.0
        %2424 = vmatpush1.msra.mxu0 0.0
        %2425 = vmatprep.subr.mxu0 0.0
        %2426 = vmatpush1.msra.mxu0 0.0
        %2427 = vmatprep.subr.mxu0 0.0
        %2428 = vmatpush1.msra.mxu0 0.0
        %2429 = vmatprep.mubr.f32.mxu0 0.0
        %2430 = vmatmul.mubr.f32.gmra.mrb[0].mxu0 %v2357
        %v2431 = vpop.f32.mrb[0].mxu0
        %v2432 = vadd.f32 0.0, %v2431
        %v2433 = vpop.f32.mrb[0].mxu0
        %v2434 = vadd.f32 0.0, %v2433
        %2435 = vdwg.mxu0
        %v2436 = vadd.f32 %v2342, %v2432
        %v2437 = vadd.f32 %v2344, %v2434
        %2438 = vrot.lane.b32.xlu0 %v2164, 1
        %v2439 = vpop.permute.xlu0 %2438
        %2440 = vrot.lane.b32.xlu0 %v2165, 1
        %v2441 = vpop.permute.xlu0 %2440
        %v2442 = vsel %vm736, %v2439, %v2441
        %v2443 = vsel %vm736, %v2441, %v2439
        %v2444 = vmul.f32 %v2443, %v745
        %v2445 = vmul.f32 %v2442, %v749
        %s2446 = scalar_lea.vmem %s1, 84
        %v2447 = vld [vmem:[%s2446] sm:$0xf]
        %v2449 = vsel %vm465, %v2447, 0
        %v2452 = vsel %vm316, %v2444, 0
        %v2455 = vsel %vm316, %v2445, 0
        %2457 = vmatprep.subr.mxu0 %v2455
        %2458 = vmatpush1.msra.mxu0 %v2452
        %2459 = vmatprep.subr.mxu0 0.0
        %2460 = vmatpush1.msra.mxu0 0.0
        %2461 = vmatprep.subr.mxu0 0.0
        %2462 = vmatpush1.msra.mxu0 0.0
        %2463 = vmatprep.subr.mxu0 0.0
        %2464 = vmatpush1.msra.mxu0 0.0
        %2465 = vmatprep.subr.mxu0 0.0
        %2466 = vmatpush1.msra.mxu0 0.0
        %2467 = vmatprep.subr.mxu0 0.0
        %2468 = vmatpush1.msra.mxu0 0.0
        %2469 = vmatprep.subr.mxu0 0.0
        %2470 = vmatpush1.msra.mxu0 0.0
        %2471 = vmatprep.subr.mxu0 0.0
        %2472 = vmatpush1.msra.mxu0 0.0
        %2473 = vmatprep.subr.mxu0 0.0
        %2474 = vmatpush1.msra.mxu0 0.0
        %2475 = vmatprep.subr.mxu0 0.0
        %2476 = vmatpush1.msra.mxu0 0.0
        %2477 = vmatprep.subr.mxu0 0.0
        %2478 = vmatpush1.msra.mxu0 0.0
        %2479 = vmatprep.subr.mxu0 0.0
        %2480 = vmatpush1.msra.mxu0 0.0
        %2481 = vmatprep.subr.mxu0 0.0
        %2482 = vmatpush1.msra.mxu0 0.0
        %2483 = vmatprep.subr.mxu0 0.0
        %2484 = vmatpush1.msra.mxu0 0.0
        %2485 = vmatprep.subr.mxu0 0.0
        %2486 = vmatpush1.msra.mxu0 0.0
        %2487 = vmatprep.subr.mxu0 0.0
        %2488 = vmatpush1.msra.mxu0 0.0
        %2489 = vmatprep.subr.mxu0 0.0
        %2490 = vmatpush1.msra.mxu0 0.0
        %2491 = vmatprep.subr.mxu0 0.0
        %2492 = vmatpush1.msra.mxu0 0.0
        %2493 = vmatprep.subr.mxu0 0.0
        %2494 = vmatpush1.msra.mxu0 0.0
        %2495 = vmatprep.subr.mxu0 0.0
        %2496 = vmatpush1.msra.mxu0 0.0
        %2497 = vmatprep.subr.mxu0 0.0
        %2498 = vmatpush1.msra.mxu0 0.0
        %2499 = vmatprep.subr.mxu0 0.0
        %2500 = vmatpush1.msra.mxu0 0.0
        %2501 = vmatprep.subr.mxu0 0.0
        %2502 = vmatpush1.msra.mxu0 0.0
        %2503 = vmatprep.subr.mxu0 0.0
        %2504 = vmatpush1.msra.mxu0 0.0
        %2505 = vmatprep.subr.mxu0 0.0
        %2506 = vmatpush1.msra.mxu0 0.0
        %2507 = vmatprep.subr.mxu0 0.0
        %2508 = vmatpush1.msra.mxu0 0.0
        %2509 = vmatprep.subr.mxu0 0.0
        %2510 = vmatpush1.msra.mxu0 0.0
        %2511 = vmatprep.subr.mxu0 0.0
        %2512 = vmatpush1.msra.mxu0 0.0
        %2513 = vmatprep.subr.mxu0 0.0
        %2514 = vmatpush1.msra.mxu0 0.0
        %2515 = vmatprep.subr.mxu0 0.0
        %2516 = vmatpush1.msra.mxu0 0.0
        %2517 = vmatprep.subr.mxu0 0.0
        %2518 = vmatpush1.msra.mxu0 0.0
        %2519 = vmatprep.subr.mxu0 0.0
        %2520 = vmatpush1.msra.mxu0 0.0
        %2521 = vmatprep.mubr.f32.mxu0 0.0
        %2522 = vmatmul.mubr.f32.gmra.mrb[0].mxu0 %v2449
        %v2523 = vpop.f32.mrb[0].mxu0
        %v2524 = vadd.f32 0.0, %v2523
        %v2525 = vpop.f32.mrb[0].mxu0
        %v2526 = vadd.f32 0.0, %v2525
        %2527 = vdwg.mxu0
        %v2528 = vadd.f32 %v2436, %v2524
        %v2529 = vadd.f32 %v2437, %v2526
        %s2530 = scalar_lea.vmem %s1, 88
        %v2531 = vld [vmem:[%s2530] sm:$0xf]
        %v2533 = vsel %vm465, %v2531, 0
        %v2536 = vsel %vm316, %v2164, 0
        %v2539 = vsel %vm316, %v2165, 0
        %2541 = vmatprep.subr.mxu0 %v2539
        %2542 = vmatpush1.msra.mxu0 %v2536
        %2543 = vmatprep.subr.mxu0 0.0
        %2544 = vmatpush1.msra.mxu0 0.0
        %2545 = vmatprep.subr.mxu0 0.0
        %2546 = vmatpush1.msra.mxu0 0.0
        %2547 = vmatprep.subr.mxu0 0.0
        %2548 = vmatpush1.msra.mxu0 0.0
        %2549 = vmatprep.subr.mxu0 0.0
        %2550 = vmatpush1.msra.mxu0 0.0
        %2551 = vmatprep.subr.mxu0 0.0
        %2552 = vmatpush1.msra.mxu0 0.0
        %2553 = vmatprep.subr.mxu0 0.0
        %2554 = vmatpush1.msra.mxu0 0.0
        %2555 = vmatprep.subr.mxu0 0.0
        %2556 = vmatpush1.msra.mxu0 0.0
        %2557 = vmatprep.subr.mxu0 0.0
        %2558 = vmatpush1.msra.mxu0 0.0
        %2559 = vmatprep.subr.mxu0 0.0
        %2560 = vmatpush1.msra.mxu0 0.0
        %2561 = vmatprep.subr.mxu0 0.0
        %2562 = vmatpush1.msra.mxu0 0.0
        %2563 = vmatprep.subr.mxu0 0.0
        %2564 = vmatpush1.msra.mxu0 0.0
        %2565 = vmatprep.subr.mxu0 0.0
        %2566 = vmatpush1.msra.mxu0 0.0
        %2567 = vmatprep.subr.mxu0 0.0
        %2568 = vmatpush1.msra.mxu0 0.0
        %2569 = vmatprep.subr.mxu0 0.0
        %2570 = vmatpush1.msra.mxu0 0.0
        %2571 = vmatprep.subr.mxu0 0.0
        %2572 = vmatpush1.msra.mxu0 0.0
        %2573 = vmatprep.subr.mxu0 0.0
        %2574 = vmatpush1.msra.mxu0 0.0
        %2575 = vmatprep.subr.mxu0 0.0
        %2576 = vmatpush1.msra.mxu0 0.0
        %2577 = vmatprep.subr.mxu0 0.0
        %2578 = vmatpush1.msra.mxu0 0.0
        %2579 = vmatprep.subr.mxu0 0.0
        %2580 = vmatpush1.msra.mxu0 0.0
        %2581 = vmatprep.subr.mxu0 0.0
        %2582 = vmatpush1.msra.mxu0 0.0
        %2583 = vmatprep.subr.mxu0 0.0
        %2584 = vmatpush1.msra.mxu0 0.0
        %2585 = vmatprep.subr.mxu0 0.0
        %2586 = vmatpush1.msra.mxu0 0.0
        %2587 = vmatprep.subr.mxu0 0.0
        %2588 = vmatpush1.msra.mxu0 0.0
        %2589 = vmatprep.subr.mxu0 0.0
        %2590 = vmatpush1.msra.mxu0 0.0
        %2591 = vmatprep.subr.mxu0 0.0
        %2592 = vmatpush1.msra.mxu0 0.0
        %2593 = vmatprep.subr.mxu0 0.0
        %2594 = vmatpush1.msra.mxu0 0.0
        %2595 = vmatprep.subr.mxu0 0.0
        %2596 = vmatpush1.msra.mxu0 0.0
        %2597 = vmatprep.subr.mxu0 0.0
        %2598 = vmatpush1.msra.mxu0 0.0
        %2599 = vmatprep.subr.mxu0 0.0
        %2600 = vmatpush1.msra.mxu0 0.0
        %2601 = vmatprep.subr.mxu0 0.0
        %2602 = vmatpush1.msra.mxu0 0.0
        %2603 = vmatprep.subr.mxu0 0.0
        %2604 = vmatpush1.msra.mxu0 0.0
        %2605 = vmatprep.mubr.f32.mxu0 0.0
        %2606 = vmatmul.mubr.f32.gmra.mrb[0].mxu0 %v2533
        %v2607 = vpop.f32.mrb[0].mxu0
        %v2608 = vadd.f32 0.0, %v2607
        %v2609 = vpop.f32.mrb[0].mxu0
        %v2610 = vadd.f32 0.0, %v2609
        %2611 = vdwg.mxu0
        %v2612 = vadd.f32 %v2528, %v2608
        %v2613 = vadd.f32 %v2529, %v2610
        %2614 = vrot.lane.b32.xlu0 %v2164, 127
        %v2615 = vpop.permute.xlu0 %2614
        %2616 = vrot.lane.b32.xlu0 %v2165, 127
        %v2617 = vpop.permute.xlu0 %2616
        %v2618 = vsel %vm926, %v2615, %v2617
        %v2619 = vsel %vm926, %v2617, %v2615
        %v2620 = vmul.f32 %v2618, %v935
        %v2621 = vmul.f32 %v2619, %v939
        %s2622 = scalar_lea.vmem %s1, 92
        %v2623 = vld [vmem:[%s2622] sm:$0xf]
        %v2625 = vsel %vm465, %v2623, 0
        %v2628 = vsel %vm316, %v2620, 0
        %v2631 = vsel %vm316, %v2621, 0
        %2633 = vmatprep.subr.mxu0 %v2631
        %2634 = vmatpush1.msra.mxu0 %v2628
        %2635 = vmatprep.subr.mxu0 0.0
        %2636 = vmatpush1.msra.mxu0 0.0
        %2637 = vmatprep.subr.mxu0 0.0
        %2638 = vmatpush1.msra.mxu0 0.0
        %2639 = vmatprep.subr.mxu0 0.0
        %2640 = vmatpush1.msra.mxu0 0.0
        %2641 = vmatprep.subr.mxu0 0.0
        %2642 = vmatpush1.msra.mxu0 0.0
        %2643 = vmatprep.subr.mxu0 0.0
        %2644 = vmatpush1.msra.mxu0 0.0
        %2645 = vmatprep.subr.mxu0 0.0
        %2646 = vmatpush1.msra.mxu0 0.0
        %2647 = vmatprep.subr.mxu0 0.0
        %2648 = vmatpush1.msra.mxu0 0.0
        %2649 = vmatprep.subr.mxu0 0.0
        %2650 = vmatpush1.msra.mxu0 0.0
        %2651 = vmatprep.subr.mxu0 0.0
        %2652 = vmatpush1.msra.mxu0 0.0
        %2653 = vmatprep.subr.mxu0 0.0
        %2654 = vmatpush1.msra.mxu0 0.0
        %2655 = vmatprep.subr.mxu0 0.0
        %2656 = vmatpush1.msra.mxu0 0.0
        %2657 = vmatprep.subr.mxu0 0.0
        %2658 = vmatpush1.msra.mxu0 0.0
        %2659 = vmatprep.subr.mxu0 0.0
        %2660 = vmatpush1.msra.mxu0 0.0
        %2661 = vmatprep.subr.mxu0 0.0
        %2662 = vmatpush1.msra.mxu0 0.0
        %2663 = vmatprep.subr.mxu0 0.0
        %2664 = vmatpush1.msra.mxu0 0.0
        %2665 = vmatprep.subr.mxu0 0.0
        %2666 = vmatpush1.msra.mxu0 0.0
        %2667 = vmatprep.subr.mxu0 0.0
        %2668 = vmatpush1.msra.mxu0 0.0
        %2669 = vmatprep.subr.mxu0 0.0
        %2670 = vmatpush1.msra.mxu0 0.0
        %2671 = vmatprep.subr.mxu0 0.0
        %2672 = vmatpush1.msra.mxu0 0.0
        %2673 = vmatprep.subr.mxu0 0.0
        %2674 = vmatpush1.msra.mxu0 0.0
        %2675 = vmatprep.subr.mxu0 0.0
        %2676 = vmatpush1.msra.mxu0 0.0
        %2677 = vmatprep.subr.mxu0 0.0
        %2678 = vmatpush1.msra.mxu0 0.0
        %2679 = vmatprep.subr.mxu0 0.0
        %2680 = vmatpush1.msra.mxu0 0.0
        %2681 = vmatprep.subr.mxu0 0.0
        %2682 = vmatpush1.msra.mxu0 0.0
        %2683 = vmatprep.subr.mxu0 0.0
        %2684 = vmatpush1.msra.mxu0 0.0
        %2685 = vmatprep.subr.mxu0 0.0
        %2686 = vmatpush1.msra.mxu0 0.0
        %2687 = vmatprep.subr.mxu0 0.0
        %2688 = vmatpush1.msra.mxu0 0.0
        %2689 = vmatprep.subr.mxu0 0.0
        %2690 = vmatpush1.msra.mxu0 0.0
        %2691 = vmatprep.subr.mxu0 0.0
        %2692 = vmatpush1.msra.mxu0 0.0
        %2693 = vmatprep.subr.mxu0 0.0
        %2694 = vmatpush1.msra.mxu0 0.0
        %2695 = vmatprep.subr.mxu0 0.0
        %2696 = vmatpush1.msra.mxu0 0.0
        %2697 = vmatprep.mubr.f32.mxu0 0.0
        %2698 = vmatmul.mubr.f32.gmra.mrb[0].mxu0 %v2625
        %v2699 = vpop.f32.mrb[0].mxu0
        %v2700 = vadd.f32 0.0, %v2699
        %v2701 = vpop.f32.mrb[0].mxu0
        %v2702 = vadd.f32 0.0, %v2701
        %2703 = vdwg.mxu0
        %v2704 = vadd.f32 %v2612, %v2700
        %v2705 = vadd.f32 %v2613, %v2702
        %2706 = vrot.lane.b32.xlu0 %v2164, 113
        %v2707 = vpop.permute.xlu0 %2706
        %2708 = vrot.lane.b32.xlu0 %v2165, 113
        %v2709 = vpop.permute.xlu0 %2708
        %v2710 = vsel %vm1032, %v2707, %v2709
        %v2711 = vsel %vm1032, %v2709, %v2707
        %v2712 = vmul.f32 %v2710, %v1041
        %v2713 = vmul.f32 %v2711, %v1045
        %s2714 = scalar_lea.vmem %s1, 96
        %v2715 = vld [vmem:[%s2714] sm:$0xf]
        %v2717 = vsel %vm465, %v2715, 0
        %v2720 = vsel %vm316, %v2712, 0
        %v2723 = vsel %vm316, %v2713, 0
        %2725 = vmatprep.subr.mxu0 %v2723
        %2726 = vmatpush1.msra.mxu0 %v2720
        %2727 = vmatprep.subr.mxu0 0.0
        %2728 = vmatpush1.msra.mxu0 0.0
        %2729 = vmatprep.subr.mxu0 0.0
        %2730 = vmatpush1.msra.mxu0 0.0
        %2731 = vmatprep.subr.mxu0 0.0
        %2732 = vmatpush1.msra.mxu0 0.0
        %2733 = vmatprep.subr.mxu0 0.0
        %2734 = vmatpush1.msra.mxu0 0.0
        %2735 = vmatprep.subr.mxu0 0.0
        %2736 = vmatpush1.msra.mxu0 0.0
        %2737 = vmatprep.subr.mxu0 0.0
        %2738 = vmatpush1.msra.mxu0 0.0
        %2739 = vmatprep.subr.mxu0 0.0
        %2740 = vmatpush1.msra.mxu0 0.0
        %2741 = vmatprep.subr.mxu0 0.0
        %2742 = vmatpush1.msra.mxu0 0.0
        %2743 = vmatprep.subr.mxu0 0.0
        %2744 = vmatpush1.msra.mxu0 0.0
        %2745 = vmatprep.subr.mxu0 0.0
        %2746 = vmatpush1.msra.mxu0 0.0
        %2747 = vmatprep.subr.mxu0 0.0
        %2748 = vmatpush1.msra.mxu0 0.0
        %2749 = vmatprep.subr.mxu0 0.0
        %2750 = vmatpush1.msra.mxu0 0.0
        %2751 = vmatprep.subr.mxu0 0.0
        %2752 = vmatpush1.msra.mxu0 0.0
        %2753 = vmatprep.subr.mxu0 0.0
        %2754 = vmatpush1.msra.mxu0 0.0
        %2755 = vmatprep.subr.mxu0 0.0
        %2756 = vmatpush1.msra.mxu0 0.0
        %2757 = vmatprep.subr.mxu0 0.0
        %2758 = vmatpush1.msra.mxu0 0.0
        %2759 = vmatprep.subr.mxu0 0.0
        %2760 = vmatpush1.msra.mxu0 0.0
        %2761 = vmatprep.subr.mxu0 0.0
        %2762 = vmatpush1.msra.mxu0 0.0
        %2763 = vmatprep.subr.mxu0 0.0
        %2764 = vmatpush1.msra.mxu0 0.0
        %2765 = vmatprep.subr.mxu0 0.0
        %2766 = vmatpush1.msra.mxu0 0.0
        %2767 = vmatprep.subr.mxu0 0.0
        %2768 = vmatpush1.msra.mxu0 0.0
        %2769 = vmatprep.subr.mxu0 0.0
        %2770 = vmatpush1.msra.mxu0 0.0
        %2771 = vmatprep.subr.mxu0 0.0
        %2772 = vmatpush1.msra.mxu0 0.0
        %2773 = vmatprep.subr.mxu0 0.0
        %2774 = vmatpush1.msra.mxu0 0.0
        %2775 = vmatprep.subr.mxu0 0.0
        %2776 = vmatpush1.msra.mxu0 0.0
        %2777 = vmatprep.subr.mxu0 0.0
        %2778 = vmatpush1.msra.mxu0 0.0
        %2779 = vmatprep.subr.mxu0 0.0
        %2780 = vmatpush1.msra.mxu0 0.0
        %2781 = vmatprep.subr.mxu0 0.0
        %2782 = vmatpush1.msra.mxu0 0.0
        %2783 = vmatprep.subr.mxu0 0.0
        %2784 = vmatpush1.msra.mxu0 0.0
        %2785 = vmatprep.subr.mxu0 0.0
        %2786 = vmatpush1.msra.mxu0 0.0
        %2787 = vmatprep.subr.mxu0 0.0
        %2788 = vmatpush1.msra.mxu0 0.0
        %2789 = vmatprep.mubr.f32.mxu0 0.0
        %2790 = vmatmul.mubr.f32.gmra.mrb[0].mxu0 %v2717
        %v2791 = vpop.f32.mrb[0].mxu0
        %v2792 = vadd.f32 0.0, %v2791
        %v2793 = vpop.f32.mrb[0].mxu0
        %v2794 = vadd.f32 0.0, %v2793
        %2795 = vdwg.mxu0
        %v2796 = vadd.f32 %v2704, %v2792
        %v2797 = vadd.f32 %v2705, %v2794
        %2798 = vrot.lane.b32.xlu0 %v2164, 112
        %v2799 = vpop.permute.xlu0 %2798
        %2800 = vrot.lane.b32.xlu0 %v2165, 112
        %v2801 = vpop.permute.xlu0 %2800
        %v2802 = vsel %vm1138, %v2799, %v2801
        %v2803 = vsel %vm1138, %v2801, %v2799
        %v2804 = vmul.f32 %v2802, %v1147
        %v2805 = vmul.f32 %v2803, %v1151
        %s2806 = scalar_lea.vmem %s1, 100
        %v2807 = vld [vmem:[%s2806] sm:$0xf]
        %v2809 = vsel %vm465, %v2807, 0
        %v2812 = vsel %vm316, %v2804, 0
        %v2815 = vsel %vm316, %v2805, 0
        %2817 = vmatprep.subr.mxu0 %v2815
        %2818 = vmatpush1.msra.mxu0 %v2812
        %2819 = vmatprep.subr.mxu0 0.0
        %2820 = vmatpush1.msra.mxu0 0.0
        %2821 = vmatprep.subr.mxu0 0.0
        %2822 = vmatpush1.msra.mxu0 0.0
        %2823 = vmatprep.subr.mxu0 0.0
        %2824 = vmatpush1.msra.mxu0 0.0
        %2825 = vmatprep.subr.mxu0 0.0
        %2826 = vmatpush1.msra.mxu0 0.0
        %2827 = vmatprep.subr.mxu0 0.0
        %2828 = vmatpush1.msra.mxu0 0.0
        %2829 = vmatprep.subr.mxu0 0.0
        %2830 = vmatpush1.msra.mxu0 0.0
        %2831 = vmatprep.subr.mxu0 0.0
        %2832 = vmatpush1.msra.mxu0 0.0
        %2833 = vmatprep.subr.mxu0 0.0
        %2834 = vmatpush1.msra.mxu0 0.0
        %2835 = vmatprep.subr.mxu0 0.0
        %2836 = vmatpush1.msra.mxu0 0.0
        %2837 = vmatprep.subr.mxu0 0.0
        %2838 = vmatpush1.msra.mxu0 0.0
        %2839 = vmatprep.subr.mxu0 0.0
        %2840 = vmatpush1.msra.mxu0 0.0
        %2841 = vmatprep.subr.mxu0 0.0
        %2842 = vmatpush1.msra.mxu0 0.0
        %2843 = vmatprep.subr.mxu0 0.0
        %2844 = vmatpush1.msra.mxu0 0.0
        %2845 = vmatprep.subr.mxu0 0.0
        %2846 = vmatpush1.msra.mxu0 0.0
        %2847 = vmatprep.subr.mxu0 0.0
        %2848 = vmatpush1.msra.mxu0 0.0
        %2849 = vmatprep.subr.mxu0 0.0
        %2850 = vmatpush1.msra.mxu0 0.0
        %2851 = vmatprep.subr.mxu0 0.0
        %2852 = vmatpush1.msra.mxu0 0.0
        %2853 = vmatprep.subr.mxu0 0.0
        %2854 = vmatpush1.msra.mxu0 0.0
        %2855 = vmatprep.subr.mxu0 0.0
        %2856 = vmatpush1.msra.mxu0 0.0
        %2857 = vmatprep.subr.mxu0 0.0
        %2858 = vmatpush1.msra.mxu0 0.0
        %2859 = vmatprep.subr.mxu0 0.0
        %2860 = vmatpush1.msra.mxu0 0.0
        %2861 = vmatprep.subr.mxu0 0.0
        %2862 = vmatpush1.msra.mxu0 0.0
        %2863 = vmatprep.subr.mxu0 0.0
        %2864 = vmatpush1.msra.mxu0 0.0
        %2865 = vmatprep.subr.mxu0 0.0
        %2866 = vmatpush1.msra.mxu0 0.0
        %2867 = vmatprep.subr.mxu0 0.0
        %2868 = vmatpush1.msra.mxu0 0.0
        %2869 = vmatprep.subr.mxu0 0.0
        %2870 = vmatpush1.msra.mxu0 0.0
        %2871 = vmatprep.subr.mxu0 0.0
        %2872 = vmatpush1.msra.mxu0 0.0
        %2873 = vmatprep.subr.mxu0 0.0
        %2874 = vmatpush1.msra.mxu0 0.0
        %2875 = vmatprep.subr.mxu0 0.0
        %2876 = vmatpush1.msra.mxu0 0.0
        %2877 = vmatprep.subr.mxu0 0.0
        %2878 = vmatpush1.msra.mxu0 0.0
        %2879 = vmatprep.subr.mxu0 0.0
        %2880 = vmatpush1.msra.mxu0 0.0
        %2881 = vmatprep.mubr.f32.mxu0 0.0
        %2882 = vmatmul.mubr.f32.gmra.mrb[0].mxu0 %v2809
        %v2883 = vpop.f32.mrb[0].mxu0
        %v2884 = vadd.f32 0.0, %v2883
        %v2885 = vpop.f32.mrb[0].mxu0
        %v2886 = vadd.f32 0.0, %v2885
        %2887 = vdwg.mxu0
        %v2888 = vadd.f32 %v2796, %v2884
        %v2889 = vadd.f32 %v2797, %v2886
        %2890 = vrot.lane.b32.xlu0 %v2164, 111
        %v2891 = vpop.permute.xlu0 %2890
        %2892 = vrot.lane.b32.xlu0 %v2165, 111
        %v2893 = vpop.permute.xlu0 %2892
        %v2894 = vsel %vm1244, %v2891, %v2893
        %v2895 = vsel %vm1244, %v2893, %v2891
        %v2896 = vmul.f32 %v2894, %v1253
        %v2897 = vmul.f32 %v2895, %v1257
        %s2898 = scalar_lea.vmem %s1, 104
        %v2899 = vld [vmem:[%s2898] sm:$0xf]
        %v2901 = vsel %vm465, %v2899, 0
        %v2904 = vsel %vm316, %v2896, 0
        %v2907 = vsel %vm316, %v2897, 0
        %2909 = vmatprep.subr.mxu0 %v2907
        %2910 = vmatpush1.msra.mxu0 %v2904
        %2911 = vmatprep.subr.mxu0 0.0
        %2912 = vmatpush1.msra.mxu0 0.0
        %2913 = vmatprep.subr.mxu0 0.0
        %2914 = vmatpush1.msra.mxu0 0.0
        %2915 = vmatprep.subr.mxu0 0.0
        %2916 = vmatpush1.msra.mxu0 0.0
        %2917 = vmatprep.subr.mxu0 0.0
        %2918 = vmatpush1.msra.mxu0 0.0
        %2919 = vmatprep.subr.mxu0 0.0
        %2920 = vmatpush1.msra.mxu0 0.0
        %2921 = vmatprep.subr.mxu0 0.0
        %2922 = vmatpush1.msra.mxu0 0.0
        %2923 = vmatprep.subr.mxu0 0.0
        %2924 = vmatpush1.msra.mxu0 0.0
        %2925 = vmatprep.subr.mxu0 0.0
        %2926 = vmatpush1.msra.mxu0 0.0
        %2927 = vmatprep.subr.mxu0 0.0
        %2928 = vmatpush1.msra.mxu0 0.0
        %2929 = vmatprep.subr.mxu0 0.0
        %2930 = vmatpush1.msra.mxu0 0.0
        %2931 = vmatprep.subr.mxu0 0.0
        %2932 = vmatpush1.msra.mxu0 0.0
        %2933 = vmatprep.subr.mxu0 0.0
        %2934 = vmatpush1.msra.mxu0 0.0
        %2935 = vmatprep.subr.mxu0 0.0
        %2936 = vmatpush1.msra.mxu0 0.0
        %2937 = vmatprep.subr.mxu0 0.0
        %2938 = vmatpush1.msra.mxu0 0.0
        %2939 = vmatprep.subr.mxu0 0.0
        %2940 = vmatpush1.msra.mxu0 0.0
        %2941 = vmatprep.subr.mxu0 0.0
        %2942 = vmatpush1.msra.mxu0 0.0
        %2943 = vmatprep.subr.mxu0 0.0
        %2944 = vmatpush1.msra.mxu0 0.0
        %2945 = vmatprep.subr.mxu0 0.0
        %2946 = vmatpush1.msra.mxu0 0.0
        %2947 = vmatprep.subr.mxu0 0.0
        %2948 = vmatpush1.msra.mxu0 0.0
        %2949 = vmatprep.subr.mxu0 0.0
        %2950 = vmatpush1.msra.mxu0 0.0
        %2951 = vmatprep.subr.mxu0 0.0
        %2952 = vmatpush1.msra.mxu0 0.0
        %2953 = vmatprep.subr.mxu0 0.0
        %2954 = vmatpush1.msra.mxu0 0.0
        %2955 = vmatprep.subr.mxu0 0.0
        %2956 = vmatpush1.msra.mxu0 0.0
        %2957 = vmatprep.subr.mxu0 0.0
        %2958 = vmatpush1.msra.mxu0 0.0
        %2959 = vmatprep.subr.mxu0 0.0
        %2960 = vmatpush1.msra.mxu0 0.0
        %2961 = vmatprep.subr.mxu0 0.0
        %2962 = vmatpush1.msra.mxu0 0.0
        %2963 = vmatprep.subr.mxu0 0.0
        %2964 = vmatpush1.msra.mxu0 0.0
        %2965 = vmatprep.subr.mxu0 0.0
        %2966 = vmatpush1.msra.mxu0 0.0
        %2967 = vmatprep.subr.mxu0 0.0
        %2968 = vmatpush1.msra.mxu0 0.0
        %2969 = vmatprep.subr.mxu0 0.0
        %2970 = vmatpush1.msra.mxu0 0.0
        %2971 = vmatprep.subr.mxu0 0.0
        %2972 = vmatpush1.msra.mxu0 0.0
        %2973 = vmatprep.mubr.f32.mxu0 0.0
        %2974 = vmatmul.mubr.f32.gmra.mrb[0].mxu0 %v2901
        %v2975 = vpop.f32.mrb[0].mxu0
        %v2976 = vadd.f32 0.0, %v2975
        %v2977 = vpop.f32.mrb[0].mxu0
        %v2978 = vadd.f32 0.0, %v2977
        %2979 = vdwg.mxu0
        %v2980 = vadd.f32 %v2888, %v2976
        %v2981 = vadd.f32 %v2889, %v2978
        %v2984 = vrot.slane %v2162, 4
        %v2985 = vrot.slane %v2163, 4
        %v2988 = vsel %vm316, %v1344, %v2984
        %v2989 = vsel %vm316, %v1345, %v2985
        %2990 = vst [vmem:[%s284] sm:$0xff] %v2988
        %2991 = vst [vmem:[%s284 + $0x8] sm:$0xff] %v2989
        %2992 = vst [vmem:[%s284 + $0x10] sm:$0xf] %v2980
        %2993 = vst [vmem:[%s284 + $0x18] sm:$0xf] %v2981
        %v2994 = vmul.f32 %v2988, 4.0
        %v2995 = vmul.f32 %v2989, 4.0
        %v2996 = vmul.f32 %v2980, 4.0
        %v2997 = vmul.f32 %v2981, 4.0
        %v2998 = vmul.f32 %v2988, %v2988
        %v2999 = vmul.f32 %v2989, %v2989
        %v3000 = vmul.f32 %v2980, %v2980
        %v3001 = vmul.f32 %v2981, %v2981
        %v3002 = vmul.f32 %v2998, 4.0
        %v3003 = vmul.f32 %v2999, 4.0
        %v3004 = vmul.f32 %v3000, 4.0
        %v3005 = vmul.f32 %v3001, 4.0
        %v3010 = vrot.slane %v2994, 4
        %v3011 = vrot.slane %v2995, 4
        %v3012 = vrot.slane %v2996, 4
        %v3013 = vsel %vm316, %v3010, %v3012
        %v3014 = vrot.slane %v2997, 4
        %v3015 = vsel %vm316, %v3011, %v3014
        %v3024 = vrot.slane %v3002, 4
        %v3025 = vrot.slane %v3003, 4
        %v3026 = vrot.slane %v3004, 4
        %v3027 = vsel %vm316, %v3024, %v3026
        %v3028 = vrot.slane %v3005, 4
        %v3029 = vsel %vm316, %v3025, %v3028
        %v3034 = vsel %vm316, %v379, %v3010
        %v3035 = vsel %vm316, %v386, %v3011
        %v3036 = vsel %vm316, %v409, %v3024
        %v3037 = vsel %vm316, %v416, %v3025
        %v3038 = vadd.f32 %v3034, %v3035
        %3039 = vadd.xlane.f32.xlu0 %v3038
        %v3040 = vpop.xlane.xlu0 %3039
        %v3041 = vadd.f32 %v3013, %v3015
        %3042 = vadd.xlane.f32.xlu0 %v3041
        %v3043 = vpop.xlane.xlu0 %3042
        %v3044 = vadd.f32 %v3036, %v3037
        %3045 = vadd.xlane.f32.xlu0 %v3044
        %v3046 = vpop.xlane.xlu0 %3045
        %v3047 = vadd.f32 %v3027, %v3029
        %3048 = vadd.xlane.f32.xlu0 %v3047
        %v3049 = vpop.xlane.xlu0 %3048
        %vm3050 = vcmask 7168
        %3051 = vst.msk [vmem:[%s289] sm:$0xff] %vm3050, %v3040
        %3052 = vst.msk [vmem:[%s289 + $0x8] sm:$0xff] %vm3050, %v3043
        %3053 = vst.msk [vmem:[%s289 + $0x10] sm:$0xff] %vm3050, %v3046
        %3054 = vst.msk [vmem:[%s289 + $0x18] sm:$0xff] %vm3050, %v3049
        %p3055 = scmp.lt.s32.totalorder %s16, 1
        %s3056 = scalar_select %p3055, %s16, 1
        %s3057 = smul.addr %s3056, 4
        %s3058 = smul.addr %s3057, 8
        %s3059 = scalar_lea.vmem %s3, %s3058
        %p3060 = scmp.lt.s32.totalorder %s16, 1
        %s3061 = scalar_select %p3060, %s16, 1
        %s3062 = smul.addr %s3061, 4
        %s3063 = smul.addr %s3062, 8
        %s3064 = scalar_lea.vmem %s4, %s3063
        // Predicated region
        $region71: #{lgcsm_forward.2} parent=65 // pred_check
          %p3065 = pneg %p102
        $region72: #{lgcsm_forward.2} parent=65 // pred_check_branch
          %3067 = sbr.rel (%p3065) target = $region74
        $region73: #{lgcsm_forward.2} parent=65 // pred_region
          _
        $region74: #{lgcsm_forward.2} parent=65 // pred_fallthru
          _
        // Predicated region
        $region75: #{lgcsm_forward.2} parent=65 // pred_check
          %p3068 = pneg %p128
        $region76: #{lgcsm_forward.2} parent=65 // pred_check_branch
          %3070 = sbr.rel (%p3068) target = $region78
        $region77: #{lgcsm_forward.2} parent=65 // pred_region
          _
        $region78: #{lgcsm_forward.2} parent=65 // pred_fallthru
          _
      $region66: #{lgcsm_forward.2} parent=5 // pred_fallthru
        _
      %p3071 = scmp.le.s32.totalorder 2, %s11
      // Predicated region
      $region79: #{lgcsm_forward.2} parent=5 // pred_check
        %p3072 = pneg %p3071
      $region80: #{lgcsm_forward.2} parent=5 // pred_check_branch
        %3074 = sbr.rel (%p3072) target = $region82
      $region81: #{lgcsm_forward.2} parent=5 // pred_region
        %s3075 = ssub.s32 %s11, 2
        // Predicated region
        $region83: #{lgcsm_forward.2} parent=81 // pred_check
          %p3076 = pneg %p108
        $region84: #{lgcsm_forward.2} parent=81 // pred_check_branch
          %3078 = sbr.rel (%p3076) target = $region86
        $region85: #{lgcsm_forward.2} parent=81 // pred_region
          %p3079 = scmp.lt.s32.totalorder %s17, 1
          %s3080 = scalar_select %p3079, %s17, 1
          %s3081 = smul.addr %s3080, 4
          %s3082 = smul.addr %s3081, 8
          %s3083 = scalar_lea.vmem %s3, %s3082
        $region86: #{lgcsm_forward.2} parent=81 // pred_fallthru
          _
        // Predicated region
        $region87: #{lgcsm_forward.2} parent=81 // pred_check
          %p3084 = pneg %p134
        $region88: #{lgcsm_forward.2} parent=81 // pred_check_branch
          %3086 = sbr.rel (%p3084) target = $region90
        $region89: #{lgcsm_forward.2} parent=81 // pred_region
          %p3087 = scmp.lt.s32.totalorder %s17, 1
          %s3088 = scalar_select %p3087, %s17, 1
          %s3089 = smul.addr %s3088, 4
          %s3090 = smul.addr %s3089, 8
          %s3091 = scalar_lea.vmem %s4, %s3090
        $region90: #{lgcsm_forward.2} parent=81 // pred_fallthru
          _
      $region82: #{lgcsm_forward.2} parent=5 // pred_fallthru
        _
    $region6: #{lgcsm_forward.2} parent=1 // loop_footer
      %s15 = sadd.s32 1, %s11
    $region7: #{lgcsm_forward.2} parent=1 // loop_footer_branch
      %10 = sbr.rel target = $region3
    $region8: #{lgcsm_forward.2} parent=1 // loop_exit
      _

</llo_original>
